<compile_context>
chip_gen: v6e
topology: v6e:2x2x1
jax: 0.10.0
libtpu: 0.0.40
codegen_flags: <defaults>
</compile_context>

<pallas_src>
import functools

import numpy as np
import jax
import jax.numpy as jnp
from jax.experimental import pallas as pl
from jax.experimental.pallas import tpu as pltpu


# ---------------------------------------------------------------------------
# Pallas kernel: batched row gather as pipelined HBM -> HBM DMA.
# ---------------------------------------------------------------------------

def _gather_dma_kernel(idx_ref, x_hbm, o_hbm, sems, *,
                       axis_size, rows_per_chunk, n_total, ring_depth):
    """One grid step = one contiguous chunk of output rows.

    idx_ref : (N,) int32 index table in SMEM (scalar prefetch)
    x_hbm   : (P, G, R) input ref in HBM  (memory_space=pl.ANY)
    o_hbm   : (P, N, R) output ref in HBM (memory_space=pl.ANY)
    sems    : (ring_depth,) DMA-semaphore ring -> up to ring_depth copies in flight
    """
    chunk = pl.program_id(0)
    start = chunk * rows_per_chunk
    # Core-local / chunk-local tail guard: works for both the single-chunk case
    # and the 2-chunk CORE_PARALLEL split on v7x.
    rows_here = jnp.minimum(n_total - start, rows_per_chunk)

    # NOTE: every per-row copy has the *identical* shape (P, 1, R).  The dummy
    # refs below (static offset 0) MUST keep exactly that shape so the
    # semaphore decrement in .wait() matches the bytes signaled by .start().
    # If per-row shapes ever diverge (e.g. run coalescing), rework this.
    def _wait(slot):
        pltpu.make_async_copy(
            x_hbm.at[:, pl.ds(0, 1), :],
            o_hbm.at[:, pl.ds(0, 1), :],
            sems.at[slot],
        ).wait()

    @pl.loop(0, rows_here)
    def _(i):
        slot = jnp.bitwise_and(i, ring_depth - 1)       # ring_depth is a power of 2

        # Only stall when this ring slot is about to be reused: wait for the
        # DMA issued ring_depth rows ago.  The window never drains mid-chunk.
        @pl.when(i >= ring_depth)
        def _():
            _wait(slot)

        n = start + i
        j = idx_ref[n]
        # In-kernel normalization + clamp (scalar ALU is idle here):
        #   negative indices wrap (torch semantics); out-of-range indices are
        #   clamped so a bad index can never drive an out-of-bounds DMA.
        j = jnp.where(j < 0, j + axis_size, j)
        j = jnp.minimum(jnp.maximum(j, 0), axis_size - 1)

        pltpu.make_async_copy(
            x_hbm.at[:, pl.ds(j, 1), :],
            o_hbm.at[:, pl.ds(n, 1), :],
            sems.at[slot],
        ).start()

    # Drain: at most one DMA is still outstanding per ring slot, and slot b was
    # used at all iff b < rows_here.
    for b in range(ring_depth):
        @pl.when(b < rows_here)
        def _():
            _wait(b)


def _pallas_gather_rows(x3d: jax.Array, idx: jax.Array, *,
                        num_chunks: int, ring_depth: int,
                        core_parallel: bool) -> jax.Array:
    """Gather slabs x3d[P, G, R] at idx[N] -> out[P, N, R] via pipelined DMA."""
    P, G, R = x3d.shape
    N = int(idx.shape[0])
    rows_per_chunk = -(-N // num_chunks)

    kernel = functools.partial(
        _gather_dma_kernel,
        axis_size=G,
        rows_per_chunk=rows_per_chunk,
        n_total=N,
        ring_depth=ring_depth,
    )

    if core_parallel:
        # v7x: genuinely split the row chunks across the two TensorCores (each
        # core gets its own semaphore scratch and issues its own DMA stream).
        semantics = (pltpu.CORE_PARALLEL,)
    else:
        semantics = ("arbitrary",)

    return pl.pallas_call(
        kernel,
        out_shape=jax.ShapeDtypeStruct((P, N, R), x3d.dtype),
        grid_spec=pltpu.PrefetchScalarGridSpec(
            num_scalar_prefetch=1,
            grid=(num_chunks,),
            in_specs=[pl.BlockSpec(memory_space=pl.ANY)],    # input stays in HBM
            out_specs=pl.BlockSpec(memory_space=pl.ANY),     # output stays in HBM
            scratch_shapes=[pltpu.SemaphoreType.DMA((ring_depth,))],
        ),
        compiler_params=pltpu.CompilerParams(
            dimension_semantics=semantics,
        ),
    )(idx, x3d)


# ---------------------------------------------------------------------------
# Wrapper reproducing AndesGather.forward semantics.
# ---------------------------------------------------------------------------

# 32768 int32 = exactly 128 KiB after the 1-D SMEM power-of-two padding rule;
# one more element would pad to 256 KiB, so larger tables fall back to XLA.
_MAX_SMEM_INDICES = 32768


def _next_pow2(n: int) -> int:
    return 1 if n <= 1 else 1 << int(n - 1).bit_length()


def _device_is_v7() -> bool:
    try:
        kind = jax.devices()[0].device_kind.lower()
    except Exception:
        return False
    return ("v7" in kind) or ("tpu7" in kind)


def andes_gather(x, axis: int = 0, indices=0, *, force_pallas: bool = False):
    """out = x[(slice(None),) * axis + (indices,)]  (ONNX Gather / np.take)."""
    x = jnp.asarray(x)
    ndim = x.ndim
    axis = ndim + axis if axis < 0 else axis

    idx = jnp.asarray(indices)
    scalar_index = (idx.ndim == 0)
    idx_shape = idx.shape

    G = int(x.shape[axis])
    P = int(np.prod(x.shape[:axis], dtype=np.int64)) if axis > 0 else 1
    R = int(np.prod(x.shape[axis + 1:], dtype=np.int64)) if axis + 1 < ndim else 1

    idx_flat = jnp.reshape(idx, (-1,)).astype(jnp.int32)
    N = int(idx_flat.shape[0])

    itemsize = jnp.dtype(x.dtype).itemsize
    out_bytes = P * N * R * itemsize
    contig_bytes = R * itemsize          # contiguous bytes per DMA chunk (strided over P)
    degenerate = (N == 0) or (P == 0) or (R == 0) or (G == 0)

    is_v7 = _device_is_v7()
    min_out_bytes = (512 << 10) if is_v7 else (256 << 10)
    # Each row copy is a strided DMA of P chunks of `contig_bytes` each; tiny
    # chunks fall far off the HBM roofline on every generation.
    min_contig_bytes = 512 if P == 1 else 2048

    use_pallas = (not scalar_index) and (not degenerate) and (N <= _MAX_SMEM_INDICES) and (
        force_pallas
        or (out_bytes >= min_out_bytes and contig_bytes >= min_contig_bytes)
    )

    if not use_pallas:
        # Small / scalar / degenerate / lane-sparse problems: XLA's native
        # gather is strictly faster than kernel-launch + strided-DMA overhead.
        # Normalize negatives here (mode="clip" alone would clamp them to 0);
        # out-of-range indices are clamped (explicit policy, matching the
        # Pallas path; PyTorch would raise instead).
        norm = jnp.where(idx < 0, idx + G, idx).astype(jnp.int32)
        return jnp.take(x, norm, axis=axis, mode="clip")

    # Byte-targeted DMA window: keep enough row copies in flight to cover the
    # bandwidth-delay product of the generation (larger on v7x's ~3.2 TB/s HBM).
    slab_bytes = max(1, P * R * itemsize)
    target_inflight_bytes = (8 << 20) if is_v7 else (4 << 20)
    ring_depth = _next_pow2(-(-target_inflight_bytes // slab_bytes))
    ring_depth = max(8, min(64, ring_depth))

    # Split the rows across the two TensorCores only on v7x (CORE_PARALLEL is
    # what actually changes codegen); single sequential chunk elsewhere.
    if is_v7 and N >= 4 * ring_depth:
        num_chunks, core_parallel = 2, True
    else:
        num_chunks, core_parallel = 1, False

    # Zero-copy 3-D view (P, G, R): no moveaxis transpose of input or output.
    x3d = jnp.reshape(x, (P, G, R))
    out3d = _pallas_gather_rows(
        x3d, idx_flat,
        num_chunks=num_chunks, ring_depth=ring_depth, core_parallel=core_parallel,
    )  # (P, N, R)
    return jnp.reshape(out3d, x.shape[:axis] + idx_shape + x.shape[axis + 1:])


# ---------------------------------------------------------------------------
# Demo / correctness checks.
# ---------------------------------------------------------------------------

if __name__ == "__main__":
    key = jax.random.PRNGKey(0)
    k1, k2, k3 = jax.random.split(key, 3)

    # NCHW-style input matching the converter's typical use.
    x = jax.random.normal(k1, (2, 4, 16, 16), dtype=jnp.float32)

    # Case 1: forced Pallas path, gather along the channel axis (ONNX axis=1);
    # middle axis -> exercises the zero-copy (P, G, R) view with P > 1 and the
    # drain path with rows_here < ring_depth.
    idx1 = jnp.array([2, 0, 3], dtype=jnp.int32)
    out1 = andes_gather(x, axis=1, indices=idx1, force_pallas=True)
    jax.block_until_ready(out1)
    assert out1.shape == (2, 3, 16, 16), out1.shape
    np.testing.assert_array_equal(np.asarray(out1), np.asarray(jnp.take(x, idx1, axis=1)))

    # Case 2: forced Pallas path with negative indices -> in-kernel wrap/clamp.
    idx2 = jnp.array([-1, 0, -3], dtype=jnp.int32)
    out2 = andes_gather(x, axis=1, indices=idx2, force_pallas=True)
    jax.block_until_ready(out2)
    ref2 = jnp.take(x, jnp.array([3, 0, 1], dtype=jnp.int32), axis=1)
    assert out2.shape == (2, 3, 16, 16), out2.shape
    np.testing.assert_array_equal(np.asarray(out2), np.asarray(ref2))

    # Case 3: default module config (axis=0, scalar indices=0) -> axis squeezed
    # (scalar index dispatches to the XLA fallback by design).
    out3 = andes_gather(x, axis=0, indices=0)
    jax.block_until_ready(out3)
    assert out3.shape == (4, 16, 16), out3.shape
    np.testing.assert_array_equal(np.asarray(out3), np.asarray(x[0]))

    # Case 4: negative + duplicate indices along the last axis (tiny contiguous
    # chunks -> heuristic falls back to XLA; semantics unchanged).
    idx4 = jnp.array([-1, 0, -1], dtype=jnp.int32)
    out4 = andes_gather(x, axis=-1, indices=idx4)
    jax.block_until_ready(out4)
    ref4 = jnp.take(x, jnp.array([15, 0, 15], dtype=jnp.int32), axis=-1)
    assert out4.shape == (2, 4, 16, 3), out4.shape
    np.testing.assert_array_equal(np.asarray(out4), np.asarray(ref4))

    # Case 5: forced Pallas path with a 2-D index array and an integer dtype.
    xi = jax.random.randint(k2, (4, 8, 32), 0, 100, dtype=jnp.int32)
    idx5 = jnp.array([[7, 0], [3, 3], [1, 5]], dtype=jnp.int32)     # shape (3, 2)
    out5 = andes_gather(xi, axis=1, indices=idx5, force_pallas=True)
    jax.block_until_ready(out5)
    assert out5.shape == (4, 3, 2, 32), out5.shape
    np.testing.assert_array_equal(np.asarray(out5), np.asarray(jnp.take(xi, idx5, axis=1)))

    # Case 6: heuristic Pallas path (no forcing): axis=0 gather with enough
    # rows (N=200 > ring_depth=64) to exercise ring-slot reuse and the final
    # drain, plus the raised byte thresholds.
    x6 = jax.random.normal(k3, (256, 8, 128), dtype=jnp.float32)
    idx6 = jax.random.randint(key, (200,), 0, 256, dtype=jnp.int32)
    out6 = andes_gather(x6, axis=0, indices=idx6)
    jax.block_until_ready(out6)
    assert out6.shape == (200, 8, 128), out6.shape
    np.testing.assert_array_equal(np.asarray(out6), np.asarray(jnp.take(x6, idx6, axis=0)))

    print("KERNEL_OK")
</pallas_src>

<mosaic_0001>
module attributes {stable_mosaic.version = 11 : i64} {
  func.func @_gather_dma_kernel(%arg0: i32, %arg1: memref<3xi32, #tpu.memory_space<smem>>, %arg2: memref<2x4x256xf32, #tpu.memory_space<any>>, %arg3: memref<2x3x256xf32, #tpu.memory_space<any>>, %arg4: memref<64x!tpu.dma_semaphore, #tpu.memory_space<semaphore_mem>>) attributes {dimension_semantics = [#tpu.dimension_semantics<arbitrary>], iteration_bounds = array<i64: 1>, scalar_prefetch = 1 : i64, scratch_operands = 1 : i64, tpu.core_type = #tpu.core_type<tc>, window_params = [{}, {}]} {
    %c3_i32 = arith.constant 3 : i32
    %0 = arith.muli %arg0, %c3_i32 : i32
    %c3_i32_0 = arith.constant 3 : i32
    %1 = arith.subi %c3_i32_0, %0 : i32
    %c3_i32_1 = arith.constant 3 : i32
    %2 = arith.minsi %1, %c3_i32_1 : i32
    %c0_i32 = arith.constant 0 : i32
    %3 = arith.subi %2, %c0_i32 : i32
    %c1_i32 = arith.constant 1 : i32
    %c1_i32_2 = arith.constant 1 : i32
    %4 = arith.subi %c1_i32, %c1_i32_2 : i32
    %5 = arith.addi %3, %4 : i32
    %c1_i32_3 = arith.constant 1 : i32
    %6 = arith.divsi %5, %c1_i32_3 : i32
    %c1_i32_4 = arith.constant 1 : i32
    %c0_i32_5 = arith.constant 0 : i32
    %c0_i32_6 = arith.constant 0 : i32
    %7 = arith.subi %6, %c0_i32_6 : i32
    %8 = arith.addi %c0_i32_6, %7 : i32
    %c1_i32_7 = arith.constant 1 : i32
    scf.for %arg5 = %c0_i32_6 to %8 step %c1_i32_7  : i32 {
      %201 = arith.muli %arg5, %c1_i32_4 : i32
      %202 = arith.addi %c0_i32_5, %201 : i32
      %c63_i32_75 = arith.constant 63 : i32
      %203 = arith.andi %202, %c63_i32_75 : i32
      %c64_i32 = arith.constant 64 : i32
      %204 = arith.cmpi sge, %202, %c64_i32 : i32
      %205 = arith.extui %204 : i1 to i32
      %c0_i32_76 = arith.constant 0 : i32
      %206 = arith.cmpi ne, %205, %c0_i32_76 : i32
      scf.if %206 {
        %c0_i32_85 = arith.constant 0 : i32
        %c0_i32_86 = arith.constant 0 : i32
        %c0_i32_87 = arith.constant 0 : i32
        %219 = tpu.memref_slice %arg2[%c0_i32_85, %c0_i32_86, %c0_i32_87] : memref<2x4x256xf32, #tpu.memory_space<any>> -> memref<2x1x256xf32, #tpu.memory_space<any>>
        %c0_i32_88 = arith.constant 0 : i32
        %c0_i32_89 = arith.constant 0 : i32
        %c0_i32_90 = arith.constant 0 : i32
        %220 = tpu.memref_slice %arg3[%c0_i32_88, %c0_i32_89, %c0_i32_90] : memref<2x3x256xf32, #tpu.memory_space<any>> -> memref<2x1x256xf32, #tpu.memory_space<any>>
        %221 = tpu.memref_slice %arg4[%203] : memref<64x!tpu.dma_semaphore, #tpu.memory_space<semaphore_mem>> -> memref<1x!tpu.dma_semaphore, #tpu.memory_space<semaphore_mem>>
        %222 = tpu.memref_squeeze %221 : memref<1x!tpu.dma_semaphore, #tpu.memory_space<semaphore_mem>> -> memref<!tpu.dma_semaphore, #tpu.memory_space<semaphore_mem>>
        tpu.wait_dma2 semaphore(%222 : memref<!tpu.dma_semaphore, #tpu.memory_space<semaphore_mem>>) src(%219 : memref<2x1x256xf32, #tpu.memory_space<any>>) dst(%220 : memref<2x1x256xf32, #tpu.memory_space<any>>)
      } else {
      }
      %207 = arith.addi %0, %202 : i32
      %208 = arith.index_cast %207 : i32 to index
      %209 = memref.load %arg1[%208] : memref<3xi32, #tpu.memory_space<smem>>
      %c0_i32_77 = arith.constant 0 : i32
      %210 = arith.cmpi slt, %209, %c0_i32_77 : i32
      %c4_i32_78 = arith.constant 4 : i32
      %211 = arith.addi %209, %c4_i32_78 : i32
      %212 = arith.select %210, %211, %209 : i32
      %c0_i32_79 = arith.constant 0 : i32
      %213 = arith.maxsi %212, %c0_i32_79 : i32
      %c3_i32_80 = arith.constant 3 : i32
      %214 = arith.minsi %213, %c3_i32_80 : i32
      %c0_i32_81 = arith.constant 0 : i32
      %c0_i32_82 = arith.constant 0 : i32
      %215 = tpu.memref_slice %arg2[%c0_i32_81, %214, %c0_i32_82] : memref<2x4x256xf32, #tpu.memory_space<any>> -> memref<2x1x256xf32, #tpu.memory_space<any>>
      %c0_i32_83 = arith.constant 0 : i32
      %c0_i32_84 = arith.constant 0 : i32
      %216 = tpu.memref_slice %arg3[%c0_i32_83, %207, %c0_i32_84] : memref<2x3x256xf32, #tpu.memory_space<any>> -> memref<2x1x256xf32, #tpu.memory_space<any>>
      %217 = tpu.memref_slice %arg4[%203] : memref<64x!tpu.dma_semaphore, #tpu.memory_space<semaphore_mem>> -> memref<1x!tpu.dma_semaphore, #tpu.memory_space<semaphore_mem>>
      %218 = tpu.memref_squeeze %217 : memref<1x!tpu.dma_semaphore, #tpu.memory_space<semaphore_mem>> -> memref<!tpu.dma_semaphore, #tpu.memory_space<semaphore_mem>>
      tpu.enqueue_dma source(%215 : memref<2x1x256xf32, #tpu.memory_space<any>>) target(%216 : memref<2x1x256xf32, #tpu.memory_space<any>>) target_semaphore(%218 : memref<!tpu.dma_semaphore, #tpu.memory_space<semaphore_mem>>)
    }
    %c0_i32_8 = arith.constant 0 : i32
    %9 = arith.cmpi sgt, %2, %c0_i32_8 : i32
    %10 = arith.extui %9 : i1 to i32
    %c0_i32_9 = arith.constant 0 : i32
    %11 = arith.cmpi ne, %10, %c0_i32_9 : i32
    scf.if %11 {
      %c0_i32_75 = arith.constant 0 : i32
      %c0_i32_76 = arith.constant 0 : i32
      %c0_i32_77 = arith.constant 0 : i32
      %c0_i32_78 = arith.constant 0 : i32
      %201 = tpu.memref_slice %arg2[%c0_i32_76, %c0_i32_77, %c0_i32_78] : memref<2x4x256xf32, #tpu.memory_space<any>> -> memref<2x1x256xf32, #tpu.memory_space<any>>
      %c0_i32_79 = arith.constant 0 : i32
      %c0_i32_80 = arith.constant 0 : i32
      %c0_i32_81 = arith.constant 0 : i32
      %202 = tpu.memref_slice %arg3[%c0_i32_79, %c0_i32_80, %c0_i32_81] : memref<2x3x256xf32, #tpu.memory_space<any>> -> memref<2x1x256xf32, #tpu.memory_space<any>>
      %203 = tpu.memref_slice %arg4[%c0_i32_75] : memref<64x!tpu.dma_semaphore, #tpu.memory_space<semaphore_mem>> -> memref<1x!tpu.dma_semaphore, #tpu.memory_space<semaphore_mem>>
      %204 = tpu.memref_squeeze %203 : memref<1x!tpu.dma_semaphore, #tpu.memory_space<semaphore_mem>> -> memref<!tpu.dma_semaphore, #tpu.memory_space<semaphore_mem>>
      tpu.wait_dma2 semaphore(%204 : memref<!tpu.dma_semaphore, #tpu.memory_space<semaphore_mem>>) src(%201 : memref<2x1x256xf32, #tpu.memory_space<any>>) dst(%202 : memref<2x1x256xf32, #tpu.memory_space<any>>)
    } else {
    }
    %c1_i32_10 = arith.constant 1 : i32
    %12 = arith.cmpi sgt, %2, %c1_i32_10 : i32
    %13 = arith.extui %12 : i1 to i32
    %c0_i32_11 = arith.constant 0 : i32
    %14 = arith.cmpi ne, %13, %c0_i32_11 : i32
    scf.if %14 {
      %c1_i32_75 = arith.constant 1 : i32
      %c0_i32_76 = arith.constant 0 : i32
      %c0_i32_77 = arith.constant 0 : i32
      %c0_i32_78 = arith.constant 0 : i32
      %201 = tpu.memref_slice %arg2[%c0_i32_76, %c0_i32_77, %c0_i32_78] : memref<2x4x256xf32, #tpu.memory_space<any>> -> memref<2x1x256xf32, #tpu.memory_space<any>>
      %c0_i32_79 = arith.constant 0 : i32
      %c0_i32_80 = arith.constant 0 : i32
      %c0_i32_81 = arith.constant 0 : i32
      %202 = tpu.memref_slice %arg3[%c0_i32_79, %c0_i32_80, %c0_i32_81] : memref<2x3x256xf32, #tpu.memory_space<any>> -> memref<2x1x256xf32, #tpu.memory_space<any>>
      %203 = tpu.memref_slice %arg4[%c1_i32_75] : memref<64x!tpu.dma_semaphore, #tpu.memory_space<semaphore_mem>> -> memref<1x!tpu.dma_semaphore, #tpu.memory_space<semaphore_mem>>
      %204 = tpu.memref_squeeze %203 : memref<1x!tpu.dma_semaphore, #tpu.memory_space<semaphore_mem>> -> memref<!tpu.dma_semaphore, #tpu.memory_space<semaphore_mem>>
      tpu.wait_dma2 semaphore(%204 : memref<!tpu.dma_semaphore, #tpu.memory_space<semaphore_mem>>) src(%201 : memref<2x1x256xf32, #tpu.memory_space<any>>) dst(%202 : memref<2x1x256xf32, #tpu.memory_space<any>>)
    } else {
    }
    %c2_i32 = arith.constant 2 : i32
    %15 = arith.cmpi sgt, %2, %c2_i32 : i32
    %16 = arith.extui %15 : i1 to i32
    %c0_i32_12 = arith.constant 0 : i32
    %17 = arith.cmpi ne, %16, %c0_i32_12 : i32
    scf.if %17 {
      %c2_i32_75 = arith.constant 2 : i32
      %c0_i32_76 = arith.constant 0 : i32
      %c0_i32_77 = arith.constant 0 : i32
      %c0_i32_78 = arith.constant 0 : i32
      %201 = tpu.memref_slice %arg2[%c0_i32_76, %c0_i32_77, %c0_i32_78] : memref<2x4x256xf32, #tpu.memory_space<any>> -> memref<2x1x256xf32, #tpu.memory_space<any>>
      %c0_i32_79 = arith.constant 0 : i32
      %c0_i32_80 = arith.constant 0 : i32
      %c0_i32_81 = arith.constant 0 : i32
      %202 = tpu.memref_slice %arg3[%c0_i32_79, %c0_i32_80, %c0_i32_81] : memref<2x3x256xf32, #tpu.memory_space<any>> -> memref<2x1x256xf32, #tpu.memory_space<any>>
      %203 = tpu.memref_slice %arg4[%c2_i32_75] : memref<64x!tpu.dma_semaphore, #tpu.memory_space<semaphore_mem>> -> memref<1x!tpu.dma_semaphore, #tpu.memory_space<semaphore_mem>>
      %204 = tpu.memref_squeeze %203 : memref<1x!tpu.dma_semaphore, #tpu.memory_space<semaphore_mem>> -> memref<!tpu.dma_semaphore, #tpu.memory_space<semaphore_mem>>
      tpu.wait_dma2 semaphore(%204 : memref<!tpu.dma_semaphore, #tpu.memory_space<semaphore_mem>>) src(%201 : memref<2x1x256xf32, #tpu.memory_space<any>>) dst(%202 : memref<2x1x256xf32, #tpu.memory_space<any>>)
    } else {
    }
    %c3_i32_13 = arith.constant 3 : i32
    %18 = arith.cmpi sgt, %2, %c3_i32_13 : i32
    %19 = arith.extui %18 : i1 to i32
    %c0_i32_14 = arith.constant 0 : i32
    %20 = arith.cmpi ne, %19, %c0_i32_14 : i32
    scf.if %20 {
      %c3_i32_75 = arith.constant 3 : i32
      %c0_i32_76 = arith.constant 0 : i32
      %c0_i32_77 = arith.constant 0 : i32
      %c0_i32_78 = arith.constant 0 : i32
      %201 = tpu.memref_slice %arg2[%c0_i32_76, %c0_i32_77, %c0_i32_78] : memref<2x4x256xf32, #tpu.memory_space<any>> -> memref<2x1x256xf32, #tpu.memory_space<any>>
      %c0_i32_79 = arith.constant 0 : i32
      %c0_i32_80 = arith.constant 0 : i32
      %c0_i32_81 = arith.constant 0 : i32
      %202 = tpu.memref_slice %arg3[%c0_i32_79, %c0_i32_80, %c0_i32_81] : memref<2x3x256xf32, #tpu.memory_space<any>> -> memref<2x1x256xf32, #tpu.memory_space<any>>
      %203 = tpu.memref_slice %arg4[%c3_i32_75] : memref<64x!tpu.dma_semaphore, #tpu.memory_space<semaphore_mem>> -> memref<1x!tpu.dma_semaphore, #tpu.memory_space<semaphore_mem>>
      %204 = tpu.memref_squeeze %203 : memref<1x!tpu.dma_semaphore, #tpu.memory_space<semaphore_mem>> -> memref<!tpu.dma_semaphore, #tpu.memory_space<semaphore_mem>>
      tpu.wait_dma2 semaphore(%204 : memref<!tpu.dma_semaphore, #tpu.memory_space<semaphore_mem>>) src(%201 : memref<2x1x256xf32, #tpu.memory_space<any>>) dst(%202 : memref<2x1x256xf32, #tpu.memory_space<any>>)
    } else {
    }
    %c4_i32 = arith.constant 4 : i32
    %21 = arith.cmpi sgt, %2, %c4_i32 : i32
    %22 = arith.extui %21 : i1 to i32
    %c0_i32_15 = arith.constant 0 : i32
    %23 = arith.cmpi ne, %22, %c0_i32_15 : i32
    scf.if %23 {
      %c4_i32_75 = arith.constant 4 : i32
      %c0_i32_76 = arith.constant 0 : i32
      %c0_i32_77 = arith.constant 0 : i32
      %c0_i32_78 = arith.constant 0 : i32
      %201 = tpu.memref_slice %arg2[%c0_i32_76, %c0_i32_77, %c0_i32_78] : memref<2x4x256xf32, #tpu.memory_space<any>> -> memref<2x1x256xf32, #tpu.memory_space<any>>
      %c0_i32_79 = arith.constant 0 : i32
      %c0_i32_80 = arith.constant 0 : i32
      %c0_i32_81 = arith.constant 0 : i32
      %202 = tpu.memref_slice %arg3[%c0_i32_79, %c0_i32_80, %c0_i32_81] : memref<2x3x256xf32, #tpu.memory_space<any>> -> memref<2x1x256xf32, #tpu.memory_space<any>>
      %203 = tpu.memref_slice %arg4[%c4_i32_75] : memref<64x!tpu.dma_semaphore, #tpu.memory_space<semaphore_mem>> -> memref<1x!tpu.dma_semaphore, #tpu.memory_space<semaphore_mem>>
      %204 = tpu.memref_squeeze %203 : memref<1x!tpu.dma_semaphore, #tpu.memory_space<semaphore_mem>> -> memref<!tpu.dma_semaphore, #tpu.memory_space<semaphore_mem>>
      tpu.wait_dma2 semaphore(%204 : memref<!tpu.dma_semaphore, #tpu.memory_space<semaphore_mem>>) src(%201 : memref<2x1x256xf32, #tpu.memory_space<any>>) dst(%202 : memref<2x1x256xf32, #tpu.memory_space<any>>)
    } else {
    }
    %c5_i32 = arith.constant 5 : i32
    %24 = arith.cmpi sgt, %2, %c5_i32 : i32
    %25 = arith.extui %24 : i1 to i32
    %c0_i32_16 = arith.constant 0 : i32
    %26 = arith.cmpi ne, %25, %c0_i32_16 : i32
    scf.if %26 {
      %c5_i32_75 = arith.constant 5 : i32
      %c0_i32_76 = arith.constant 0 : i32
      %c0_i32_77 = arith.constant 0 : i32
      %c0_i32_78 = arith.constant 0 : i32
      %201 = tpu.memref_slice %arg2[%c0_i32_76, %c0_i32_77, %c0_i32_78] : memref<2x4x256xf32, #tpu.memory_space<any>> -> memref<2x1x256xf32, #tpu.memory_space<any>>
      %c0_i32_79 = arith.constant 0 : i32
      %c0_i32_80 = arith.constant 0 : i32
      %c0_i32_81 = arith.constant 0 : i32
      %202 = tpu.memref_slice %arg3[%c0_i32_79, %c0_i32_80, %c0_i32_81] : memref<2x3x256xf32, #tpu.memory_space<any>> -> memref<2x1x256xf32, #tpu.memory_space<any>>
      %203 = tpu.memref_slice %arg4[%c5_i32_75] : memref<64x!tpu.dma_semaphore, #tpu.memory_space<semaphore_mem>> -> memref<1x!tpu.dma_semaphore, #tpu.memory_space<semaphore_mem>>
      %204 = tpu.memref_squeeze %203 : memref<1x!tpu.dma_semaphore, #tpu.memory_space<semaphore_mem>> -> memref<!tpu.dma_semaphore, #tpu.memory_space<semaphore_mem>>
      tpu.wait_dma2 semaphore(%204 : memref<!tpu.dma_semaphore, #tpu.memory_space<semaphore_mem>>) src(%201 : memref<2x1x256xf32, #tpu.memory_space<any>>) dst(%202 : memref<2x1x256xf32, #tpu.memory_space<any>>)
    } else {
    }
    %c6_i32 = arith.constant 6 : i32
    %27 = arith.cmpi sgt, %2, %c6_i32 : i32
    %28 = arith.extui %27 : i1 to i32
    %c0_i32_17 = arith.constant 0 : i32
    %29 = arith.cmpi ne, %28, %c0_i32_17 : i32
    scf.if %29 {
      %c6_i32_75 = arith.constant 6 : i32
      %c0_i32_76 = arith.constant 0 : i32
      %c0_i32_77 = arith.constant 0 : i32
      %c0_i32_78 = arith.constant 0 : i32
      %201 = tpu.memref_slice %arg2[%c0_i32_76, %c0_i32_77, %c0_i32_78] : memref<2x4x256xf32, #tpu.memory_space<any>> -> memref<2x1x256xf32, #tpu.memory_space<any>>
      %c0_i32_79 = arith.constant 0 : i32
      %c0_i32_80 = arith.constant 0 : i32
      %c0_i32_81 = arith.constant 0 : i32
      %202 = tpu.memref_slice %arg3[%c0_i32_79, %c0_i32_80, %c0_i32_81] : memref<2x3x256xf32, #tpu.memory_space<any>> -> memref<2x1x256xf32, #tpu.memory_space<any>>
      %203 = tpu.memref_slice %arg4[%c6_i32_75] : memref<64x!tpu.dma_semaphore, #tpu.memory_space<semaphore_mem>> -> memref<1x!tpu.dma_semaphore, #tpu.memory_space<semaphore_mem>>
      %204 = tpu.memref_squeeze %203 : memref<1x!tpu.dma_semaphore, #tpu.memory_space<semaphore_mem>> -> memref<!tpu.dma_semaphore, #tpu.memory_space<semaphore_mem>>
      tpu.wait_dma2 semaphore(%204 : memref<!tpu.dma_semaphore, #tpu.memory_space<semaphore_mem>>) src(%201 : memref<2x1x256xf32, #tpu.memory_space<any>>) dst(%202 : memref<2x1x256xf32, #tpu.memory_space<any>>)
    } else {
    }
    %c7_i32 = arith.constant 7 : i32
    %30 = arith.cmpi sgt, %2, %c7_i32 : i32
    %31 = arith.extui %30 : i1 to i32
    %c0_i32_18 = arith.constant 0 : i32
    %32 = arith.cmpi ne, %31, %c0_i32_18 : i32
    scf.if %32 {
      %c7_i32_75 = arith.constant 7 : i32
      %c0_i32_76 = arith.constant 0 : i32
      %c0_i32_77 = arith.constant 0 : i32
      %c0_i32_78 = arith.constant 0 : i32
      %201 = tpu.memref_slice %arg2[%c0_i32_76, %c0_i32_77, %c0_i32_78] : memref<2x4x256xf32, #tpu.memory_space<any>> -> memref<2x1x256xf32, #tpu.memory_space<any>>
      %c0_i32_79 = arith.constant 0 : i32
      %c0_i32_80 = arith.constant 0 : i32
      %c0_i32_81 = arith.constant 0 : i32
      %202 = tpu.memref_slice %arg3[%c0_i32_79, %c0_i32_80, %c0_i32_81] : memref<2x3x256xf32, #tpu.memory_space<any>> -> memref<2x1x256xf32, #tpu.memory_space<any>>
      %203 = tpu.memref_slice %arg4[%c7_i32_75] : memref<64x!tpu.dma_semaphore, #tpu.memory_space<semaphore_mem>> -> memref<1x!tpu.dma_semaphore, #tpu.memory_space<semaphore_mem>>
      %204 = tpu.memref_squeeze %203 : memref<1x!tpu.dma_semaphore, #tpu.memory_space<semaphore_mem>> -> memref<!tpu.dma_semaphore, #tpu.memory_space<semaphore_mem>>
      tpu.wait_dma2 semaphore(%204 : memref<!tpu.dma_semaphore, #tpu.memory_space<semaphore_mem>>) src(%201 : memref<2x1x256xf32, #tpu.memory_space<any>>) dst(%202 : memref<2x1x256xf32, #tpu.memory_space<any>>)
    } else {
    }
    %c8_i32 = arith.constant 8 : i32
    %33 = arith.cmpi sgt, %2, %c8_i32 : i32
    %34 = arith.extui %33 : i1 to i32
    %c0_i32_19 = arith.constant 0 : i32
    %35 = arith.cmpi ne, %34, %c0_i32_19 : i32
    scf.if %35 {
      %c8_i32_75 = arith.constant 8 : i32
      %c0_i32_76 = arith.constant 0 : i32
      %c0_i32_77 = arith.constant 0 : i32
      %c0_i32_78 = arith.constant 0 : i32
      %201 = tpu.memref_slice %arg2[%c0_i32_76, %c0_i32_77, %c0_i32_78] : memref<2x4x256xf32, #tpu.memory_space<any>> -> memref<2x1x256xf32, #tpu.memory_space<any>>
      %c0_i32_79 = arith.constant 0 : i32
      %c0_i32_80 = arith.constant 0 : i32
      %c0_i32_81 = arith.constant 0 : i32
      %202 = tpu.memref_slice %arg3[%c0_i32_79, %c0_i32_80, %c0_i32_81] : memref<2x3x256xf32, #tpu.memory_space<any>> -> memref<2x1x256xf32, #tpu.memory_space<any>>
      %203 = tpu.memref_slice %arg4[%c8_i32_75] : memref<64x!tpu.dma_semaphore, #tpu.memory_space<semaphore_mem>> -> memref<1x!tpu.dma_semaphore, #tpu.memory_space<semaphore_mem>>
      %204 = tpu.memref_squeeze %203 : memref<1x!tpu.dma_semaphore, #tpu.memory_space<semaphore_mem>> -> memref<!tpu.dma_semaphore, #tpu.memory_space<semaphore_mem>>
      tpu.wait_dma2 semaphore(%204 : memref<!tpu.dma_semaphore, #tpu.memory_space<semaphore_mem>>) src(%201 : memref<2x1x256xf32, #tpu.memory_space<any>>) dst(%202 : memref<2x1x256xf32, #tpu.memory_space<any>>)
    } else {
    }
    %c9_i32 = arith.constant 9 : i32
    %36 = arith.cmpi sgt, %2, %c9_i32 : i32
    %37 = arith.extui %36 : i1 to i32
    %c0_i32_20 = arith.constant 0 : i32
    %38 = arith.cmpi ne, %37, %c0_i32_20 : i32
    scf.if %38 {
      %c9_i32_75 = arith.constant 9 : i32
      %c0_i32_76 = arith.constant 0 : i32
      %c0_i32_77 = arith.constant 0 : i32
      %c0_i32_78 = arith.constant 0 : i32
      %201 = tpu.memref_slice %arg2[%c0_i32_76, %c0_i32_77, %c0_i32_78] : memref<2x4x256xf32, #tpu.memory_space<any>> -> memref<2x1x256xf32, #tpu.memory_space<any>>
      %c0_i32_79 = arith.constant 0 : i32
      %c0_i32_80 = arith.constant 0 : i32
      %c0_i32_81 = arith.constant 0 : i32
      %202 = tpu.memref_slice %arg3[%c0_i32_79, %c0_i32_80, %c0_i32_81] : memref<2x3x256xf32, #tpu.memory_space<any>> -> memref<2x1x256xf32, #tpu.memory_space<any>>
      %203 = tpu.memref_slice %arg4[%c9_i32_75] : memref<64x!tpu.dma_semaphore, #tpu.memory_space<semaphore_mem>> -> memref<1x!tpu.dma_semaphore, #tpu.memory_space<semaphore_mem>>
      %204 = tpu.memref_squeeze %203 : memref<1x!tpu.dma_semaphore, #tpu.memory_space<semaphore_mem>> -> memref<!tpu.dma_semaphore, #tpu.memory_space<semaphore_mem>>
      tpu.wait_dma2 semaphore(%204 : memref<!tpu.dma_semaphore, #tpu.memory_space<semaphore_mem>>) src(%201 : memref<2x1x256xf32, #tpu.memory_space<any>>) dst(%202 : memref<2x1x256xf32, #tpu.memory_space<any>>)
    } else {
    }
    %c10_i32 = arith.constant 10 : i32
    %39 = arith.cmpi sgt, %2, %c10_i32 : i32
    %40 = arith.extui %39 : i1 to i32
    %c0_i32_21 = arith.constant 0 : i32
    %41 = arith.cmpi ne, %40, %c0_i32_21 : i32
    scf.if %41 {
      %c10_i32_75 = arith.constant 10 : i32
      %c0_i32_76 = arith.constant 0 : i32
      %c0_i32_77 = arith.constant 0 : i32
      %c0_i32_78 = arith.constant 0 : i32
      %201 = tpu.memref_slice %arg2[%c0_i32_76, %c0_i32_77, %c0_i32_78] : memref<2x4x256xf32, #tpu.memory_space<any>> -> memref<2x1x256xf32, #tpu.memory_space<any>>
      %c0_i32_79 = arith.constant 0 : i32
      %c0_i32_80 = arith.constant 0 : i32
      %c0_i32_81 = arith.constant 0 : i32
      %202 = tpu.memref_slice %arg3[%c0_i32_79, %c0_i32_80, %c0_i32_81] : memref<2x3x256xf32, #tpu.memory_space<any>> -> memref<2x1x256xf32, #tpu.memory_space<any>>
      %203 = tpu.memref_slice %arg4[%c10_i32_75] : memref<64x!tpu.dma_semaphore, #tpu.memory_space<semaphore_mem>> -> memref<1x!tpu.dma_semaphore, #tpu.memory_space<semaphore_mem>>
      %204 = tpu.memref_squeeze %203 : memref<1x!tpu.dma_semaphore, #tpu.memory_space<semaphore_mem>> -> memref<!tpu.dma_semaphore, #tpu.memory_space<semaphore_mem>>
      tpu.wait_dma2 semaphore(%204 : memref<!tpu.dma_semaphore, #tpu.memory_space<semaphore_mem>>) src(%201 : memref<2x1x256xf32, #tpu.memory_space<any>>) dst(%202 : memref<2x1x256xf32, #tpu.memory_space<any>>)
    } else {
    }
    %c11_i32 = arith.constant 11 : i32
    %42 = arith.cmpi sgt, %2, %c11_i32 : i32
    %43 = arith.extui %42 : i1 to i32
    %c0_i32_22 = arith.constant 0 : i32
    %44 = arith.cmpi ne, %43, %c0_i32_22 : i32
    scf.if %44 {
      %c11_i32_75 = arith.constant 11 : i32
      %c0_i32_76 = arith.constant 0 : i32
      %c0_i32_77 = arith.constant 0 : i32
      %c0_i32_78 = arith.constant 0 : i32
      %201 = tpu.memref_slice %arg2[%c0_i32_76, %c0_i32_77, %c0_i32_78] : memref<2x4x256xf32, #tpu.memory_space<any>> -> memref<2x1x256xf32, #tpu.memory_space<any>>
      %c0_i32_79 = arith.constant 0 : i32
      %c0_i32_80 = arith.constant 0 : i32
      %c0_i32_81 = arith.constant 0 : i32
      %202 = tpu.memref_slice %arg3[%c0_i32_79, %c0_i32_80, %c0_i32_81] : memref<2x3x256xf32, #tpu.memory_space<any>> -> memref<2x1x256xf32, #tpu.memory_space<any>>
      %203 = tpu.memref_slice %arg4[%c11_i32_75] : memref<64x!tpu.dma_semaphore, #tpu.memory_space<semaphore_mem>> -> memref<1x!tpu.dma_semaphore, #tpu.memory_space<semaphore_mem>>
      %204 = tpu.memref_squeeze %203 : memref<1x!tpu.dma_semaphore, #tpu.memory_space<semaphore_mem>> -> memref<!tpu.dma_semaphore, #tpu.memory_space<semaphore_mem>>
      tpu.wait_dma2 semaphore(%204 : memref<!tpu.dma_semaphore, #tpu.memory_space<semaphore_mem>>) src(%201 : memref<2x1x256xf32, #tpu.memory_space<any>>) dst(%202 : memref<2x1x256xf32, #tpu.memory_space<any>>)
    } else {
    }
    %c12_i32 = arith.constant 12 : i32
    %45 = arith.cmpi sgt, %2, %c12_i32 : i32
    %46 = arith.extui %45 : i1 to i32
    %c0_i32_23 = arith.constant 0 : i32
    %47 = arith.cmpi ne, %46, %c0_i32_23 : i32
    scf.if %47 {
      %c12_i32_75 = arith.constant 12 : i32
      %c0_i32_76 = arith.constant 0 : i32
      %c0_i32_77 = arith.constant 0 : i32
      %c0_i32_78 = arith.constant 0 : i32
      %201 = tpu.memref_slice %arg2[%c0_i32_76, %c0_i32_77, %c0_i32_78] : memref<2x4x256xf32, #tpu.memory_space<any>> -> memref<2x1x256xf32, #tpu.memory_space<any>>
      %c0_i32_79 = arith.constant 0 : i32
      %c0_i32_80 = arith.constant 0 : i32
      %c0_i32_81 = arith.constant 0 : i32
      %202 = tpu.memref_slice %arg3[%c0_i32_79, %c0_i32_80, %c0_i32_81] : memref<2x3x256xf32, #tpu.memory_space<any>> -> memref<2x1x256xf32, #tpu.memory_space<any>>
      %203 = tpu.memref_slice %arg4[%c12_i32_75] : memref<64x!tpu.dma_semaphore, #tpu.memory_space<semaphore_mem>> -> memref<1x!tpu.dma_semaphore, #tpu.memory_space<semaphore_mem>>
      %204 = tpu.memref_squeeze %203 : memref<1x!tpu.dma_semaphore, #tpu.memory_space<semaphore_mem>> -> memref<!tpu.dma_semaphore, #tpu.memory_space<semaphore_mem>>
      tpu.wait_dma2 semaphore(%204 : memref<!tpu.dma_semaphore, #tpu.memory_space<semaphore_mem>>) src(%201 : memref<2x1x256xf32, #tpu.memory_space<any>>) dst(%202 : memref<2x1x256xf32, #tpu.memory_space<any>>)
    } else {
    }
    %c13_i32 = arith.constant 13 : i32
    %48 = arith.cmpi sgt, %2, %c13_i32 : i32
    %49 = arith.extui %48 : i1 to i32
    %c0_i32_24 = arith.constant 0 : i32
    %50 = arith.cmpi ne, %49, %c0_i32_24 : i32
    scf.if %50 {
      %c13_i32_75 = arith.constant 13 : i32
      %c0_i32_76 = arith.constant 0 : i32
      %c0_i32_77 = arith.constant 0 : i32
      %c0_i32_78 = arith.constant 0 : i32
      %201 = tpu.memref_slice %arg2[%c0_i32_76, %c0_i32_77, %c0_i32_78] : memref<2x4x256xf32, #tpu.memory_space<any>> -> memref<2x1x256xf32, #tpu.memory_space<any>>
      %c0_i32_79 = arith.constant 0 : i32
      %c0_i32_80 = arith.constant 0 : i32
      %c0_i32_81 = arith.constant 0 : i32
      %202 = tpu.memref_slice %arg3[%c0_i32_79, %c0_i32_80, %c0_i32_81] : memref<2x3x256xf32, #tpu.memory_space<any>> -> memref<2x1x256xf32, #tpu.memory_space<any>>
      %203 = tpu.memref_slice %arg4[%c13_i32_75] : memref<64x!tpu.dma_semaphore, #tpu.memory_space<semaphore_mem>> -> memref<1x!tpu.dma_semaphore, #tpu.memory_space<semaphore_mem>>
      %204 = tpu.memref_squeeze %203 : memref<1x!tpu.dma_semaphore, #tpu.memory_space<semaphore_mem>> -> memref<!tpu.dma_semaphore, #tpu.memory_space<semaphore_mem>>
      tpu.wait_dma2 semaphore(%204 : memref<!tpu.dma_semaphore, #tpu.memory_space<semaphore_mem>>) src(%201 : memref<2x1x256xf32, #tpu.memory_space<any>>) dst(%202 : memref<2x1x256xf32, #tpu.memory_space<any>>)
    } else {
    }
    %c14_i32 = arith.constant 14 : i32
    %51 = arith.cmpi sgt, %2, %c14_i32 : i32
    %52 = arith.extui %51 : i1 to i32
    %c0_i32_25 = arith.constant 0 : i32
    %53 = arith.cmpi ne, %52, %c0_i32_25 : i32
    scf.if %53 {
      %c14_i32_75 = arith.constant 14 : i32
      %c0_i32_76 = arith.constant 0 : i32
      %c0_i32_77 = arith.constant 0 : i32
      %c0_i32_78 = arith.constant 0 : i32
      %201 = tpu.memref_slice %arg2[%c0_i32_76, %c0_i32_77, %c0_i32_78] : memref<2x4x256xf32, #tpu.memory_space<any>> -> memref<2x1x256xf32, #tpu.memory_space<any>>
      %c0_i32_79 = arith.constant 0 : i32
      %c0_i32_80 = arith.constant 0 : i32
      %c0_i32_81 = arith.constant 0 : i32
      %202 = tpu.memref_slice %arg3[%c0_i32_79, %c0_i32_80, %c0_i32_81] : memref<2x3x256xf32, #tpu.memory_space<any>> -> memref<2x1x256xf32, #tpu.memory_space<any>>
      %203 = tpu.memref_slice %arg4[%c14_i32_75] : memref<64x!tpu.dma_semaphore, #tpu.memory_space<semaphore_mem>> -> memref<1x!tpu.dma_semaphore, #tpu.memory_space<semaphore_mem>>
      %204 = tpu.memref_squeeze %203 : memref<1x!tpu.dma_semaphore, #tpu.memory_space<semaphore_mem>> -> memref<!tpu.dma_semaphore, #tpu.memory_space<semaphore_mem>>
      tpu.wait_dma2 semaphore(%204 : memref<!tpu.dma_semaphore, #tpu.memory_space<semaphore_mem>>) src(%201 : memref<2x1x256xf32, #tpu.memory_space<any>>) dst(%202 : memref<2x1x256xf32, #tpu.memory_space<any>>)
    } else {
    }
    %c15_i32 = arith.constant 15 : i32
    %54 = arith.cmpi sgt, %2, %c15_i32 : i32
    %55 = arith.extui %54 : i1 to i32
    %c0_i32_26 = arith.constant 0 : i32
    %56 = arith.cmpi ne, %55, %c0_i32_26 : i32
    scf.if %56 {
      %c15_i32_75 = arith.constant 15 : i32
      %c0_i32_76 = arith.constant 0 : i32
      %c0_i32_77 = arith.constant 0 : i32
      %c0_i32_78 = arith.constant 0 : i32
      %201 = tpu.memref_slice %arg2[%c0_i32_76, %c0_i32_77, %c0_i32_78] : memref<2x4x256xf32, #tpu.memory_space<any>> -> memref<2x1x256xf32, #tpu.memory_space<any>>
      %c0_i32_79 = arith.constant 0 : i32
      %c0_i32_80 = arith.constant 0 : i32
      %c0_i32_81 = arith.constant 0 : i32
      %202 = tpu.memref_slice %arg3[%c0_i32_79, %c0_i32_80, %c0_i32_81] : memref<2x3x256xf32, #tpu.memory_space<any>> -> memref<2x1x256xf32, #tpu.memory_space<any>>
      %203 = tpu.memref_slice %arg4[%c15_i32_75] : memref<64x!tpu.dma_semaphore, #tpu.memory_space<semaphore_mem>> -> memref<1x!tpu.dma_semaphore, #tpu.memory_space<semaphore_mem>>
      %204 = tpu.memref_squeeze %203 : memref<1x!tpu.dma_semaphore, #tpu.memory_space<semaphore_mem>> -> memref<!tpu.dma_semaphore, #tpu.memory_space<semaphore_mem>>
      tpu.wait_dma2 semaphore(%204 : memref<!tpu.dma_semaphore, #tpu.memory_space<semaphore_mem>>) src(%201 : memref<2x1x256xf32, #tpu.memory_space<any>>) dst(%202 : memref<2x1x256xf32, #tpu.memory_space<any>>)
    } else {
    }
    %c16_i32 = arith.constant 16 : i32
    %57 = arith.cmpi sgt, %2, %c16_i32 : i32
    %58 = arith.extui %57 : i1 to i32
    %c0_i32_27 = arith.constant 0 : i32
    %59 = arith.cmpi ne, %58, %c0_i32_27 : i32
    scf.if %59 {
      %c16_i32_75 = arith.constant 16 : i32
      %c0_i32_76 = arith.constant 0 : i32
      %c0_i32_77 = arith.constant 0 : i32
      %c0_i32_78 = arith.constant 0 : i32
      %201 = tpu.memref_slice %arg2[%c0_i32_76, %c0_i32_77, %c0_i32_78] : memref<2x4x256xf32, #tpu.memory_space<any>> -> memref<2x1x256xf32, #tpu.memory_space<any>>
      %c0_i32_79 = arith.constant 0 : i32
      %c0_i32_80 = arith.constant 0 : i32
      %c0_i32_81 = arith.constant 0 : i32
      %202 = tpu.memref_slice %arg3[%c0_i32_79, %c0_i32_80, %c0_i32_81] : memref<2x3x256xf32, #tpu.memory_space<any>> -> memref<2x1x256xf32, #tpu.memory_space<any>>
      %203 = tpu.memref_slice %arg4[%c16_i32_75] : memref<64x!tpu.dma_semaphore, #tpu.memory_space<semaphore_mem>> -> memref<1x!tpu.dma_semaphore, #tpu.memory_space<semaphore_mem>>
      %204 = tpu.memref_squeeze %203 : memref<1x!tpu.dma_semaphore, #tpu.memory_space<semaphore_mem>> -> memref<!tpu.dma_semaphore, #tpu.memory_space<semaphore_mem>>
      tpu.wait_dma2 semaphore(%204 : memref<!tpu.dma_semaphore, #tpu.memory_space<semaphore_mem>>) src(%201 : memref<2x1x256xf32, #tpu.memory_space<any>>) dst(%202 : memref<2x1x256xf32, #tpu.memory_space<any>>)
    } else {
    }
    %c17_i32 = arith.constant 17 : i32
    %60 = arith.cmpi sgt, %2, %c17_i32 : i32
    %61 = arith.extui %60 : i1 to i32
    %c0_i32_28 = arith.constant 0 : i32
    %62 = arith.cmpi ne, %61, %c0_i32_28 : i32
    scf.if %62 {
      %c17_i32_75 = arith.constant 17 : i32
      %c0_i32_76 = arith.constant 0 : i32
      %c0_i32_77 = arith.constant 0 : i32
      %c0_i32_78 = arith.constant 0 : i32
      %201 = tpu.memref_slice %arg2[%c0_i32_76, %c0_i32_77, %c0_i32_78] : memref<2x4x256xf32, #tpu.memory_space<any>> -> memref<2x1x256xf32, #tpu.memory_space<any>>
      %c0_i32_79 = arith.constant 0 : i32
      %c0_i32_80 = arith.constant 0 : i32
      %c0_i32_81 = arith.constant 0 : i32
      %202 = tpu.memref_slice %arg3[%c0_i32_79, %c0_i32_80, %c0_i32_81] : memref<2x3x256xf32, #tpu.memory_space<any>> -> memref<2x1x256xf32, #tpu.memory_space<any>>
      %203 = tpu.memref_slice %arg4[%c17_i32_75] : memref<64x!tpu.dma_semaphore, #tpu.memory_space<semaphore_mem>> -> memref<1x!tpu.dma_semaphore, #tpu.memory_space<semaphore_mem>>
      %204 = tpu.memref_squeeze %203 : memref<1x!tpu.dma_semaphore, #tpu.memory_space<semaphore_mem>> -> memref<!tpu.dma_semaphore, #tpu.memory_space<semaphore_mem>>
      tpu.wait_dma2 semaphore(%204 : memref<!tpu.dma_semaphore, #tpu.memory_space<semaphore_mem>>) src(%201 : memref<2x1x256xf32, #tpu.memory_space<any>>) dst(%202 : memref<2x1x256xf32, #tpu.memory_space<any>>)
    } else {
    }
    %c18_i32 = arith.constant 18 : i32
    %63 = arith.cmpi sgt, %2, %c18_i32 : i32
    %64 = arith.extui %63 : i1 to i32
    %c0_i32_29 = arith.constant 0 : i32
    %65 = arith.cmpi ne, %64, %c0_i32_29 : i32
    scf.if %65 {
      %c18_i32_75 = arith.constant 18 : i32
      %c0_i32_76 = arith.constant 0 : i32
      %c0_i32_77 = arith.constant 0 : i32
      %c0_i32_78 = arith.constant 0 : i32
      %201 = tpu.memref_slice %arg2[%c0_i32_76, %c0_i32_77, %c0_i32_78] : memref<2x4x256xf32, #tpu.memory_space<any>> -> memref<2x1x256xf32, #tpu.memory_space<any>>
      %c0_i32_79 = arith.constant 0 : i32
      %c0_i32_80 = arith.constant 0 : i32
      %c0_i32_81 = arith.constant 0 : i32
      %202 = tpu.memref_slice %arg3[%c0_i32_79, %c0_i32_80, %c0_i32_81] : memref<2x3x256xf32, #tpu.memory_space<any>> -> memref<2x1x256xf32, #tpu.memory_space<any>>
      %203 = tpu.memref_slice %arg4[%c18_i32_75] : memref<64x!tpu.dma_semaphore, #tpu.memory_space<semaphore_mem>> -> memref<1x!tpu.dma_semaphore, #tpu.memory_space<semaphore_mem>>
      %204 = tpu.memref_squeeze %203 : memref<1x!tpu.dma_semaphore, #tpu.memory_space<semaphore_mem>> -> memref<!tpu.dma_semaphore, #tpu.memory_space<semaphore_mem>>
      tpu.wait_dma2 semaphore(%204 : memref<!tpu.dma_semaphore, #tpu.memory_space<semaphore_mem>>) src(%201 : memref<2x1x256xf32, #tpu.memory_space<any>>) dst(%202 : memref<2x1x256xf32, #tpu.memory_space<any>>)
    } else {
    }
    %c19_i32 = arith.constant 19 : i32
    %66 = arith.cmpi sgt, %2, %c19_i32 : i32
    %67 = arith.extui %66 : i1 to i32
    %c0_i32_30 = arith.constant 0 : i32
    %68 = arith.cmpi ne, %67, %c0_i32_30 : i32
    scf.if %68 {
      %c19_i32_75 = arith.constant 19 : i32
      %c0_i32_76 = arith.constant 0 : i32
      %c0_i32_77 = arith.constant 0 : i32
      %c0_i32_78 = arith.constant 0 : i32
      %201 = tpu.memref_slice %arg2[%c0_i32_76, %c0_i32_77, %c0_i32_78] : memref<2x4x256xf32, #tpu.memory_space<any>> -> memref<2x1x256xf32, #tpu.memory_space<any>>
      %c0_i32_79 = arith.constant 0 : i32
      %c0_i32_80 = arith.constant 0 : i32
      %c0_i32_81 = arith.constant 0 : i32
      %202 = tpu.memref_slice %arg3[%c0_i32_79, %c0_i32_80, %c0_i32_81] : memref<2x3x256xf32, #tpu.memory_space<any>> -> memref<2x1x256xf32, #tpu.memory_space<any>>
      %203 = tpu.memref_slice %arg4[%c19_i32_75] : memref<64x!tpu.dma_semaphore, #tpu.memory_space<semaphore_mem>> -> memref<1x!tpu.dma_semaphore, #tpu.memory_space<semaphore_mem>>
      %204 = tpu.memref_squeeze %203 : memref<1x!tpu.dma_semaphore, #tpu.memory_space<semaphore_mem>> -> memref<!tpu.dma_semaphore, #tpu.memory_space<semaphore_mem>>
      tpu.wait_dma2 semaphore(%204 : memref<!tpu.dma_semaphore, #tpu.memory_space<semaphore_mem>>) src(%201 : memref<2x1x256xf32, #tpu.memory_space<any>>) dst(%202 : memref<2x1x256xf32, #tpu.memory_space<any>>)
    } else {
    }
    %c20_i32 = arith.constant 20 : i32
    %69 = arith.cmpi sgt, %2, %c20_i32 : i32
    %70 = arith.extui %69 : i1 to i32
    %c0_i32_31 = arith.constant 0 : i32
    %71 = arith.cmpi ne, %70, %c0_i32_31 : i32
    scf.if %71 {
      %c20_i32_75 = arith.constant 20 : i32
      %c0_i32_76 = arith.constant 0 : i32
      %c0_i32_77 = arith.constant 0 : i32
      %c0_i32_78 = arith.constant 0 : i32
      %201 = tpu.memref_slice %arg2[%c0_i32_76, %c0_i32_77, %c0_i32_78] : memref<2x4x256xf32, #tpu.memory_space<any>> -> memref<2x1x256xf32, #tpu.memory_space<any>>
      %c0_i32_79 = arith.constant 0 : i32
      %c0_i32_80 = arith.constant 0 : i32
      %c0_i32_81 = arith.constant 0 : i32
      %202 = tpu.memref_slice %arg3[%c0_i32_79, %c0_i32_80, %c0_i32_81] : memref<2x3x256xf32, #tpu.memory_space<any>> -> memref<2x1x256xf32, #tpu.memory_space<any>>
      %203 = tpu.memref_slice %arg4[%c20_i32_75] : memref<64x!tpu.dma_semaphore, #tpu.memory_space<semaphore_mem>> -> memref<1x!tpu.dma_semaphore, #tpu.memory_space<semaphore_mem>>
      %204 = tpu.memref_squeeze %203 : memref<1x!tpu.dma_semaphore, #tpu.memory_space<semaphore_mem>> -> memref<!tpu.dma_semaphore, #tpu.memory_space<semaphore_mem>>
      tpu.wait_dma2 semaphore(%204 : memref<!tpu.dma_semaphore, #tpu.memory_space<semaphore_mem>>) src(%201 : memref<2x1x256xf32, #tpu.memory_space<any>>) dst(%202 : memref<2x1x256xf32, #tpu.memory_space<any>>)
    } else {
    }
    %c21_i32 = arith.constant 21 : i32
    %72 = arith.cmpi sgt, %2, %c21_i32 : i32
    %73 = arith.extui %72 : i1 to i32
    %c0_i32_32 = arith.constant 0 : i32
    %74 = arith.cmpi ne, %73, %c0_i32_32 : i32
    scf.if %74 {
      %c21_i32_75 = arith.constant 21 : i32
      %c0_i32_76 = arith.constant 0 : i32
      %c0_i32_77 = arith.constant 0 : i32
      %c0_i32_78 = arith.constant 0 : i32
      %201 = tpu.memref_slice %arg2[%c0_i32_76, %c0_i32_77, %c0_i32_78] : memref<2x4x256xf32, #tpu.memory_space<any>> -> memref<2x1x256xf32, #tpu.memory_space<any>>
      %c0_i32_79 = arith.constant 0 : i32
      %c0_i32_80 = arith.constant 0 : i32
      %c0_i32_81 = arith.constant 0 : i32
      %202 = tpu.memref_slice %arg3[%c0_i32_79, %c0_i32_80, %c0_i32_81] : memref<2x3x256xf32, #tpu.memory_space<any>> -> memref<2x1x256xf32, #tpu.memory_space<any>>
      %203 = tpu.memref_slice %arg4[%c21_i32_75] : memref<64x!tpu.dma_semaphore, #tpu.memory_space<semaphore_mem>> -> memref<1x!tpu.dma_semaphore, #tpu.memory_space<semaphore_mem>>
      %204 = tpu.memref_squeeze %203 : memref<1x!tpu.dma_semaphore, #tpu.memory_space<semaphore_mem>> -> memref<!tpu.dma_semaphore, #tpu.memory_space<semaphore_mem>>
      tpu.wait_dma2 semaphore(%204 : memref<!tpu.dma_semaphore, #tpu.memory_space<semaphore_mem>>) src(%201 : memref<2x1x256xf32, #tpu.memory_space<any>>) dst(%202 : memref<2x1x256xf32, #tpu.memory_space<any>>)
    } else {
    }
    %c22_i32 = arith.constant 22 : i32
    %75 = arith.cmpi sgt, %2, %c22_i32 : i32
    %76 = arith.extui %75 : i1 to i32
    %c0_i32_33 = arith.constant 0 : i32
    %77 = arith.cmpi ne, %76, %c0_i32_33 : i32
    scf.if %77 {
      %c22_i32_75 = arith.constant 22 : i32
      %c0_i32_76 = arith.constant 0 : i32
      %c0_i32_77 = arith.constant 0 : i32
      %c0_i32_78 = arith.constant 0 : i32
      %201 = tpu.memref_slice %arg2[%c0_i32_76, %c0_i32_77, %c0_i32_78] : memref<2x4x256xf32, #tpu.memory_space<any>> -> memref<2x1x256xf32, #tpu.memory_space<any>>
      %c0_i32_79 = arith.constant 0 : i32
      %c0_i32_80 = arith.constant 0 : i32
      %c0_i32_81 = arith.constant 0 : i32
      %202 = tpu.memref_slice %arg3[%c0_i32_79, %c0_i32_80, %c0_i32_81] : memref<2x3x256xf32, #tpu.memory_space<any>> -> memref<2x1x256xf32, #tpu.memory_space<any>>
      %203 = tpu.memref_slice %arg4[%c22_i32_75] : memref<64x!tpu.dma_semaphore, #tpu.memory_space<semaphore_mem>> -> memref<1x!tpu.dma_semaphore, #tpu.memory_space<semaphore_mem>>
      %204 = tpu.memref_squeeze %203 : memref<1x!tpu.dma_semaphore, #tpu.memory_space<semaphore_mem>> -> memref<!tpu.dma_semaphore, #tpu.memory_space<semaphore_mem>>
      tpu.wait_dma2 semaphore(%204 : memref<!tpu.dma_semaphore, #tpu.memory_space<semaphore_mem>>) src(%201 : memref<2x1x256xf32, #tpu.memory_space<any>>) dst(%202 : memref<2x1x256xf32, #tpu.memory_space<any>>)
    } else {
    }
    %c23_i32 = arith.constant 23 : i32
    %78 = arith.cmpi sgt, %2, %c23_i32 : i32
    %79 = arith.extui %78 : i1 to i32
    %c0_i32_34 = arith.constant 0 : i32
    %80 = arith.cmpi ne, %79, %c0_i32_34 : i32
    scf.if %80 {
      %c23_i32_75 = arith.constant 23 : i32
      %c0_i32_76 = arith.constant 0 : i32
      %c0_i32_77 = arith.constant 0 : i32
      %c0_i32_78 = arith.constant 0 : i32
      %201 = tpu.memref_slice %arg2[%c0_i32_76, %c0_i32_77, %c0_i32_78] : memref<2x4x256xf32, #tpu.memory_space<any>> -> memref<2x1x256xf32, #tpu.memory_space<any>>
      %c0_i32_79 = arith.constant 0 : i32
      %c0_i32_80 = arith.constant 0 : i32
      %c0_i32_81 = arith.constant 0 : i32
      %202 = tpu.memref_slice %arg3[%c0_i32_79, %c0_i32_80, %c0_i32_81] : memref<2x3x256xf32, #tpu.memory_space<any>> -> memref<2x1x256xf32, #tpu.memory_space<any>>
      %203 = tpu.memref_slice %arg4[%c23_i32_75] : memref<64x!tpu.dma_semaphore, #tpu.memory_space<semaphore_mem>> -> memref<1x!tpu.dma_semaphore, #tpu.memory_space<semaphore_mem>>
      %204 = tpu.memref_squeeze %203 : memref<1x!tpu.dma_semaphore, #tpu.memory_space<semaphore_mem>> -> memref<!tpu.dma_semaphore, #tpu.memory_space<semaphore_mem>>
      tpu.wait_dma2 semaphore(%204 : memref<!tpu.dma_semaphore, #tpu.memory_space<semaphore_mem>>) src(%201 : memref<2x1x256xf32, #tpu.memory_space<any>>) dst(%202 : memref<2x1x256xf32, #tpu.memory_space<any>>)
    } else {
    }
    %c24_i32 = arith.constant 24 : i32
    %81 = arith.cmpi sgt, %2, %c24_i32 : i32
    %82 = arith.extui %81 : i1 to i32
    %c0_i32_35 = arith.constant 0 : i32
    %83 = arith.cmpi ne, %82, %c0_i32_35 : i32
    scf.if %83 {
      %c24_i32_75 = arith.constant 24 : i32
      %c0_i32_76 = arith.constant 0 : i32
      %c0_i32_77 = arith.constant 0 : i32
      %c0_i32_78 = arith.constant 0 : i32
      %201 = tpu.memref_slice %arg2[%c0_i32_76, %c0_i32_77, %c0_i32_78] : memref<2x4x256xf32, #tpu.memory_space<any>> -> memref<2x1x256xf32, #tpu.memory_space<any>>
      %c0_i32_79 = arith.constant 0 : i32
      %c0_i32_80 = arith.constant 0 : i32
      %c0_i32_81 = arith.constant 0 : i32
      %202 = tpu.memref_slice %arg3[%c0_i32_79, %c0_i32_80, %c0_i32_81] : memref<2x3x256xf32, #tpu.memory_space<any>> -> memref<2x1x256xf32, #tpu.memory_space<any>>
      %203 = tpu.memref_slice %arg4[%c24_i32_75] : memref<64x!tpu.dma_semaphore, #tpu.memory_space<semaphore_mem>> -> memref<1x!tpu.dma_semaphore, #tpu.memory_space<semaphore_mem>>
      %204 = tpu.memref_squeeze %203 : memref<1x!tpu.dma_semaphore, #tpu.memory_space<semaphore_mem>> -> memref<!tpu.dma_semaphore, #tpu.memory_space<semaphore_mem>>
      tpu.wait_dma2 semaphore(%204 : memref<!tpu.dma_semaphore, #tpu.memory_space<semaphore_mem>>) src(%201 : memref<2x1x256xf32, #tpu.memory_space<any>>) dst(%202 : memref<2x1x256xf32, #tpu.memory_space<any>>)
    } else {
    }
    %c25_i32 = arith.constant 25 : i32
    %84 = arith.cmpi sgt, %2, %c25_i32 : i32
    %85 = arith.extui %84 : i1 to i32
    %c0_i32_36 = arith.constant 0 : i32
    %86 = arith.cmpi ne, %85, %c0_i32_36 : i32
    scf.if %86 {
      %c25_i32_75 = arith.constant 25 : i32
      %c0_i32_76 = arith.constant 0 : i32
      %c0_i32_77 = arith.constant 0 : i32
      %c0_i32_78 = arith.constant 0 : i32
      %201 = tpu.memref_slice %arg2[%c0_i32_76, %c0_i32_77, %c0_i32_78] : memref<2x4x256xf32, #tpu.memory_space<any>> -> memref<2x1x256xf32, #tpu.memory_space<any>>
      %c0_i32_79 = arith.constant 0 : i32
      %c0_i32_80 = arith.constant 0 : i32
      %c0_i32_81 = arith.constant 0 : i32
      %202 = tpu.memref_slice %arg3[%c0_i32_79, %c0_i32_80, %c0_i32_81] : memref<2x3x256xf32, #tpu.memory_space<any>> -> memref<2x1x256xf32, #tpu.memory_space<any>>
      %203 = tpu.memref_slice %arg4[%c25_i32_75] : memref<64x!tpu.dma_semaphore, #tpu.memory_space<semaphore_mem>> -> memref<1x!tpu.dma_semaphore, #tpu.memory_space<semaphore_mem>>
      %204 = tpu.memref_squeeze %203 : memref<1x!tpu.dma_semaphore, #tpu.memory_space<semaphore_mem>> -> memref<!tpu.dma_semaphore, #tpu.memory_space<semaphore_mem>>
      tpu.wait_dma2 semaphore(%204 : memref<!tpu.dma_semaphore, #tpu.memory_space<semaphore_mem>>) src(%201 : memref<2x1x256xf32, #tpu.memory_space<any>>) dst(%202 : memref<2x1x256xf32, #tpu.memory_space<any>>)
    } else {
    }
    %c26_i32 = arith.constant 26 : i32
    %87 = arith.cmpi sgt, %2, %c26_i32 : i32
    %88 = arith.extui %87 : i1 to i32
    %c0_i32_37 = arith.constant 0 : i32
    %89 = arith.cmpi ne, %88, %c0_i32_37 : i32
    scf.if %89 {
      %c26_i32_75 = arith.constant 26 : i32
      %c0_i32_76 = arith.constant 0 : i32
      %c0_i32_77 = arith.constant 0 : i32
      %c0_i32_78 = arith.constant 0 : i32
      %201 = tpu.memref_slice %arg2[%c0_i32_76, %c0_i32_77, %c0_i32_78] : memref<2x4x256xf32, #tpu.memory_space<any>> -> memref<2x1x256xf32, #tpu.memory_space<any>>
      %c0_i32_79 = arith.constant 0 : i32
      %c0_i32_80 = arith.constant 0 : i32
      %c0_i32_81 = arith.constant 0 : i32
      %202 = tpu.memref_slice %arg3[%c0_i32_79, %c0_i32_80, %c0_i32_81] : memref<2x3x256xf32, #tpu.memory_space<any>> -> memref<2x1x256xf32, #tpu.memory_space<any>>
      %203 = tpu.memref_slice %arg4[%c26_i32_75] : memref<64x!tpu.dma_semaphore, #tpu.memory_space<semaphore_mem>> -> memref<1x!tpu.dma_semaphore, #tpu.memory_space<semaphore_mem>>
      %204 = tpu.memref_squeeze %203 : memref<1x!tpu.dma_semaphore, #tpu.memory_space<semaphore_mem>> -> memref<!tpu.dma_semaphore, #tpu.memory_space<semaphore_mem>>
      tpu.wait_dma2 semaphore(%204 : memref<!tpu.dma_semaphore, #tpu.memory_space<semaphore_mem>>) src(%201 : memref<2x1x256xf32, #tpu.memory_space<any>>) dst(%202 : memref<2x1x256xf32, #tpu.memory_space<any>>)
    } else {
    }
    %c27_i32 = arith.constant 27 : i32
    %90 = arith.cmpi sgt, %2, %c27_i32 : i32
    %91 = arith.extui %90 : i1 to i32
    %c0_i32_38 = arith.constant 0 : i32
    %92 = arith.cmpi ne, %91, %c0_i32_38 : i32
    scf.if %92 {
      %c27_i32_75 = arith.constant 27 : i32
      %c0_i32_76 = arith.constant 0 : i32
      %c0_i32_77 = arith.constant 0 : i32
      %c0_i32_78 = arith.constant 0 : i32
      %201 = tpu.memref_slice %arg2[%c0_i32_76, %c0_i32_77, %c0_i32_78] : memref<2x4x256xf32, #tpu.memory_space<any>> -> memref<2x1x256xf32, #tpu.memory_space<any>>
      %c0_i32_79 = arith.constant 0 : i32
      %c0_i32_80 = arith.constant 0 : i32
      %c0_i32_81 = arith.constant 0 : i32
      %202 = tpu.memref_slice %arg3[%c0_i32_79, %c0_i32_80, %c0_i32_81] : memref<2x3x256xf32, #tpu.memory_space<any>> -> memref<2x1x256xf32, #tpu.memory_space<any>>
      %203 = tpu.memref_slice %arg4[%c27_i32_75] : memref<64x!tpu.dma_semaphore, #tpu.memory_space<semaphore_mem>> -> memref<1x!tpu.dma_semaphore, #tpu.memory_space<semaphore_mem>>
      %204 = tpu.memref_squeeze %203 : memref<1x!tpu.dma_semaphore, #tpu.memory_space<semaphore_mem>> -> memref<!tpu.dma_semaphore, #tpu.memory_space<semaphore_mem>>
      tpu.wait_dma2 semaphore(%204 : memref<!tpu.dma_semaphore, #tpu.memory_space<semaphore_mem>>) src(%201 : memref<2x1x256xf32, #tpu.memory_space<any>>) dst(%202 : memref<2x1x256xf32, #tpu.memory_space<any>>)
    } else {
    }
    %c28_i32 = arith.constant 28 : i32
    %93 = arith.cmpi sgt, %2, %c28_i32 : i32
    %94 = arith.extui %93 : i1 to i32
    %c0_i32_39 = arith.constant 0 : i32
    %95 = arith.cmpi ne, %94, %c0_i32_39 : i32
    scf.if %95 {
      %c28_i32_75 = arith.constant 28 : i32
      %c0_i32_76 = arith.constant 0 : i32
      %c0_i32_77 = arith.constant 0 : i32
      %c0_i32_78 = arith.constant 0 : i32
      %201 = tpu.memref_slice %arg2[%c0_i32_76, %c0_i32_77, %c0_i32_78] : memref<2x4x256xf32, #tpu.memory_space<any>> -> memref<2x1x256xf32, #tpu.memory_space<any>>
      %c0_i32_79 = arith.constant 0 : i32
      %c0_i32_80 = arith.constant 0 : i32
      %c0_i32_81 = arith.constant 0 : i32
      %202 = tpu.memref_slice %arg3[%c0_i32_79, %c0_i32_80, %c0_i32_81] : memref<2x3x256xf32, #tpu.memory_space<any>> -> memref<2x1x256xf32, #tpu.memory_space<any>>
      %203 = tpu.memref_slice %arg4[%c28_i32_75] : memref<64x!tpu.dma_semaphore, #tpu.memory_space<semaphore_mem>> -> memref<1x!tpu.dma_semaphore, #tpu.memory_space<semaphore_mem>>
      %204 = tpu.memref_squeeze %203 : memref<1x!tpu.dma_semaphore, #tpu.memory_space<semaphore_mem>> -> memref<!tpu.dma_semaphore, #tpu.memory_space<semaphore_mem>>
      tpu.wait_dma2 semaphore(%204 : memref<!tpu.dma_semaphore, #tpu.memory_space<semaphore_mem>>) src(%201 : memref<2x1x256xf32, #tpu.memory_space<any>>) dst(%202 : memref<2x1x256xf32, #tpu.memory_space<any>>)
    } else {
    }
    %c29_i32 = arith.constant 29 : i32
    %96 = arith.cmpi sgt, %2, %c29_i32 : i32
    %97 = arith.extui %96 : i1 to i32
    %c0_i32_40 = arith.constant 0 : i32
    %98 = arith.cmpi ne, %97, %c0_i32_40 : i32
    scf.if %98 {
      %c29_i32_75 = arith.constant 29 : i32
      %c0_i32_76 = arith.constant 0 : i32
      %c0_i32_77 = arith.constant 0 : i32
      %c0_i32_78 = arith.constant 0 : i32
      %201 = tpu.memref_slice %arg2[%c0_i32_76, %c0_i32_77, %c0_i32_78] : memref<2x4x256xf32, #tpu.memory_space<any>> -> memref<2x1x256xf32, #tpu.memory_space<any>>
      %c0_i32_79 = arith.constant 0 : i32
      %c0_i32_80 = arith.constant 0 : i32
      %c0_i32_81 = arith.constant 0 : i32
      %202 = tpu.memref_slice %arg3[%c0_i32_79, %c0_i32_80, %c0_i32_81] : memref<2x3x256xf32, #tpu.memory_space<any>> -> memref<2x1x256xf32, #tpu.memory_space<any>>
      %203 = tpu.memref_slice %arg4[%c29_i32_75] : memref<64x!tpu.dma_semaphore, #tpu.memory_space<semaphore_mem>> -> memref<1x!tpu.dma_semaphore, #tpu.memory_space<semaphore_mem>>
      %204 = tpu.memref_squeeze %203 : memref<1x!tpu.dma_semaphore, #tpu.memory_space<semaphore_mem>> -> memref<!tpu.dma_semaphore, #tpu.memory_space<semaphore_mem>>
      tpu.wait_dma2 semaphore(%204 : memref<!tpu.dma_semaphore, #tpu.memory_space<semaphore_mem>>) src(%201 : memref<2x1x256xf32, #tpu.memory_space<any>>) dst(%202 : memref<2x1x256xf32, #tpu.memory_space<any>>)
    } else {
    }
    %c30_i32 = arith.constant 30 : i32
    %99 = arith.cmpi sgt, %2, %c30_i32 : i32
    %100 = arith.extui %99 : i1 to i32
    %c0_i32_41 = arith.constant 0 : i32
    %101 = arith.cmpi ne, %100, %c0_i32_41 : i32
    scf.if %101 {
      %c30_i32_75 = arith.constant 30 : i32
      %c0_i32_76 = arith.constant 0 : i32
      %c0_i32_77 = arith.constant 0 : i32
      %c0_i32_78 = arith.constant 0 : i32
      %201 = tpu.memref_slice %arg2[%c0_i32_76, %c0_i32_77, %c0_i32_78] : memref<2x4x256xf32, #tpu.memory_space<any>> -> memref<2x1x256xf32, #tpu.memory_space<any>>
      %c0_i32_79 = arith.constant 0 : i32
      %c0_i32_80 = arith.constant 0 : i32
      %c0_i32_81 = arith.constant 0 : i32
      %202 = tpu.memref_slice %arg3[%c0_i32_79, %c0_i32_80, %c0_i32_81] : memref<2x3x256xf32, #tpu.memory_space<any>> -> memref<2x1x256xf32, #tpu.memory_space<any>>
      %203 = tpu.memref_slice %arg4[%c30_i32_75] : memref<64x!tpu.dma_semaphore, #tpu.memory_space<semaphore_mem>> -> memref<1x!tpu.dma_semaphore, #tpu.memory_space<semaphore_mem>>
      %204 = tpu.memref_squeeze %203 : memref<1x!tpu.dma_semaphore, #tpu.memory_space<semaphore_mem>> -> memref<!tpu.dma_semaphore, #tpu.memory_space<semaphore_mem>>
      tpu.wait_dma2 semaphore(%204 : memref<!tpu.dma_semaphore, #tpu.memory_space<semaphore_mem>>) src(%201 : memref<2x1x256xf32, #tpu.memory_space<any>>) dst(%202 : memref<2x1x256xf32, #tpu.memory_space<any>>)
    } else {
    }
    %c31_i32 = arith.constant 31 : i32
    %102 = arith.cmpi sgt, %2, %c31_i32 : i32
    %103 = arith.extui %102 : i1 to i32
    %c0_i32_42 = arith.constant 0 : i32
    %104 = arith.cmpi ne, %103, %c0_i32_42 : i32
    scf.if %104 {
      %c31_i32_75 = arith.constant 31 : i32
      %c0_i32_76 = arith.constant 0 : i32
      %c0_i32_77 = arith.constant 0 : i32
      %c0_i32_78 = arith.constant 0 : i32
      %201 = tpu.memref_slice %arg2[%c0_i32_76, %c0_i32_77, %c0_i32_78] : memref<2x4x256xf32, #tpu.memory_space<any>> -> memref<2x1x256xf32, #tpu.memory_space<any>>
      %c0_i32_79 = arith.constant 0 : i32
      %c0_i32_80 = arith.constant 0 : i32
      %c0_i32_81 = arith.constant 0 : i32
      %202 = tpu.memref_slice %arg3[%c0_i32_79, %c0_i32_80, %c0_i32_81] : memref<2x3x256xf32, #tpu.memory_space<any>> -> memref<2x1x256xf32, #tpu.memory_space<any>>
      %203 = tpu.memref_slice %arg4[%c31_i32_75] : memref<64x!tpu.dma_semaphore, #tpu.memory_space<semaphore_mem>> -> memref<1x!tpu.dma_semaphore, #tpu.memory_space<semaphore_mem>>
      %204 = tpu.memref_squeeze %203 : memref<1x!tpu.dma_semaphore, #tpu.memory_space<semaphore_mem>> -> memref<!tpu.dma_semaphore, #tpu.memory_space<semaphore_mem>>
      tpu.wait_dma2 semaphore(%204 : memref<!tpu.dma_semaphore, #tpu.memory_space<semaphore_mem>>) src(%201 : memref<2x1x256xf32, #tpu.memory_space<any>>) dst(%202 : memref<2x1x256xf32, #tpu.memory_space<any>>)
    } else {
    }
    %c32_i32 = arith.constant 32 : i32
    %105 = arith.cmpi sgt, %2, %c32_i32 : i32
    %106 = arith.extui %105 : i1 to i32
    %c0_i32_43 = arith.constant 0 : i32
    %107 = arith.cmpi ne, %106, %c0_i32_43 : i32
    scf.if %107 {
      %c32_i32_75 = arith.constant 32 : i32
      %c0_i32_76 = arith.constant 0 : i32
      %c0_i32_77 = arith.constant 0 : i32
      %c0_i32_78 = arith.constant 0 : i32
      %201 = tpu.memref_slice %arg2[%c0_i32_76, %c0_i32_77, %c0_i32_78] : memref<2x4x256xf32, #tpu.memory_space<any>> -> memref<2x1x256xf32, #tpu.memory_space<any>>
      %c0_i32_79 = arith.constant 0 : i32
      %c0_i32_80 = arith.constant 0 : i32
      %c0_i32_81 = arith.constant 0 : i32
      %202 = tpu.memref_slice %arg3[%c0_i32_79, %c0_i32_80, %c0_i32_81] : memref<2x3x256xf32, #tpu.memory_space<any>> -> memref<2x1x256xf32, #tpu.memory_space<any>>
      %203 = tpu.memref_slice %arg4[%c32_i32_75] : memref<64x!tpu.dma_semaphore, #tpu.memory_space<semaphore_mem>> -> memref<1x!tpu.dma_semaphore, #tpu.memory_space<semaphore_mem>>
      %204 = tpu.memref_squeeze %203 : memref<1x!tpu.dma_semaphore, #tpu.memory_space<semaphore_mem>> -> memref<!tpu.dma_semaphore, #tpu.memory_space<semaphore_mem>>
      tpu.wait_dma2 semaphore(%204 : memref<!tpu.dma_semaphore, #tpu.memory_space<semaphore_mem>>) src(%201 : memref<2x1x256xf32, #tpu.memory_space<any>>) dst(%202 : memref<2x1x256xf32, #tpu.memory_space<any>>)
    } else {
    }
    %c33_i32 = arith.constant 33 : i32
    %108 = arith.cmpi sgt, %2, %c33_i32 : i32
    %109 = arith.extui %108 : i1 to i32
    %c0_i32_44 = arith.constant 0 : i32
    %110 = arith.cmpi ne, %109, %c0_i32_44 : i32
    scf.if %110 {
      %c33_i32_75 = arith.constant 33 : i32
      %c0_i32_76 = arith.constant 0 : i32
      %c0_i32_77 = arith.constant 0 : i32
      %c0_i32_78 = arith.constant 0 : i32
      %201 = tpu.memref_slice %arg2[%c0_i32_76, %c0_i32_77, %c0_i32_78] : memref<2x4x256xf32, #tpu.memory_space<any>> -> memref<2x1x256xf32, #tpu.memory_space<any>>
      %c0_i32_79 = arith.constant 0 : i32
      %c0_i32_80 = arith.constant 0 : i32
      %c0_i32_81 = arith.constant 0 : i32
      %202 = tpu.memref_slice %arg3[%c0_i32_79, %c0_i32_80, %c0_i32_81] : memref<2x3x256xf32, #tpu.memory_space<any>> -> memref<2x1x256xf32, #tpu.memory_space<any>>
      %203 = tpu.memref_slice %arg4[%c33_i32_75] : memref<64x!tpu.dma_semaphore, #tpu.memory_space<semaphore_mem>> -> memref<1x!tpu.dma_semaphore, #tpu.memory_space<semaphore_mem>>
      %204 = tpu.memref_squeeze %203 : memref<1x!tpu.dma_semaphore, #tpu.memory_space<semaphore_mem>> -> memref<!tpu.dma_semaphore, #tpu.memory_space<semaphore_mem>>
      tpu.wait_dma2 semaphore(%204 : memref<!tpu.dma_semaphore, #tpu.memory_space<semaphore_mem>>) src(%201 : memref<2x1x256xf32, #tpu.memory_space<any>>) dst(%202 : memref<2x1x256xf32, #tpu.memory_space<any>>)
    } else {
    }
    %c34_i32 = arith.constant 34 : i32
    %111 = arith.cmpi sgt, %2, %c34_i32 : i32
    %112 = arith.extui %111 : i1 to i32
    %c0_i32_45 = arith.constant 0 : i32
    %113 = arith.cmpi ne, %112, %c0_i32_45 : i32
    scf.if %113 {
      %c34_i32_75 = arith.constant 34 : i32
      %c0_i32_76 = arith.constant 0 : i32
      %c0_i32_77 = arith.constant 0 : i32
      %c0_i32_78 = arith.constant 0 : i32
      %201 = tpu.memref_slice %arg2[%c0_i32_76, %c0_i32_77, %c0_i32_78] : memref<2x4x256xf32, #tpu.memory_space<any>> -> memref<2x1x256xf32, #tpu.memory_space<any>>
      %c0_i32_79 = arith.constant 0 : i32
      %c0_i32_80 = arith.constant 0 : i32
      %c0_i32_81 = arith.constant 0 : i32
      %202 = tpu.memref_slice %arg3[%c0_i32_79, %c0_i32_80, %c0_i32_81] : memref<2x3x256xf32, #tpu.memory_space<any>> -> memref<2x1x256xf32, #tpu.memory_space<any>>
      %203 = tpu.memref_slice %arg4[%c34_i32_75] : memref<64x!tpu.dma_semaphore, #tpu.memory_space<semaphore_mem>> -> memref<1x!tpu.dma_semaphore, #tpu.memory_space<semaphore_mem>>
      %204 = tpu.memref_squeeze %203 : memref<1x!tpu.dma_semaphore, #tpu.memory_space<semaphore_mem>> -> memref<!tpu.dma_semaphore, #tpu.memory_space<semaphore_mem>>
      tpu.wait_dma2 semaphore(%204 : memref<!tpu.dma_semaphore, #tpu.memory_space<semaphore_mem>>) src(%201 : memref<2x1x256xf32, #tpu.memory_space<any>>) dst(%202 : memref<2x1x256xf32, #tpu.memory_space<any>>)
    } else {
    }
    %c35_i32 = arith.constant 35 : i32
    %114 = arith.cmpi sgt, %2, %c35_i32 : i32
    %115 = arith.extui %114 : i1 to i32
    %c0_i32_46 = arith.constant 0 : i32
    %116 = arith.cmpi ne, %115, %c0_i32_46 : i32
    scf.if %116 {
      %c35_i32_75 = arith.constant 35 : i32
      %c0_i32_76 = arith.constant 0 : i32
      %c0_i32_77 = arith.constant 0 : i32
      %c0_i32_78 = arith.constant 0 : i32
      %201 = tpu.memref_slice %arg2[%c0_i32_76, %c0_i32_77, %c0_i32_78] : memref<2x4x256xf32, #tpu.memory_space<any>> -> memref<2x1x256xf32, #tpu.memory_space<any>>
      %c0_i32_79 = arith.constant 0 : i32
      %c0_i32_80 = arith.constant 0 : i32
      %c0_i32_81 = arith.constant 0 : i32
      %202 = tpu.memref_slice %arg3[%c0_i32_79, %c0_i32_80, %c0_i32_81] : memref<2x3x256xf32, #tpu.memory_space<any>> -> memref<2x1x256xf32, #tpu.memory_space<any>>
      %203 = tpu.memref_slice %arg4[%c35_i32_75] : memref<64x!tpu.dma_semaphore, #tpu.memory_space<semaphore_mem>> -> memref<1x!tpu.dma_semaphore, #tpu.memory_space<semaphore_mem>>
      %204 = tpu.memref_squeeze %203 : memref<1x!tpu.dma_semaphore, #tpu.memory_space<semaphore_mem>> -> memref<!tpu.dma_semaphore, #tpu.memory_space<semaphore_mem>>
      tpu.wait_dma2 semaphore(%204 : memref<!tpu.dma_semaphore, #tpu.memory_space<semaphore_mem>>) src(%201 : memref<2x1x256xf32, #tpu.memory_space<any>>) dst(%202 : memref<2x1x256xf32, #tpu.memory_space<any>>)
    } else {
    }
    %c36_i32 = arith.constant 36 : i32
    %117 = arith.cmpi sgt, %2, %c36_i32 : i32
    %118 = arith.extui %117 : i1 to i32
    %c0_i32_47 = arith.constant 0 : i32
    %119 = arith.cmpi ne, %118, %c0_i32_47 : i32
    scf.if %119 {
      %c36_i32_75 = arith.constant 36 : i32
      %c0_i32_76 = arith.constant 0 : i32
      %c0_i32_77 = arith.constant 0 : i32
      %c0_i32_78 = arith.constant 0 : i32
      %201 = tpu.memref_slice %arg2[%c0_i32_76, %c0_i32_77, %c0_i32_78] : memref<2x4x256xf32, #tpu.memory_space<any>> -> memref<2x1x256xf32, #tpu.memory_space<any>>
      %c0_i32_79 = arith.constant 0 : i32
      %c0_i32_80 = arith.constant 0 : i32
      %c0_i32_81 = arith.constant 0 : i32
      %202 = tpu.memref_slice %arg3[%c0_i32_79, %c0_i32_80, %c0_i32_81] : memref<2x3x256xf32, #tpu.memory_space<any>> -> memref<2x1x256xf32, #tpu.memory_space<any>>
      %203 = tpu.memref_slice %arg4[%c36_i32_75] : memref<64x!tpu.dma_semaphore, #tpu.memory_space<semaphore_mem>> -> memref<1x!tpu.dma_semaphore, #tpu.memory_space<semaphore_mem>>
      %204 = tpu.memref_squeeze %203 : memref<1x!tpu.dma_semaphore, #tpu.memory_space<semaphore_mem>> -> memref<!tpu.dma_semaphore, #tpu.memory_space<semaphore_mem>>
      tpu.wait_dma2 semaphore(%204 : memref<!tpu.dma_semaphore, #tpu.memory_space<semaphore_mem>>) src(%201 : memref<2x1x256xf32, #tpu.memory_space<any>>) dst(%202 : memref<2x1x256xf32, #tpu.memory_space<any>>)
    } else {
    }
    %c37_i32 = arith.constant 37 : i32
    %120 = arith.cmpi sgt, %2, %c37_i32 : i32
    %121 = arith.extui %120 : i1 to i32
    %c0_i32_48 = arith.constant 0 : i32
    %122 = arith.cmpi ne, %121, %c0_i32_48 : i32
    scf.if %122 {
      %c37_i32_75 = arith.constant 37 : i32
      %c0_i32_76 = arith.constant 0 : i32
      %c0_i32_77 = arith.constant 0 : i32
      %c0_i32_78 = arith.constant 0 : i32
      %201 = tpu.memref_slice %arg2[%c0_i32_76, %c0_i32_77, %c0_i32_78] : memref<2x4x256xf32, #tpu.memory_space<any>> -> memref<2x1x256xf32, #tpu.memory_space<any>>
      %c0_i32_79 = arith.constant 0 : i32
      %c0_i32_80 = arith.constant 0 : i32
      %c0_i32_81 = arith.constant 0 : i32
      %202 = tpu.memref_slice %arg3[%c0_i32_79, %c0_i32_80, %c0_i32_81] : memref<2x3x256xf32, #tpu.memory_space<any>> -> memref<2x1x256xf32, #tpu.memory_space<any>>
      %203 = tpu.memref_slice %arg4[%c37_i32_75] : memref<64x!tpu.dma_semaphore, #tpu.memory_space<semaphore_mem>> -> memref<1x!tpu.dma_semaphore, #tpu.memory_space<semaphore_mem>>
      %204 = tpu.memref_squeeze %203 : memref<1x!tpu.dma_semaphore, #tpu.memory_space<semaphore_mem>> -> memref<!tpu.dma_semaphore, #tpu.memory_space<semaphore_mem>>
      tpu.wait_dma2 semaphore(%204 : memref<!tpu.dma_semaphore, #tpu.memory_space<semaphore_mem>>) src(%201 : memref<2x1x256xf32, #tpu.memory_space<any>>) dst(%202 : memref<2x1x256xf32, #tpu.memory_space<any>>)
    } else {
    }
    %c38_i32 = arith.constant 38 : i32
    %123 = arith.cmpi sgt, %2, %c38_i32 : i32
    %124 = arith.extui %123 : i1 to i32
    %c0_i32_49 = arith.constant 0 : i32
    %125 = arith.cmpi ne, %124, %c0_i32_49 : i32
    scf.if %125 {
      %c38_i32_75 = arith.constant 38 : i32
      %c0_i32_76 = arith.constant 0 : i32
      %c0_i32_77 = arith.constant 0 : i32
      %c0_i32_78 = arith.constant 0 : i32
      %201 = tpu.memref_slice %arg2[%c0_i32_76, %c0_i32_77, %c0_i32_78] : memref<2x4x256xf32, #tpu.memory_space<any>> -> memref<2x1x256xf32, #tpu.memory_space<any>>
      %c0_i32_79 = arith.constant 0 : i32
      %c0_i32_80 = arith.constant 0 : i32
      %c0_i32_81 = arith.constant 0 : i32
      %202 = tpu.memref_slice %arg3[%c0_i32_79, %c0_i32_80, %c0_i32_81] : memref<2x3x256xf32, #tpu.memory_space<any>> -> memref<2x1x256xf32, #tpu.memory_space<any>>
      %203 = tpu.memref_slice %arg4[%c38_i32_75] : memref<64x!tpu.dma_semaphore, #tpu.memory_space<semaphore_mem>> -> memref<1x!tpu.dma_semaphore, #tpu.memory_space<semaphore_mem>>
      %204 = tpu.memref_squeeze %203 : memref<1x!tpu.dma_semaphore, #tpu.memory_space<semaphore_mem>> -> memref<!tpu.dma_semaphore, #tpu.memory_space<semaphore_mem>>
      tpu.wait_dma2 semaphore(%204 : memref<!tpu.dma_semaphore, #tpu.memory_space<semaphore_mem>>) src(%201 : memref<2x1x256xf32, #tpu.memory_space<any>>) dst(%202 : memref<2x1x256xf32, #tpu.memory_space<any>>)
    } else {
    }
    %c39_i32 = arith.constant 39 : i32
    %126 = arith.cmpi sgt, %2, %c39_i32 : i32
    %127 = arith.extui %126 : i1 to i32
    %c0_i32_50 = arith.constant 0 : i32
    %128 = arith.cmpi ne, %127, %c0_i32_50 : i32
    scf.if %128 {
      %c39_i32_75 = arith.constant 39 : i32
      %c0_i32_76 = arith.constant 0 : i32
      %c0_i32_77 = arith.constant 0 : i32
      %c0_i32_78 = arith.constant 0 : i32
      %201 = tpu.memref_slice %arg2[%c0_i32_76, %c0_i32_77, %c0_i32_78] : memref<2x4x256xf32, #tpu.memory_space<any>> -> memref<2x1x256xf32, #tpu.memory_space<any>>
      %c0_i32_79 = arith.constant 0 : i32
      %c0_i32_80 = arith.constant 0 : i32
      %c0_i32_81 = arith.constant 0 : i32
      %202 = tpu.memref_slice %arg3[%c0_i32_79, %c0_i32_80, %c0_i32_81] : memref<2x3x256xf32, #tpu.memory_space<any>> -> memref<2x1x256xf32, #tpu.memory_space<any>>
      %203 = tpu.memref_slice %arg4[%c39_i32_75] : memref<64x!tpu.dma_semaphore, #tpu.memory_space<semaphore_mem>> -> memref<1x!tpu.dma_semaphore, #tpu.memory_space<semaphore_mem>>
      %204 = tpu.memref_squeeze %203 : memref<1x!tpu.dma_semaphore, #tpu.memory_space<semaphore_mem>> -> memref<!tpu.dma_semaphore, #tpu.memory_space<semaphore_mem>>
      tpu.wait_dma2 semaphore(%204 : memref<!tpu.dma_semaphore, #tpu.memory_space<semaphore_mem>>) src(%201 : memref<2x1x256xf32, #tpu.memory_space<any>>) dst(%202 : memref<2x1x256xf32, #tpu.memory_space<any>>)
    } else {
    }
    %c40_i32 = arith.constant 40 : i32
    %129 = arith.cmpi sgt, %2, %c40_i32 : i32
    %130 = arith.extui %129 : i1 to i32
    %c0_i32_51 = arith.constant 0 : i32
    %131 = arith.cmpi ne, %130, %c0_i32_51 : i32
    scf.if %131 {
      %c40_i32_75 = arith.constant 40 : i32
      %c0_i32_76 = arith.constant 0 : i32
      %c0_i32_77 = arith.constant 0 : i32
      %c0_i32_78 = arith.constant 0 : i32
      %201 = tpu.memref_slice %arg2[%c0_i32_76, %c0_i32_77, %c0_i32_78] : memref<2x4x256xf32, #tpu.memory_space<any>> -> memref<2x1x256xf32, #tpu.memory_space<any>>
      %c0_i32_79 = arith.constant 0 : i32
      %c0_i32_80 = arith.constant 0 : i32
      %c0_i32_81 = arith.constant 0 : i32
      %202 = tpu.memref_slice %arg3[%c0_i32_79, %c0_i32_80, %c0_i32_81] : memref<2x3x256xf32, #tpu.memory_space<any>> -> memref<2x1x256xf32, #tpu.memory_space<any>>
      %203 = tpu.memref_slice %arg4[%c40_i32_75] : memref<64x!tpu.dma_semaphore, #tpu.memory_space<semaphore_mem>> -> memref<1x!tpu.dma_semaphore, #tpu.memory_space<semaphore_mem>>
      %204 = tpu.memref_squeeze %203 : memref<1x!tpu.dma_semaphore, #tpu.memory_space<semaphore_mem>> -> memref<!tpu.dma_semaphore, #tpu.memory_space<semaphore_mem>>
      tpu.wait_dma2 semaphore(%204 : memref<!tpu.dma_semaphore, #tpu.memory_space<semaphore_mem>>) src(%201 : memref<2x1x256xf32, #tpu.memory_space<any>>) dst(%202 : memref<2x1x256xf32, #tpu.memory_space<any>>)
    } else {
    }
    %c41_i32 = arith.constant 41 : i32
    %132 = arith.cmpi sgt, %2, %c41_i32 : i32
    %133 = arith.extui %132 : i1 to i32
    %c0_i32_52 = arith.constant 0 : i32
    %134 = arith.cmpi ne, %133, %c0_i32_52 : i32
    scf.if %134 {
      %c41_i32_75 = arith.constant 41 : i32
      %c0_i32_76 = arith.constant 0 : i32
      %c0_i32_77 = arith.constant 0 : i32
      %c0_i32_78 = arith.constant 0 : i32
      %201 = tpu.memref_slice %arg2[%c0_i32_76, %c0_i32_77, %c0_i32_78] : memref<2x4x256xf32, #tpu.memory_space<any>> -> memref<2x1x256xf32, #tpu.memory_space<any>>
      %c0_i32_79 = arith.constant 0 : i32
      %c0_i32_80 = arith.constant 0 : i32
      %c0_i32_81 = arith.constant 0 : i32
      %202 = tpu.memref_slice %arg3[%c0_i32_79, %c0_i32_80, %c0_i32_81] : memref<2x3x256xf32, #tpu.memory_space<any>> -> memref<2x1x256xf32, #tpu.memory_space<any>>
      %203 = tpu.memref_slice %arg4[%c41_i32_75] : memref<64x!tpu.dma_semaphore, #tpu.memory_space<semaphore_mem>> -> memref<1x!tpu.dma_semaphore, #tpu.memory_space<semaphore_mem>>
      %204 = tpu.memref_squeeze %203 : memref<1x!tpu.dma_semaphore, #tpu.memory_space<semaphore_mem>> -> memref<!tpu.dma_semaphore, #tpu.memory_space<semaphore_mem>>
      tpu.wait_dma2 semaphore(%204 : memref<!tpu.dma_semaphore, #tpu.memory_space<semaphore_mem>>) src(%201 : memref<2x1x256xf32, #tpu.memory_space<any>>) dst(%202 : memref<2x1x256xf32, #tpu.memory_space<any>>)
    } else {
    }
    %c42_i32 = arith.constant 42 : i32
    %135 = arith.cmpi sgt, %2, %c42_i32 : i32
    %136 = arith.extui %135 : i1 to i32
    %c0_i32_53 = arith.constant 0 : i32
    %137 = arith.cmpi ne, %136, %c0_i32_53 : i32
    scf.if %137 {
      %c42_i32_75 = arith.constant 42 : i32
      %c0_i32_76 = arith.constant 0 : i32
      %c0_i32_77 = arith.constant 0 : i32
      %c0_i32_78 = arith.constant 0 : i32
      %201 = tpu.memref_slice %arg2[%c0_i32_76, %c0_i32_77, %c0_i32_78] : memref<2x4x256xf32, #tpu.memory_space<any>> -> memref<2x1x256xf32, #tpu.memory_space<any>>
      %c0_i32_79 = arith.constant 0 : i32
      %c0_i32_80 = arith.constant 0 : i32
      %c0_i32_81 = arith.constant 0 : i32
      %202 = tpu.memref_slice %arg3[%c0_i32_79, %c0_i32_80, %c0_i32_81] : memref<2x3x256xf32, #tpu.memory_space<any>> -> memref<2x1x256xf32, #tpu.memory_space<any>>
      %203 = tpu.memref_slice %arg4[%c42_i32_75] : memref<64x!tpu.dma_semaphore, #tpu.memory_space<semaphore_mem>> -> memref<1x!tpu.dma_semaphore, #tpu.memory_space<semaphore_mem>>
      %204 = tpu.memref_squeeze %203 : memref<1x!tpu.dma_semaphore, #tpu.memory_space<semaphore_mem>> -> memref<!tpu.dma_semaphore, #tpu.memory_space<semaphore_mem>>
      tpu.wait_dma2 semaphore(%204 : memref<!tpu.dma_semaphore, #tpu.memory_space<semaphore_mem>>) src(%201 : memref<2x1x256xf32, #tpu.memory_space<any>>) dst(%202 : memref<2x1x256xf32, #tpu.memory_space<any>>)
    } else {
    }
    %c43_i32 = arith.constant 43 : i32
    %138 = arith.cmpi sgt, %2, %c43_i32 : i32
    %139 = arith.extui %138 : i1 to i32
    %c0_i32_54 = arith.constant 0 : i32
    %140 = arith.cmpi ne, %139, %c0_i32_54 : i32
    scf.if %140 {
      %c43_i32_75 = arith.constant 43 : i32
      %c0_i32_76 = arith.constant 0 : i32
      %c0_i32_77 = arith.constant 0 : i32
      %c0_i32_78 = arith.constant 0 : i32
      %201 = tpu.memref_slice %arg2[%c0_i32_76, %c0_i32_77, %c0_i32_78] : memref<2x4x256xf32, #tpu.memory_space<any>> -> memref<2x1x256xf32, #tpu.memory_space<any>>
      %c0_i32_79 = arith.constant 0 : i32
      %c0_i32_80 = arith.constant 0 : i32
      %c0_i32_81 = arith.constant 0 : i32
      %202 = tpu.memref_slice %arg3[%c0_i32_79, %c0_i32_80, %c0_i32_81] : memref<2x3x256xf32, #tpu.memory_space<any>> -> memref<2x1x256xf32, #tpu.memory_space<any>>
      %203 = tpu.memref_slice %arg4[%c43_i32_75] : memref<64x!tpu.dma_semaphore, #tpu.memory_space<semaphore_mem>> -> memref<1x!tpu.dma_semaphore, #tpu.memory_space<semaphore_mem>>
      %204 = tpu.memref_squeeze %203 : memref<1x!tpu.dma_semaphore, #tpu.memory_space<semaphore_mem>> -> memref<!tpu.dma_semaphore, #tpu.memory_space<semaphore_mem>>
      tpu.wait_dma2 semaphore(%204 : memref<!tpu.dma_semaphore, #tpu.memory_space<semaphore_mem>>) src(%201 : memref<2x1x256xf32, #tpu.memory_space<any>>) dst(%202 : memref<2x1x256xf32, #tpu.memory_space<any>>)
    } else {
    }
    %c44_i32 = arith.constant 44 : i32
    %141 = arith.cmpi sgt, %2, %c44_i32 : i32
    %142 = arith.extui %141 : i1 to i32
    %c0_i32_55 = arith.constant 0 : i32
    %143 = arith.cmpi ne, %142, %c0_i32_55 : i32
    scf.if %143 {
      %c44_i32_75 = arith.constant 44 : i32
      %c0_i32_76 = arith.constant 0 : i32
      %c0_i32_77 = arith.constant 0 : i32
      %c0_i32_78 = arith.constant 0 : i32
      %201 = tpu.memref_slice %arg2[%c0_i32_76, %c0_i32_77, %c0_i32_78] : memref<2x4x256xf32, #tpu.memory_space<any>> -> memref<2x1x256xf32, #tpu.memory_space<any>>
      %c0_i32_79 = arith.constant 0 : i32
      %c0_i32_80 = arith.constant 0 : i32
      %c0_i32_81 = arith.constant 0 : i32
      %202 = tpu.memref_slice %arg3[%c0_i32_79, %c0_i32_80, %c0_i32_81] : memref<2x3x256xf32, #tpu.memory_space<any>> -> memref<2x1x256xf32, #tpu.memory_space<any>>
      %203 = tpu.memref_slice %arg4[%c44_i32_75] : memref<64x!tpu.dma_semaphore, #tpu.memory_space<semaphore_mem>> -> memref<1x!tpu.dma_semaphore, #tpu.memory_space<semaphore_mem>>
      %204 = tpu.memref_squeeze %203 : memref<1x!tpu.dma_semaphore, #tpu.memory_space<semaphore_mem>> -> memref<!tpu.dma_semaphore, #tpu.memory_space<semaphore_mem>>
      tpu.wait_dma2 semaphore(%204 : memref<!tpu.dma_semaphore, #tpu.memory_space<semaphore_mem>>) src(%201 : memref<2x1x256xf32, #tpu.memory_space<any>>) dst(%202 : memref<2x1x256xf32, #tpu.memory_space<any>>)
    } else {
    }
    %c45_i32 = arith.constant 45 : i32
    %144 = arith.cmpi sgt, %2, %c45_i32 : i32
    %145 = arith.extui %144 : i1 to i32
    %c0_i32_56 = arith.constant 0 : i32
    %146 = arith.cmpi ne, %145, %c0_i32_56 : i32
    scf.if %146 {
      %c45_i32_75 = arith.constant 45 : i32
      %c0_i32_76 = arith.constant 0 : i32
      %c0_i32_77 = arith.constant 0 : i32
      %c0_i32_78 = arith.constant 0 : i32
      %201 = tpu.memref_slice %arg2[%c0_i32_76, %c0_i32_77, %c0_i32_78] : memref<2x4x256xf32, #tpu.memory_space<any>> -> memref<2x1x256xf32, #tpu.memory_space<any>>
      %c0_i32_79 = arith.constant 0 : i32
      %c0_i32_80 = arith.constant 0 : i32
      %c0_i32_81 = arith.constant 0 : i32
      %202 = tpu.memref_slice %arg3[%c0_i32_79, %c0_i32_80, %c0_i32_81] : memref<2x3x256xf32, #tpu.memory_space<any>> -> memref<2x1x256xf32, #tpu.memory_space<any>>
      %203 = tpu.memref_slice %arg4[%c45_i32_75] : memref<64x!tpu.dma_semaphore, #tpu.memory_space<semaphore_mem>> -> memref<1x!tpu.dma_semaphore, #tpu.memory_space<semaphore_mem>>
      %204 = tpu.memref_squeeze %203 : memref<1x!tpu.dma_semaphore, #tpu.memory_space<semaphore_mem>> -> memref<!tpu.dma_semaphore, #tpu.memory_space<semaphore_mem>>
      tpu.wait_dma2 semaphore(%204 : memref<!tpu.dma_semaphore, #tpu.memory_space<semaphore_mem>>) src(%201 : memref<2x1x256xf32, #tpu.memory_space<any>>) dst(%202 : memref<2x1x256xf32, #tpu.memory_space<any>>)
    } else {
    }
    %c46_i32 = arith.constant 46 : i32
    %147 = arith.cmpi sgt, %2, %c46_i32 : i32
    %148 = arith.extui %147 : i1 to i32
    %c0_i32_57 = arith.constant 0 : i32
    %149 = arith.cmpi ne, %148, %c0_i32_57 : i32
    scf.if %149 {
      %c46_i32_75 = arith.constant 46 : i32
      %c0_i32_76 = arith.constant 0 : i32
      %c0_i32_77 = arith.constant 0 : i32
      %c0_i32_78 = arith.constant 0 : i32
      %201 = tpu.memref_slice %arg2[%c0_i32_76, %c0_i32_77, %c0_i32_78] : memref<2x4x256xf32, #tpu.memory_space<any>> -> memref<2x1x256xf32, #tpu.memory_space<any>>
      %c0_i32_79 = arith.constant 0 : i32
      %c0_i32_80 = arith.constant 0 : i32
      %c0_i32_81 = arith.constant 0 : i32
      %202 = tpu.memref_slice %arg3[%c0_i32_79, %c0_i32_80, %c0_i32_81] : memref<2x3x256xf32, #tpu.memory_space<any>> -> memref<2x1x256xf32, #tpu.memory_space<any>>
      %203 = tpu.memref_slice %arg4[%c46_i32_75] : memref<64x!tpu.dma_semaphore, #tpu.memory_space<semaphore_mem>> -> memref<1x!tpu.dma_semaphore, #tpu.memory_space<semaphore_mem>>
      %204 = tpu.memref_squeeze %203 : memref<1x!tpu.dma_semaphore, #tpu.memory_space<semaphore_mem>> -> memref<!tpu.dma_semaphore, #tpu.memory_space<semaphore_mem>>
      tpu.wait_dma2 semaphore(%204 : memref<!tpu.dma_semaphore, #tpu.memory_space<semaphore_mem>>) src(%201 : memref<2x1x256xf32, #tpu.memory_space<any>>) dst(%202 : memref<2x1x256xf32, #tpu.memory_space<any>>)
    } else {
    }
    %c47_i32 = arith.constant 47 : i32
    %150 = arith.cmpi sgt, %2, %c47_i32 : i32
    %151 = arith.extui %150 : i1 to i32
    %c0_i32_58 = arith.constant 0 : i32
    %152 = arith.cmpi ne, %151, %c0_i32_58 : i32
    scf.if %152 {
      %c47_i32_75 = arith.constant 47 : i32
      %c0_i32_76 = arith.constant 0 : i32
      %c0_i32_77 = arith.constant 0 : i32
      %c0_i32_78 = arith.constant 0 : i32
      %201 = tpu.memref_slice %arg2[%c0_i32_76, %c0_i32_77, %c0_i32_78] : memref<2x4x256xf32, #tpu.memory_space<any>> -> memref<2x1x256xf32, #tpu.memory_space<any>>
      %c0_i32_79 = arith.constant 0 : i32
      %c0_i32_80 = arith.constant 0 : i32
      %c0_i32_81 = arith.constant 0 : i32
      %202 = tpu.memref_slice %arg3[%c0_i32_79, %c0_i32_80, %c0_i32_81] : memref<2x3x256xf32, #tpu.memory_space<any>> -> memref<2x1x256xf32, #tpu.memory_space<any>>
      %203 = tpu.memref_slice %arg4[%c47_i32_75] : memref<64x!tpu.dma_semaphore, #tpu.memory_space<semaphore_mem>> -> memref<1x!tpu.dma_semaphore, #tpu.memory_space<semaphore_mem>>
      %204 = tpu.memref_squeeze %203 : memref<1x!tpu.dma_semaphore, #tpu.memory_space<semaphore_mem>> -> memref<!tpu.dma_semaphore, #tpu.memory_space<semaphore_mem>>
      tpu.wait_dma2 semaphore(%204 : memref<!tpu.dma_semaphore, #tpu.memory_space<semaphore_mem>>) src(%201 : memref<2x1x256xf32, #tpu.memory_space<any>>) dst(%202 : memref<2x1x256xf32, #tpu.memory_space<any>>)
    } else {
    }
    %c48_i32 = arith.constant 48 : i32
    %153 = arith.cmpi sgt, %2, %c48_i32 : i32
    %154 = arith.extui %153 : i1 to i32
    %c0_i32_59 = arith.constant 0 : i32
    %155 = arith.cmpi ne, %154, %c0_i32_59 : i32
    scf.if %155 {
      %c48_i32_75 = arith.constant 48 : i32
      %c0_i32_76 = arith.constant 0 : i32
      %c0_i32_77 = arith.constant 0 : i32
      %c0_i32_78 = arith.constant 0 : i32
      %201 = tpu.memref_slice %arg2[%c0_i32_76, %c0_i32_77, %c0_i32_78] : memref<2x4x256xf32, #tpu.memory_space<any>> -> memref<2x1x256xf32, #tpu.memory_space<any>>
      %c0_i32_79 = arith.constant 0 : i32
      %c0_i32_80 = arith.constant 0 : i32
      %c0_i32_81 = arith.constant 0 : i32
      %202 = tpu.memref_slice %arg3[%c0_i32_79, %c0_i32_80, %c0_i32_81] : memref<2x3x256xf32, #tpu.memory_space<any>> -> memref<2x1x256xf32, #tpu.memory_space<any>>
      %203 = tpu.memref_slice %arg4[%c48_i32_75] : memref<64x!tpu.dma_semaphore, #tpu.memory_space<semaphore_mem>> -> memref<1x!tpu.dma_semaphore, #tpu.memory_space<semaphore_mem>>
      %204 = tpu.memref_squeeze %203 : memref<1x!tpu.dma_semaphore, #tpu.memory_space<semaphore_mem>> -> memref<!tpu.dma_semaphore, #tpu.memory_space<semaphore_mem>>
      tpu.wait_dma2 semaphore(%204 : memref<!tpu.dma_semaphore, #tpu.memory_space<semaphore_mem>>) src(%201 : memref<2x1x256xf32, #tpu.memory_space<any>>) dst(%202 : memref<2x1x256xf32, #tpu.memory_space<any>>)
    } else {
    }
    %c49_i32 = arith.constant 49 : i32
    %156 = arith.cmpi sgt, %2, %c49_i32 : i32
    %157 = arith.extui %156 : i1 to i32
    %c0_i32_60 = arith.constant 0 : i32
    %158 = arith.cmpi ne, %157, %c0_i32_60 : i32
    scf.if %158 {
      %c49_i32_75 = arith.constant 49 : i32
      %c0_i32_76 = arith.constant 0 : i32
      %c0_i32_77 = arith.constant 0 : i32
      %c0_i32_78 = arith.constant 0 : i32
      %201 = tpu.memref_slice %arg2[%c0_i32_76, %c0_i32_77, %c0_i32_78] : memref<2x4x256xf32, #tpu.memory_space<any>> -> memref<2x1x256xf32, #tpu.memory_space<any>>
      %c0_i32_79 = arith.constant 0 : i32
      %c0_i32_80 = arith.constant 0 : i32
      %c0_i32_81 = arith.constant 0 : i32
      %202 = tpu.memref_slice %arg3[%c0_i32_79, %c0_i32_80, %c0_i32_81] : memref<2x3x256xf32, #tpu.memory_space<any>> -> memref<2x1x256xf32, #tpu.memory_space<any>>
      %203 = tpu.memref_slice %arg4[%c49_i32_75] : memref<64x!tpu.dma_semaphore, #tpu.memory_space<semaphore_mem>> -> memref<1x!tpu.dma_semaphore, #tpu.memory_space<semaphore_mem>>
      %204 = tpu.memref_squeeze %203 : memref<1x!tpu.dma_semaphore, #tpu.memory_space<semaphore_mem>> -> memref<!tpu.dma_semaphore, #tpu.memory_space<semaphore_mem>>
      tpu.wait_dma2 semaphore(%204 : memref<!tpu.dma_semaphore, #tpu.memory_space<semaphore_mem>>) src(%201 : memref<2x1x256xf32, #tpu.memory_space<any>>) dst(%202 : memref<2x1x256xf32, #tpu.memory_space<any>>)
    } else {
    }
    %c50_i32 = arith.constant 50 : i32
    %159 = arith.cmpi sgt, %2, %c50_i32 : i32
    %160 = arith.extui %159 : i1 to i32
    %c0_i32_61 = arith.constant 0 : i32
    %161 = arith.cmpi ne, %160, %c0_i32_61 : i32
    scf.if %161 {
      %c50_i32_75 = arith.constant 50 : i32
      %c0_i32_76 = arith.constant 0 : i32
      %c0_i32_77 = arith.constant 0 : i32
      %c0_i32_78 = arith.constant 0 : i32
      %201 = tpu.memref_slice %arg2[%c0_i32_76, %c0_i32_77, %c0_i32_78] : memref<2x4x256xf32, #tpu.memory_space<any>> -> memref<2x1x256xf32, #tpu.memory_space<any>>
      %c0_i32_79 = arith.constant 0 : i32
      %c0_i32_80 = arith.constant 0 : i32
      %c0_i32_81 = arith.constant 0 : i32
      %202 = tpu.memref_slice %arg3[%c0_i32_79, %c0_i32_80, %c0_i32_81] : memref<2x3x256xf32, #tpu.memory_space<any>> -> memref<2x1x256xf32, #tpu.memory_space<any>>
      %203 = tpu.memref_slice %arg4[%c50_i32_75] : memref<64x!tpu.dma_semaphore, #tpu.memory_space<semaphore_mem>> -> memref<1x!tpu.dma_semaphore, #tpu.memory_space<semaphore_mem>>
      %204 = tpu.memref_squeeze %203 : memref<1x!tpu.dma_semaphore, #tpu.memory_space<semaphore_mem>> -> memref<!tpu.dma_semaphore, #tpu.memory_space<semaphore_mem>>
      tpu.wait_dma2 semaphore(%204 : memref<!tpu.dma_semaphore, #tpu.memory_space<semaphore_mem>>) src(%201 : memref<2x1x256xf32, #tpu.memory_space<any>>) dst(%202 : memref<2x1x256xf32, #tpu.memory_space<any>>)
    } else {
    }
    %c51_i32 = arith.constant 51 : i32
    %162 = arith.cmpi sgt, %2, %c51_i32 : i32
    %163 = arith.extui %162 : i1 to i32
    %c0_i32_62 = arith.constant 0 : i32
    %164 = arith.cmpi ne, %163, %c0_i32_62 : i32
    scf.if %164 {
      %c51_i32_75 = arith.constant 51 : i32
      %c0_i32_76 = arith.constant 0 : i32
      %c0_i32_77 = arith.constant 0 : i32
      %c0_i32_78 = arith.constant 0 : i32
      %201 = tpu.memref_slice %arg2[%c0_i32_76, %c0_i32_77, %c0_i32_78] : memref<2x4x256xf32, #tpu.memory_space<any>> -> memref<2x1x256xf32, #tpu.memory_space<any>>
      %c0_i32_79 = arith.constant 0 : i32
      %c0_i32_80 = arith.constant 0 : i32
      %c0_i32_81 = arith.constant 0 : i32
      %202 = tpu.memref_slice %arg3[%c0_i32_79, %c0_i32_80, %c0_i32_81] : memref<2x3x256xf32, #tpu.memory_space<any>> -> memref<2x1x256xf32, #tpu.memory_space<any>>
      %203 = tpu.memref_slice %arg4[%c51_i32_75] : memref<64x!tpu.dma_semaphore, #tpu.memory_space<semaphore_mem>> -> memref<1x!tpu.dma_semaphore, #tpu.memory_space<semaphore_mem>>
      %204 = tpu.memref_squeeze %203 : memref<1x!tpu.dma_semaphore, #tpu.memory_space<semaphore_mem>> -> memref<!tpu.dma_semaphore, #tpu.memory_space<semaphore_mem>>
      tpu.wait_dma2 semaphore(%204 : memref<!tpu.dma_semaphore, #tpu.memory_space<semaphore_mem>>) src(%201 : memref<2x1x256xf32, #tpu.memory_space<any>>) dst(%202 : memref<2x1x256xf32, #tpu.memory_space<any>>)
    } else {
    }
    %c52_i32 = arith.constant 52 : i32
    %165 = arith.cmpi sgt, %2, %c52_i32 : i32
    %166 = arith.extui %165 : i1 to i32
    %c0_i32_63 = arith.constant 0 : i32
    %167 = arith.cmpi ne, %166, %c0_i32_63 : i32
    scf.if %167 {
      %c52_i32_75 = arith.constant 52 : i32
      %c0_i32_76 = arith.constant 0 : i32
      %c0_i32_77 = arith.constant 0 : i32
      %c0_i32_78 = arith.constant 0 : i32
      %201 = tpu.memref_slice %arg2[%c0_i32_76, %c0_i32_77, %c0_i32_78] : memref<2x4x256xf32, #tpu.memory_space<any>> -> memref<2x1x256xf32, #tpu.memory_space<any>>
      %c0_i32_79 = arith.constant 0 : i32
      %c0_i32_80 = arith.constant 0 : i32
      %c0_i32_81 = arith.constant 0 : i32
      %202 = tpu.memref_slice %arg3[%c0_i32_79, %c0_i32_80, %c0_i32_81] : memref<2x3x256xf32, #tpu.memory_space<any>> -> memref<2x1x256xf32, #tpu.memory_space<any>>
      %203 = tpu.memref_slice %arg4[%c52_i32_75] : memref<64x!tpu.dma_semaphore, #tpu.memory_space<semaphore_mem>> -> memref<1x!tpu.dma_semaphore, #tpu.memory_space<semaphore_mem>>
      %204 = tpu.memref_squeeze %203 : memref<1x!tpu.dma_semaphore, #tpu.memory_space<semaphore_mem>> -> memref<!tpu.dma_semaphore, #tpu.memory_space<semaphore_mem>>
      tpu.wait_dma2 semaphore(%204 : memref<!tpu.dma_semaphore, #tpu.memory_space<semaphore_mem>>) src(%201 : memref<2x1x256xf32, #tpu.memory_space<any>>) dst(%202 : memref<2x1x256xf32, #tpu.memory_space<any>>)
    } else {
    }
    %c53_i32 = arith.constant 53 : i32
    %168 = arith.cmpi sgt, %2, %c53_i32 : i32
    %169 = arith.extui %168 : i1 to i32
    %c0_i32_64 = arith.constant 0 : i32
    %170 = arith.cmpi ne, %169, %c0_i32_64 : i32
    scf.if %170 {
      %c53_i32_75 = arith.constant 53 : i32
      %c0_i32_76 = arith.constant 0 : i32
      %c0_i32_77 = arith.constant 0 : i32
      %c0_i32_78 = arith.constant 0 : i32
      %201 = tpu.memref_slice %arg2[%c0_i32_76, %c0_i32_77, %c0_i32_78] : memref<2x4x256xf32, #tpu.memory_space<any>> -> memref<2x1x256xf32, #tpu.memory_space<any>>
      %c0_i32_79 = arith.constant 0 : i32
      %c0_i32_80 = arith.constant 0 : i32
      %c0_i32_81 = arith.constant 0 : i32
      %202 = tpu.memref_slice %arg3[%c0_i32_79, %c0_i32_80, %c0_i32_81] : memref<2x3x256xf32, #tpu.memory_space<any>> -> memref<2x1x256xf32, #tpu.memory_space<any>>
      %203 = tpu.memref_slice %arg4[%c53_i32_75] : memref<64x!tpu.dma_semaphore, #tpu.memory_space<semaphore_mem>> -> memref<1x!tpu.dma_semaphore, #tpu.memory_space<semaphore_mem>>
      %204 = tpu.memref_squeeze %203 : memref<1x!tpu.dma_semaphore, #tpu.memory_space<semaphore_mem>> -> memref<!tpu.dma_semaphore, #tpu.memory_space<semaphore_mem>>
      tpu.wait_dma2 semaphore(%204 : memref<!tpu.dma_semaphore, #tpu.memory_space<semaphore_mem>>) src(%201 : memref<2x1x256xf32, #tpu.memory_space<any>>) dst(%202 : memref<2x1x256xf32, #tpu.memory_space<any>>)
    } else {
    }
    %c54_i32 = arith.constant 54 : i32
    %171 = arith.cmpi sgt, %2, %c54_i32 : i32
    %172 = arith.extui %171 : i1 to i32
    %c0_i32_65 = arith.constant 0 : i32
    %173 = arith.cmpi ne, %172, %c0_i32_65 : i32
    scf.if %173 {
      %c54_i32_75 = arith.constant 54 : i32
      %c0_i32_76 = arith.constant 0 : i32
      %c0_i32_77 = arith.constant 0 : i32
      %c0_i32_78 = arith.constant 0 : i32
      %201 = tpu.memref_slice %arg2[%c0_i32_76, %c0_i32_77, %c0_i32_78] : memref<2x4x256xf32, #tpu.memory_space<any>> -> memref<2x1x256xf32, #tpu.memory_space<any>>
      %c0_i32_79 = arith.constant 0 : i32
      %c0_i32_80 = arith.constant 0 : i32
      %c0_i32_81 = arith.constant 0 : i32
      %202 = tpu.memref_slice %arg3[%c0_i32_79, %c0_i32_80, %c0_i32_81] : memref<2x3x256xf32, #tpu.memory_space<any>> -> memref<2x1x256xf32, #tpu.memory_space<any>>
      %203 = tpu.memref_slice %arg4[%c54_i32_75] : memref<64x!tpu.dma_semaphore, #tpu.memory_space<semaphore_mem>> -> memref<1x!tpu.dma_semaphore, #tpu.memory_space<semaphore_mem>>
      %204 = tpu.memref_squeeze %203 : memref<1x!tpu.dma_semaphore, #tpu.memory_space<semaphore_mem>> -> memref<!tpu.dma_semaphore, #tpu.memory_space<semaphore_mem>>
      tpu.wait_dma2 semaphore(%204 : memref<!tpu.dma_semaphore, #tpu.memory_space<semaphore_mem>>) src(%201 : memref<2x1x256xf32, #tpu.memory_space<any>>) dst(%202 : memref<2x1x256xf32, #tpu.memory_space<any>>)
    } else {
    }
    %c55_i32 = arith.constant 55 : i32
    %174 = arith.cmpi sgt, %2, %c55_i32 : i32
    %175 = arith.extui %174 : i1 to i32
    %c0_i32_66 = arith.constant 0 : i32
    %176 = arith.cmpi ne, %175, %c0_i32_66 : i32
    scf.if %176 {
      %c55_i32_75 = arith.constant 55 : i32
      %c0_i32_76 = arith.constant 0 : i32
      %c0_i32_77 = arith.constant 0 : i32
      %c0_i32_78 = arith.constant 0 : i32
      %201 = tpu.memref_slice %arg2[%c0_i32_76, %c0_i32_77, %c0_i32_78] : memref<2x4x256xf32, #tpu.memory_space<any>> -> memref<2x1x256xf32, #tpu.memory_space<any>>
      %c0_i32_79 = arith.constant 0 : i32
      %c0_i32_80 = arith.constant 0 : i32
      %c0_i32_81 = arith.constant 0 : i32
      %202 = tpu.memref_slice %arg3[%c0_i32_79, %c0_i32_80, %c0_i32_81] : memref<2x3x256xf32, #tpu.memory_space<any>> -> memref<2x1x256xf32, #tpu.memory_space<any>>
      %203 = tpu.memref_slice %arg4[%c55_i32_75] : memref<64x!tpu.dma_semaphore, #tpu.memory_space<semaphore_mem>> -> memref<1x!tpu.dma_semaphore, #tpu.memory_space<semaphore_mem>>
      %204 = tpu.memref_squeeze %203 : memref<1x!tpu.dma_semaphore, #tpu.memory_space<semaphore_mem>> -> memref<!tpu.dma_semaphore, #tpu.memory_space<semaphore_mem>>
      tpu.wait_dma2 semaphore(%204 : memref<!tpu.dma_semaphore, #tpu.memory_space<semaphore_mem>>) src(%201 : memref<2x1x256xf32, #tpu.memory_space<any>>) dst(%202 : memref<2x1x256xf32, #tpu.memory_space<any>>)
    } else {
    }
    %c56_i32 = arith.constant 56 : i32
    %177 = arith.cmpi sgt, %2, %c56_i32 : i32
    %178 = arith.extui %177 : i1 to i32
    %c0_i32_67 = arith.constant 0 : i32
    %179 = arith.cmpi ne, %178, %c0_i32_67 : i32
    scf.if %179 {
      %c56_i32_75 = arith.constant 56 : i32
      %c0_i32_76 = arith.constant 0 : i32
      %c0_i32_77 = arith.constant 0 : i32
      %c0_i32_78 = arith.constant 0 : i32
      %201 = tpu.memref_slice %arg2[%c0_i32_76, %c0_i32_77, %c0_i32_78] : memref<2x4x256xf32, #tpu.memory_space<any>> -> memref<2x1x256xf32, #tpu.memory_space<any>>
      %c0_i32_79 = arith.constant 0 : i32
      %c0_i32_80 = arith.constant 0 : i32
      %c0_i32_81 = arith.constant 0 : i32
      %202 = tpu.memref_slice %arg3[%c0_i32_79, %c0_i32_80, %c0_i32_81] : memref<2x3x256xf32, #tpu.memory_space<any>> -> memref<2x1x256xf32, #tpu.memory_space<any>>
      %203 = tpu.memref_slice %arg4[%c56_i32_75] : memref<64x!tpu.dma_semaphore, #tpu.memory_space<semaphore_mem>> -> memref<1x!tpu.dma_semaphore, #tpu.memory_space<semaphore_mem>>
      %204 = tpu.memref_squeeze %203 : memref<1x!tpu.dma_semaphore, #tpu.memory_space<semaphore_mem>> -> memref<!tpu.dma_semaphore, #tpu.memory_space<semaphore_mem>>
      tpu.wait_dma2 semaphore(%204 : memref<!tpu.dma_semaphore, #tpu.memory_space<semaphore_mem>>) src(%201 : memref<2x1x256xf32, #tpu.memory_space<any>>) dst(%202 : memref<2x1x256xf32, #tpu.memory_space<any>>)
    } else {
    }
    %c57_i32 = arith.constant 57 : i32
    %180 = arith.cmpi sgt, %2, %c57_i32 : i32
    %181 = arith.extui %180 : i1 to i32
    %c0_i32_68 = arith.constant 0 : i32
    %182 = arith.cmpi ne, %181, %c0_i32_68 : i32
    scf.if %182 {
      %c57_i32_75 = arith.constant 57 : i32
      %c0_i32_76 = arith.constant 0 : i32
      %c0_i32_77 = arith.constant 0 : i32
      %c0_i32_78 = arith.constant 0 : i32
      %201 = tpu.memref_slice %arg2[%c0_i32_76, %c0_i32_77, %c0_i32_78] : memref<2x4x256xf32, #tpu.memory_space<any>> -> memref<2x1x256xf32, #tpu.memory_space<any>>
      %c0_i32_79 = arith.constant 0 : i32
      %c0_i32_80 = arith.constant 0 : i32
      %c0_i32_81 = arith.constant 0 : i32
      %202 = tpu.memref_slice %arg3[%c0_i32_79, %c0_i32_80, %c0_i32_81] : memref<2x3x256xf32, #tpu.memory_space<any>> -> memref<2x1x256xf32, #tpu.memory_space<any>>
      %203 = tpu.memref_slice %arg4[%c57_i32_75] : memref<64x!tpu.dma_semaphore, #tpu.memory_space<semaphore_mem>> -> memref<1x!tpu.dma_semaphore, #tpu.memory_space<semaphore_mem>>
      %204 = tpu.memref_squeeze %203 : memref<1x!tpu.dma_semaphore, #tpu.memory_space<semaphore_mem>> -> memref<!tpu.dma_semaphore, #tpu.memory_space<semaphore_mem>>
      tpu.wait_dma2 semaphore(%204 : memref<!tpu.dma_semaphore, #tpu.memory_space<semaphore_mem>>) src(%201 : memref<2x1x256xf32, #tpu.memory_space<any>>) dst(%202 : memref<2x1x256xf32, #tpu.memory_space<any>>)
    } else {
    }
    %c58_i32 = arith.constant 58 : i32
    %183 = arith.cmpi sgt, %2, %c58_i32 : i32
    %184 = arith.extui %183 : i1 to i32
    %c0_i32_69 = arith.constant 0 : i32
    %185 = arith.cmpi ne, %184, %c0_i32_69 : i32
    scf.if %185 {
      %c58_i32_75 = arith.constant 58 : i32
      %c0_i32_76 = arith.constant 0 : i32
      %c0_i32_77 = arith.constant 0 : i32
      %c0_i32_78 = arith.constant 0 : i32
      %201 = tpu.memref_slice %arg2[%c0_i32_76, %c0_i32_77, %c0_i32_78] : memref<2x4x256xf32, #tpu.memory_space<any>> -> memref<2x1x256xf32, #tpu.memory_space<any>>
      %c0_i32_79 = arith.constant 0 : i32
      %c0_i32_80 = arith.constant 0 : i32
      %c0_i32_81 = arith.constant 0 : i32
      %202 = tpu.memref_slice %arg3[%c0_i32_79, %c0_i32_80, %c0_i32_81] : memref<2x3x256xf32, #tpu.memory_space<any>> -> memref<2x1x256xf32, #tpu.memory_space<any>>
      %203 = tpu.memref_slice %arg4[%c58_i32_75] : memref<64x!tpu.dma_semaphore, #tpu.memory_space<semaphore_mem>> -> memref<1x!tpu.dma_semaphore, #tpu.memory_space<semaphore_mem>>
      %204 = tpu.memref_squeeze %203 : memref<1x!tpu.dma_semaphore, #tpu.memory_space<semaphore_mem>> -> memref<!tpu.dma_semaphore, #tpu.memory_space<semaphore_mem>>
      tpu.wait_dma2 semaphore(%204 : memref<!tpu.dma_semaphore, #tpu.memory_space<semaphore_mem>>) src(%201 : memref<2x1x256xf32, #tpu.memory_space<any>>) dst(%202 : memref<2x1x256xf32, #tpu.memory_space<any>>)
    } else {
    }
    %c59_i32 = arith.constant 59 : i32
    %186 = arith.cmpi sgt, %2, %c59_i32 : i32
    %187 = arith.extui %186 : i1 to i32
    %c0_i32_70 = arith.constant 0 : i32
    %188 = arith.cmpi ne, %187, %c0_i32_70 : i32
    scf.if %188 {
      %c59_i32_75 = arith.constant 59 : i32
      %c0_i32_76 = arith.constant 0 : i32
      %c0_i32_77 = arith.constant 0 : i32
      %c0_i32_78 = arith.constant 0 : i32
      %201 = tpu.memref_slice %arg2[%c0_i32_76, %c0_i32_77, %c0_i32_78] : memref<2x4x256xf32, #tpu.memory_space<any>> -> memref<2x1x256xf32, #tpu.memory_space<any>>
      %c0_i32_79 = arith.constant 0 : i32
      %c0_i32_80 = arith.constant 0 : i32
      %c0_i32_81 = arith.constant 0 : i32
      %202 = tpu.memref_slice %arg3[%c0_i32_79, %c0_i32_80, %c0_i32_81] : memref<2x3x256xf32, #tpu.memory_space<any>> -> memref<2x1x256xf32, #tpu.memory_space<any>>
      %203 = tpu.memref_slice %arg4[%c59_i32_75] : memref<64x!tpu.dma_semaphore, #tpu.memory_space<semaphore_mem>> -> memref<1x!tpu.dma_semaphore, #tpu.memory_space<semaphore_mem>>
      %204 = tpu.memref_squeeze %203 : memref<1x!tpu.dma_semaphore, #tpu.memory_space<semaphore_mem>> -> memref<!tpu.dma_semaphore, #tpu.memory_space<semaphore_mem>>
      tpu.wait_dma2 semaphore(%204 : memref<!tpu.dma_semaphore, #tpu.memory_space<semaphore_mem>>) src(%201 : memref<2x1x256xf32, #tpu.memory_space<any>>) dst(%202 : memref<2x1x256xf32, #tpu.memory_space<any>>)
    } else {
    }
    %c60_i32 = arith.constant 60 : i32
    %189 = arith.cmpi sgt, %2, %c60_i32 : i32
    %190 = arith.extui %189 : i1 to i32
    %c0_i32_71 = arith.constant 0 : i32
    %191 = arith.cmpi ne, %190, %c0_i32_71 : i32
    scf.if %191 {
      %c60_i32_75 = arith.constant 60 : i32
      %c0_i32_76 = arith.constant 0 : i32
      %c0_i32_77 = arith.constant 0 : i32
      %c0_i32_78 = arith.constant 0 : i32
      %201 = tpu.memref_slice %arg2[%c0_i32_76, %c0_i32_77, %c0_i32_78] : memref<2x4x256xf32, #tpu.memory_space<any>> -> memref<2x1x256xf32, #tpu.memory_space<any>>
      %c0_i32_79 = arith.constant 0 : i32
      %c0_i32_80 = arith.constant 0 : i32
      %c0_i32_81 = arith.constant 0 : i32
      %202 = tpu.memref_slice %arg3[%c0_i32_79, %c0_i32_80, %c0_i32_81] : memref<2x3x256xf32, #tpu.memory_space<any>> -> memref<2x1x256xf32, #tpu.memory_space<any>>
      %203 = tpu.memref_slice %arg4[%c60_i32_75] : memref<64x!tpu.dma_semaphore, #tpu.memory_space<semaphore_mem>> -> memref<1x!tpu.dma_semaphore, #tpu.memory_space<semaphore_mem>>
      %204 = tpu.memref_squeeze %203 : memref<1x!tpu.dma_semaphore, #tpu.memory_space<semaphore_mem>> -> memref<!tpu.dma_semaphore, #tpu.memory_space<semaphore_mem>>
      tpu.wait_dma2 semaphore(%204 : memref<!tpu.dma_semaphore, #tpu.memory_space<semaphore_mem>>) src(%201 : memref<2x1x256xf32, #tpu.memory_space<any>>) dst(%202 : memref<2x1x256xf32, #tpu.memory_space<any>>)
    } else {
    }
    %c61_i32 = arith.constant 61 : i32
    %192 = arith.cmpi sgt, %2, %c61_i32 : i32
    %193 = arith.extui %192 : i1 to i32
    %c0_i32_72 = arith.constant 0 : i32
    %194 = arith.cmpi ne, %193, %c0_i32_72 : i32
    scf.if %194 {
      %c61_i32_75 = arith.constant 61 : i32
      %c0_i32_76 = arith.constant 0 : i32
      %c0_i32_77 = arith.constant 0 : i32
      %c0_i32_78 = arith.constant 0 : i32
      %201 = tpu.memref_slice %arg2[%c0_i32_76, %c0_i32_77, %c0_i32_78] : memref<2x4x256xf32, #tpu.memory_space<any>> -> memref<2x1x256xf32, #tpu.memory_space<any>>
      %c0_i32_79 = arith.constant 0 : i32
      %c0_i32_80 = arith.constant 0 : i32
      %c0_i32_81 = arith.constant 0 : i32
      %202 = tpu.memref_slice %arg3[%c0_i32_79, %c0_i32_80, %c0_i32_81] : memref<2x3x256xf32, #tpu.memory_space<any>> -> memref<2x1x256xf32, #tpu.memory_space<any>>
      %203 = tpu.memref_slice %arg4[%c61_i32_75] : memref<64x!tpu.dma_semaphore, #tpu.memory_space<semaphore_mem>> -> memref<1x!tpu.dma_semaphore, #tpu.memory_space<semaphore_mem>>
      %204 = tpu.memref_squeeze %203 : memref<1x!tpu.dma_semaphore, #tpu.memory_space<semaphore_mem>> -> memref<!tpu.dma_semaphore, #tpu.memory_space<semaphore_mem>>
      tpu.wait_dma2 semaphore(%204 : memref<!tpu.dma_semaphore, #tpu.memory_space<semaphore_mem>>) src(%201 : memref<2x1x256xf32, #tpu.memory_space<any>>) dst(%202 : memref<2x1x256xf32, #tpu.memory_space<any>>)
    } else {
    }
    %c62_i32 = arith.constant 62 : i32
    %195 = arith.cmpi sgt, %2, %c62_i32 : i32
    %196 = arith.extui %195 : i1 to i32
    %c0_i32_73 = arith.constant 0 : i32
    %197 = arith.cmpi ne, %196, %c0_i32_73 : i32
    scf.if %197 {
      %c62_i32_75 = arith.constant 62 : i32
      %c0_i32_76 = arith.constant 0 : i32
      %c0_i32_77 = arith.constant 0 : i32
      %c0_i32_78 = arith.constant 0 : i32
      %201 = tpu.memref_slice %arg2[%c0_i32_76, %c0_i32_77, %c0_i32_78] : memref<2x4x256xf32, #tpu.memory_space<any>> -> memref<2x1x256xf32, #tpu.memory_space<any>>
      %c0_i32_79 = arith.constant 0 : i32
      %c0_i32_80 = arith.constant 0 : i32
      %c0_i32_81 = arith.constant 0 : i32
      %202 = tpu.memref_slice %arg3[%c0_i32_79, %c0_i32_80, %c0_i32_81] : memref<2x3x256xf32, #tpu.memory_space<any>> -> memref<2x1x256xf32, #tpu.memory_space<any>>
      %203 = tpu.memref_slice %arg4[%c62_i32_75] : memref<64x!tpu.dma_semaphore, #tpu.memory_space<semaphore_mem>> -> memref<1x!tpu.dma_semaphore, #tpu.memory_space<semaphore_mem>>
      %204 = tpu.memref_squeeze %203 : memref<1x!tpu.dma_semaphore, #tpu.memory_space<semaphore_mem>> -> memref<!tpu.dma_semaphore, #tpu.memory_space<semaphore_mem>>
      tpu.wait_dma2 semaphore(%204 : memref<!tpu.dma_semaphore, #tpu.memory_space<semaphore_mem>>) src(%201 : memref<2x1x256xf32, #tpu.memory_space<any>>) dst(%202 : memref<2x1x256xf32, #tpu.memory_space<any>>)
    } else {
    }
    %c63_i32 = arith.constant 63 : i32
    %198 = arith.cmpi sgt, %2, %c63_i32 : i32
    %199 = arith.extui %198 : i1 to i32
    %c0_i32_74 = arith.constant 0 : i32
    %200 = arith.cmpi ne, %199, %c0_i32_74 : i32
    scf.if %200 {
      %c63_i32_75 = arith.constant 63 : i32
      %c0_i32_76 = arith.constant 0 : i32
      %c0_i32_77 = arith.constant 0 : i32
      %c0_i32_78 = arith.constant 0 : i32
      %201 = tpu.memref_slice %arg2[%c0_i32_76, %c0_i32_77, %c0_i32_78] : memref<2x4x256xf32, #tpu.memory_space<any>> -> memref<2x1x256xf32, #tpu.memory_space<any>>
      %c0_i32_79 = arith.constant 0 : i32
      %c0_i32_80 = arith.constant 0 : i32
      %c0_i32_81 = arith.constant 0 : i32
      %202 = tpu.memref_slice %arg3[%c0_i32_79, %c0_i32_80, %c0_i32_81] : memref<2x3x256xf32, #tpu.memory_space<any>> -> memref<2x1x256xf32, #tpu.memory_space<any>>
      %203 = tpu.memref_slice %arg4[%c63_i32_75] : memref<64x!tpu.dma_semaphore, #tpu.memory_space<semaphore_mem>> -> memref<1x!tpu.dma_semaphore, #tpu.memory_space<semaphore_mem>>
      %204 = tpu.memref_squeeze %203 : memref<1x!tpu.dma_semaphore, #tpu.memory_space<semaphore_mem>> -> memref<!tpu.dma_semaphore, #tpu.memory_space<semaphore_mem>>
      tpu.wait_dma2 semaphore(%204 : memref<!tpu.dma_semaphore, #tpu.memory_space<semaphore_mem>>) src(%201 : memref<2x1x256xf32, #tpu.memory_space<any>>) dst(%202 : memref<2x1x256xf32, #tpu.memory_space<any>>)
    } else {
    }
    return
  }
}

</mosaic_0001>

<llo_original>
// kernel: tpu_custom_call.1
$region0: #{tpu_custom_call.1}
  #allocation0 [shape = 'u32[]', space=smem, size = 0x4, offset = 0x4, fixed_abs, tag = 'smem constant byte address 0x4 - core index']
  #allocation1 [shape = 'u32[144,128]{1,0:T(1,128)}', space=vmem, size = 0x12000, scoped, tag = 'internal scratch']
  #allocation2 [shape = 's32[64]{0}', space=sflag, size = 0x100, scoped, tag = 'scratch operand']
  #allocation3 [shape = 's32[1]{0}', space=sflag, size = 0x4, scoped, tag = 'scoped memory for tpu_custom_call.1']
  #allocation4 [shape = 'u8[512]{0}', space=smem, size = 0x200, scoped, tag = 'prefetched SMEM operand 0']
  #allocation5 [shape = 's32[]', space=sflag, size = 0x4, offset = 0, fixed_abs, tag = 'sflag constant byte address 0x0 - dummy sync flag']
  %s0 = inlined_call_operand.hbm [shape: s32[3], index: 0, kind: input, shape index: {}]
  %s1 = inlined_call_operand.hbm [shape: f32[2,4,256], index: 1, kind: input, shape index: {}]
  %s2 = inlined_call_operand.vmem [shape: f32[2,3,256], index: 2, kind: output, shape index: {}]
  %s3 = sld [smem:[#allocation0]]
  $region269: #{tpu_custom_call.1} parent=0
    _
  %s5 = ssub.s32 1, %s3
  %s6 = scalar_select 0, %s5, %s3
  %8 = dma.hbm_to_smem %s0, 16, [#allocation4], [#allocation3]
  %9 = dma.done [#allocation3], 16
  %10 = sfence
  %s11 = smul.u32 0, 3
  %s12 = ssub.s32 3, %s11
  %p13 = scmp.lt.s32.totalorder %s12, 3
  %s14 = scalar_select %p13, %s12, 3
  // While loop
  $region2: #{tpu_custom_call.1} parent=0 // loop_pre_header
    _
  $region3: #{tpu_custom_call.1} parent=0 // loop_header
    %s16 = sphi 0, %s18
    %p17 = scmp.ge.s32.totalorder %s16, %s14
  $region4: #{tpu_custom_call.1} parent=0 // loop_header_branch
    %20 = sbr.rel (%p17) target = $region8
  $region5: #{tpu_custom_call.1} parent=0 // loop_body
    %s21 = sand.u32 %s16, 63
    %p22 = scmp.ge.s32.totalorder %s16, 64
    // Predicated region
    $region9: #{tpu_custom_call.1} parent=5 // pred_check
      %p23 = pneg %p22
    $region10: #{tpu_custom_call.1} parent=5 // pred_check_branch
      %25 = sbr.rel (%p23) target = $region12
    $region11: #{tpu_custom_call.1} parent=5 // pred_region
      %s26 = scalar_lea.sflag [#allocation2], %s21
      %s27 = smul.u32 2, 1
      %s28 = smul.u32 %s27, 2
      %s29 = sshll.u32 %s28, 4
      %30 = dma.done %s26, %s29
    $region12: #{tpu_custom_call.1} parent=5 // pred_fallthru
      _
    %s31 = sadd.s32 %s11, %s16
    %s32 = sld [smem:[#allocation4 + %s31]]
    %p33 = scmp.lt.s32.totalorder %s32, 0
    %s34 = sadd.s32 %s32, 4
    %s35 = scalar_select %p33, %s34, %s32
    %p36 = scmp.gt.s32.totalorder %s35, 0
    %s37 = scalar_select %p36, %s35, 0
    %p38 = scmp.lt.s32.totalorder %s37, 3
    %s39 = scalar_select %p38, %s37, 3
    %s40 = sshrl.u32 %s39, 2
    %s41 = sand.u32 %s39, 3
    %s42 = smul.u32 %s40, 8
    %s43 = sadd.s32 %s41, %s42
    %s44 = smul.addr %s43, 16
    %s45 = scalar_lea.hbm %s1, %s44
    %s46 = sshrl.u32 %s31, 2
    %s47 = sand.u32 %s31, 3
    %s48 = smul.u32 %s46, 8
    %s49 = sadd.s32 %s47, %s48
    %s50 = scalar_lea.vmem %s2, %s49
    %s51 = scalar_lea.sflag [#allocation2], %s21
    %s53 = sshll.u32 %s50, 4
    %s54 = int_to_ptr.vmem [resolvable:$true] %s53
    %56 = dma.hbm_to_vmem [thread:$0]  %s45, 64, %s54, %s51, 64, 64, 1
  $region6: #{tpu_custom_call.1} parent=0 // loop_footer
    %s18 = sadd.s32 %s16, 1
  $region7: #{tpu_custom_call.1} parent=0 // loop_footer_branch
    %15 = sbr.rel target = $region3
  $region8: #{tpu_custom_call.1} parent=0 // loop_exit
    _
  %p57 = scmp.gt.s32.totalorder %s14, 0
  // Predicated region
  $region13: #{tpu_custom_call.1} parent=0 // pred_check
    %p58 = pneg %p57
  $region14: #{tpu_custom_call.1} parent=0 // pred_check_branch
    %60 = sbr.rel (%p58) target = $region16
  $region15: #{tpu_custom_call.1} parent=0 // pred_region
    %s61 = smul.u32 2, 1
    %s62 = smul.u32 %s61, 2
    %s63 = sshll.u32 %s62, 4
    %64 = dma.done [#allocation2], %s63
  $region16: #{tpu_custom_call.1} parent=0 // pred_fallthru
    _
  %p65 = scmp.gt.s32.totalorder %s14, 1
  // Predicated region
  $region17: #{tpu_custom_call.1} parent=0 // pred_check
    %p66 = pneg %p65
  $region18: #{tpu_custom_call.1} parent=0 // pred_check_branch
    %68 = sbr.rel (%p66) target = $region20
  $region19: #{tpu_custom_call.1} parent=0 // pred_region
    %s69 = scalar_lea.sflag [#allocation2], 1
    %s70 = smul.u32 2, 1
    %s71 = smul.u32 %s70, 2
    %s72 = sshll.u32 %s71, 4
    %73 = dma.done %s69, %s72
  $region20: #{tpu_custom_call.1} parent=0 // pred_fallthru
    _
  %p74 = scmp.gt.s32.totalorder %s14, 2
  // Predicated region
  $region21: #{tpu_custom_call.1} parent=0 // pred_check
    %p75 = pneg %p74
  $region22: #{tpu_custom_call.1} parent=0 // pred_check_branch
    %77 = sbr.rel (%p75) target = $region24
  $region23: #{tpu_custom_call.1} parent=0 // pred_region
    %s78 = scalar_lea.sflag [#allocation2], 2
    %s79 = smul.u32 2, 1
    %s80 = smul.u32 %s79, 2
    %s81 = sshll.u32 %s80, 4
    %82 = dma.done %s78, %s81
  $region24: #{tpu_custom_call.1} parent=0 // pred_fallthru
    _
  %p83 = scmp.gt.s32.totalorder %s14, 3
  // Predicated region
  $region25: #{tpu_custom_call.1} parent=0 // pred_check
    %p84 = pneg %p83
  $region26: #{tpu_custom_call.1} parent=0 // pred_check_branch
    %86 = sbr.rel (%p84) target = $region28
  $region27: #{tpu_custom_call.1} parent=0 // pred_region
    %s87 = scalar_lea.sflag [#allocation2], 3
    %s88 = smul.u32 2, 1
    %s89 = smul.u32 %s88, 2
    %s90 = sshll.u32 %s89, 4
    %91 = dma.done %s87, %s90
  $region28: #{tpu_custom_call.1} parent=0 // pred_fallthru
    _
  %p92 = scmp.gt.s32.totalorder %s14, 4
  // Predicated region
  $region29: #{tpu_custom_call.1} parent=0 // pred_check
    %p93 = pneg %p92
  $region30: #{tpu_custom_call.1} parent=0 // pred_check_branch
    %95 = sbr.rel (%p93) target = $region32
  $region31: #{tpu_custom_call.1} parent=0 // pred_region
    %s96 = scalar_lea.sflag [#allocation2], 4
    %s97 = smul.u32 2, 1
    %s98 = smul.u32 %s97, 2
    %s99 = sshll.u32 %s98, 4
    %100 = dma.done %s96, %s99
  $region32: #{tpu_custom_call.1} parent=0 // pred_fallthru
    _
  %p101 = scmp.gt.s32.totalorder %s14, 5
  // Predicated region
  $region33: #{tpu_custom_call.1} parent=0 // pred_check
    %p102 = pneg %p101
  $region34: #{tpu_custom_call.1} parent=0 // pred_check_branch
    %104 = sbr.rel (%p102) target = $region36
  $region35: #{tpu_custom_call.1} parent=0 // pred_region
    %s105 = scalar_lea.sflag [#allocation2], 5
    %s106 = smul.u32 2, 1
    %s107 = smul.u32 %s106, 2
    %s108 = sshll.u32 %s107, 4
    %109 = dma.done %s105, %s108
  $region36: #{tpu_custom_call.1} parent=0 // pred_fallthru
    _
  %p110 = scmp.gt.s32.totalorder %s14, 6
  // Predicated region
  $region37: #{tpu_custom_call.1} parent=0 // pred_check
    %p111 = pneg %p110
  $region38: #{tpu_custom_call.1} parent=0 // pred_check_branch
    %113 = sbr.rel (%p111) target = $region40
  $region39: #{tpu_custom_call.1} parent=0 // pred_region
    %s114 = scalar_lea.sflag [#allocation2], 6
    %s115 = smul.u32 2, 1
    %s116 = smul.u32 %s115, 2
    %s117 = sshll.u32 %s116, 4
    %118 = dma.done %s114, %s117
  $region40: #{tpu_custom_call.1} parent=0 // pred_fallthru
    _
  %p119 = scmp.gt.s32.totalorder %s14, 7
  // Predicated region
  $region41: #{tpu_custom_call.1} parent=0 // pred_check
    %p120 = pneg %p119
  $region42: #{tpu_custom_call.1} parent=0 // pred_check_branch
    %122 = sbr.rel (%p120) target = $region44
  $region43: #{tpu_custom_call.1} parent=0 // pred_region
    %s123 = scalar_lea.sflag [#allocation2], 7
    %s124 = smul.u32 2, 1
    %s125 = smul.u32 %s124, 2
    %s126 = sshll.u32 %s125, 4
    %127 = dma.done %s123, %s126
  $region44: #{tpu_custom_call.1} parent=0 // pred_fallthru
    _
  %p128 = scmp.gt.s32.totalorder %s14, 8
  // Predicated region
  $region45: #{tpu_custom_call.1} parent=0 // pred_check
    %p129 = pneg %p128
  $region46: #{tpu_custom_call.1} parent=0 // pred_check_branch
    %131 = sbr.rel (%p129) target = $region48
  $region47: #{tpu_custom_call.1} parent=0 // pred_region
    %s132 = scalar_lea.sflag [#allocation2], 8
    %s133 = smul.u32 2, 1
    %s134 = smul.u32 %s133, 2
    %s135 = sshll.u32 %s134, 4
    %136 = dma.done %s132, %s135
  $region48: #{tpu_custom_call.1} parent=0 // pred_fallthru
    _
  %p137 = scmp.gt.s32.totalorder %s14, 9
  // Predicated region
  $region49: #{tpu_custom_call.1} parent=0 // pred_check
    %p138 = pneg %p137
  $region50: #{tpu_custom_call.1} parent=0 // pred_check_branch
    %140 = sbr.rel (%p138) target = $region52
  $region51: #{tpu_custom_call.1} parent=0 // pred_region
    %s141 = scalar_lea.sflag [#allocation2], 9
    %s142 = smul.u32 2, 1
    %s143 = smul.u32 %s142, 2
    %s144 = sshll.u32 %s143, 4
    %145 = dma.done %s141, %s144
  $region52: #{tpu_custom_call.1} parent=0 // pred_fallthru
    _
  %p146 = scmp.gt.s32.totalorder %s14, 10
  // Predicated region
  $region53: #{tpu_custom_call.1} parent=0 // pred_check
    %p147 = pneg %p146
  $region54: #{tpu_custom_call.1} parent=0 // pred_check_branch
    %149 = sbr.rel (%p147) target = $region56
  $region55: #{tpu_custom_call.1} parent=0 // pred_region
    %s150 = scalar_lea.sflag [#allocation2], 10
    %s151 = smul.u32 2, 1
    %s152 = smul.u32 %s151, 2
    %s153 = sshll.u32 %s152, 4
    %154 = dma.done %s150, %s153
  $region56: #{tpu_custom_call.1} parent=0 // pred_fallthru
    _
  %p155 = scmp.gt.s32.totalorder %s14, 11
  // Predicated region
  $region57: #{tpu_custom_call.1} parent=0 // pred_check
    %p156 = pneg %p155
  $region58: #{tpu_custom_call.1} parent=0 // pred_check_branch
    %158 = sbr.rel (%p156) target = $region60
  $region59: #{tpu_custom_call.1} parent=0 // pred_region
    %s159 = scalar_lea.sflag [#allocation2], 11
    %s160 = smul.u32 2, 1
    %s161 = smul.u32 %s160, 2
    %s162 = sshll.u32 %s161, 4
    %163 = dma.done %s159, %s162
  $region60: #{tpu_custom_call.1} parent=0 // pred_fallthru
    _
  %p164 = scmp.gt.s32.totalorder %s14, 12
  // Predicated region
  $region61: #{tpu_custom_call.1} parent=0 // pred_check
    %p165 = pneg %p164
  $region62: #{tpu_custom_call.1} parent=0 // pred_check_branch
    %167 = sbr.rel (%p165) target = $region64
  $region63: #{tpu_custom_call.1} parent=0 // pred_region
    %s168 = scalar_lea.sflag [#allocation2], 12
    %s169 = smul.u32 2, 1
    %s170 = smul.u32 %s169, 2
    %s171 = sshll.u32 %s170, 4
    %172 = dma.done %s168, %s171
  $region64: #{tpu_custom_call.1} parent=0 // pred_fallthru
    _
  %p173 = scmp.gt.s32.totalorder %s14, 13
  // Predicated region
  $region65: #{tpu_custom_call.1} parent=0 // pred_check
    %p174 = pneg %p173
  $region66: #{tpu_custom_call.1} parent=0 // pred_check_branch
    %176 = sbr.rel (%p174) target = $region68
  $region67: #{tpu_custom_call.1} parent=0 // pred_region
    %s177 = scalar_lea.sflag [#allocation2], 13
    %s178 = smul.u32 2, 1
    %s179 = smul.u32 %s178, 2
    %s180 = sshll.u32 %s179, 4
    %181 = dma.done %s177, %s180
  $region68: #{tpu_custom_call.1} parent=0 // pred_fallthru
    _
  %p182 = scmp.gt.s32.totalorder %s14, 14
  // Predicated region
  $region69: #{tpu_custom_call.1} parent=0 // pred_check
    %p183 = pneg %p182
  $region70: #{tpu_custom_call.1} parent=0 // pred_check_branch
    %185 = sbr.rel (%p183) target = $region72
  $region71: #{tpu_custom_call.1} parent=0 // pred_region
    %s186 = scalar_lea.sflag [#allocation2], 14
    %s187 = smul.u32 2, 1
    %s188 = smul.u32 %s187, 2
    %s189 = sshll.u32 %s188, 4
    %190 = dma.done %s186, %s189
  $region72: #{tpu_custom_call.1} parent=0 // pred_fallthru
    _
  %p191 = scmp.gt.s32.totalorder %s14, 15
  // Predicated region
  $region73: #{tpu_custom_call.1} parent=0 // pred_check
    %p192 = pneg %p191
  $region74: #{tpu_custom_call.1} parent=0 // pred_check_branch
    %194 = sbr.rel (%p192) target = $region76
  $region75: #{tpu_custom_call.1} parent=0 // pred_region
    %s195 = scalar_lea.sflag [#allocation2], 15
    %s196 = smul.u32 2, 1
    %s197 = smul.u32 %s196, 2
    %s198 = sshll.u32 %s197, 4
    %199 = dma.done %s195, %s198
  $region76: #{tpu_custom_call.1} parent=0 // pred_fallthru
    _
  %p200 = scmp.gt.s32.totalorder %s14, 16
  // Predicated region
  $region77: #{tpu_custom_call.1} parent=0 // pred_check
    %p201 = pneg %p200
  $region78: #{tpu_custom_call.1} parent=0 // pred_check_branch
    %203 = sbr.rel (%p201) target = $region80
  $region79: #{tpu_custom_call.1} parent=0 // pred_region
    %s204 = scalar_lea.sflag [#allocation2], 16
    %s205 = smul.u32 2, 1
    %s206 = smul.u32 %s205, 2
    %s207 = sshll.u32 %s206, 4
    %208 = dma.done %s204, %s207
  $region80: #{tpu_custom_call.1} parent=0 // pred_fallthru
    _
  %p209 = scmp.gt.s32.totalorder %s14, 17
  // Predicated region
  $region81: #{tpu_custom_call.1} parent=0 // pred_check
    %p210 = pneg %p209
  $region82: #{tpu_custom_call.1} parent=0 // pred_check_branch
    %212 = sbr.rel (%p210) target = $region84
  $region83: #{tpu_custom_call.1} parent=0 // pred_region
    %s213 = scalar_lea.sflag [#allocation2], 17
    %s214 = smul.u32 2, 1
    %s215 = smul.u32 %s214, 2
    %s216 = sshll.u32 %s215, 4
    %217 = dma.done %s213, %s216
  $region84: #{tpu_custom_call.1} parent=0 // pred_fallthru
    _
  %p218 = scmp.gt.s32.totalorder %s14, 18
  // Predicated region
  $region85: #{tpu_custom_call.1} parent=0 // pred_check
    %p219 = pneg %p218
  $region86: #{tpu_custom_call.1} parent=0 // pred_check_branch
    %221 = sbr.rel (%p219) target = $region88
  $region87: #{tpu_custom_call.1} parent=0 // pred_region
    %s222 = scalar_lea.sflag [#allocation2], 18
    %s223 = smul.u32 2, 1
    %s224 = smul.u32 %s223, 2
    %s225 = sshll.u32 %s224, 4
    %226 = dma.done %s222, %s225
  $region88: #{tpu_custom_call.1} parent=0 // pred_fallthru
    _
  %p227 = scmp.gt.s32.totalorder %s14, 19
  // Predicated region
  $region89: #{tpu_custom_call.1} parent=0 // pred_check
    %p228 = pneg %p227
  $region90: #{tpu_custom_call.1} parent=0 // pred_check_branch
    %230 = sbr.rel (%p228) target = $region92
  $region91: #{tpu_custom_call.1} parent=0 // pred_region
    %s231 = scalar_lea.sflag [#allocation2], 19
    %s232 = smul.u32 2, 1
    %s233 = smul.u32 %s232, 2
    %s234 = sshll.u32 %s233, 4
    %235 = dma.done %s231, %s234
  $region92: #{tpu_custom_call.1} parent=0 // pred_fallthru
    _
  %p236 = scmp.gt.s32.totalorder %s14, 20
  // Predicated region
  $region93: #{tpu_custom_call.1} parent=0 // pred_check
    %p237 = pneg %p236
  $region94: #{tpu_custom_call.1} parent=0 // pred_check_branch
    %239 = sbr.rel (%p237) target = $region96
  $region95: #{tpu_custom_call.1} parent=0 // pred_region
    %s240 = scalar_lea.sflag [#allocation2], 20
    %s241 = smul.u32 2, 1
    %s242 = smul.u32 %s241, 2
    %s243 = sshll.u32 %s242, 4
    %244 = dma.done %s240, %s243
  $region96: #{tpu_custom_call.1} parent=0 // pred_fallthru
    _
  %p245 = scmp.gt.s32.totalorder %s14, 21
  // Predicated region
  $region97: #{tpu_custom_call.1} parent=0 // pred_check
    %p246 = pneg %p245
  $region98: #{tpu_custom_call.1} parent=0 // pred_check_branch
    %248 = sbr.rel (%p246) target = $region100
  $region99: #{tpu_custom_call.1} parent=0 // pred_region
    %s249 = scalar_lea.sflag [#allocation2], 21
    %s250 = smul.u32 2, 1
    %s251 = smul.u32 %s250, 2
    %s252 = sshll.u32 %s251, 4
    %253 = dma.done %s249, %s252
  $region100: #{tpu_custom_call.1} parent=0 // pred_fallthru
    _
  %p254 = scmp.gt.s32.totalorder %s14, 22
  // Predicated region
  $region101: #{tpu_custom_call.1} parent=0 // pred_check
    %p255 = pneg %p254
  $region102: #{tpu_custom_call.1} parent=0 // pred_check_branch
    %257 = sbr.rel (%p255) target = $region104
  $region103: #{tpu_custom_call.1} parent=0 // pred_region
    %s258 = scalar_lea.sflag [#allocation2], 22
    %s259 = smul.u32 2, 1
    %s260 = smul.u32 %s259, 2
    %s261 = sshll.u32 %s260, 4
    %262 = dma.done %s258, %s261
  $region104: #{tpu_custom_call.1} parent=0 // pred_fallthru
    _
  %p263 = scmp.gt.s32.totalorder %s14, 23
  // Predicated region
  $region105: #{tpu_custom_call.1} parent=0 // pred_check
    %p264 = pneg %p263
  $region106: #{tpu_custom_call.1} parent=0 // pred_check_branch
    %266 = sbr.rel (%p264) target = $region108
  $region107: #{tpu_custom_call.1} parent=0 // pred_region
    %s267 = scalar_lea.sflag [#allocation2], 23
    %s268 = smul.u32 2, 1
    %s269 = smul.u32 %s268, 2
    %s270 = sshll.u32 %s269, 4
    %271 = dma.done %s267, %s270
  $region108: #{tpu_custom_call.1} parent=0 // pred_fallthru
    _
  %p272 = scmp.gt.s32.totalorder %s14, 24
  // Predicated region
  $region109: #{tpu_custom_call.1} parent=0 // pred_check
    %p273 = pneg %p272
  $region110: #{tpu_custom_call.1} parent=0 // pred_check_branch
    %275 = sbr.rel (%p273) target = $region112
  $region111: #{tpu_custom_call.1} parent=0 // pred_region
    %s276 = scalar_lea.sflag [#allocation2], 24
    %s277 = smul.u32 2, 1
    %s278 = smul.u32 %s277, 2
    %s279 = sshll.u32 %s278, 4
    %280 = dma.done %s276, %s279
  $region112: #{tpu_custom_call.1} parent=0 // pred_fallthru
    _
  %p281 = scmp.gt.s32.totalorder %s14, 25
  // Predicated region
  $region113: #{tpu_custom_call.1} parent=0 // pred_check
    %p282 = pneg %p281
  $region114: #{tpu_custom_call.1} parent=0 // pred_check_branch
    %284 = sbr.rel (%p282) target = $region116
  $region115: #{tpu_custom_call.1} parent=0 // pred_region
    %s285 = scalar_lea.sflag [#allocation2], 25
    %s286 = smul.u32 2, 1
    %s287 = smul.u32 %s286, 2
    %s288 = sshll.u32 %s287, 4
    %289 = dma.done %s285, %s288
  $region116: #{tpu_custom_call.1} parent=0 // pred_fallthru
    _
  %p290 = scmp.gt.s32.totalorder %s14, 26
  // Predicated region
  $region117: #{tpu_custom_call.1} parent=0 // pred_check
    %p291 = pneg %p290
  $region118: #{tpu_custom_call.1} parent=0 // pred_check_branch
    %293 = sbr.rel (%p291) target = $region120
  $region119: #{tpu_custom_call.1} parent=0 // pred_region
    %s294 = scalar_lea.sflag [#allocation2], 26
    %s295 = smul.u32 2, 1
    %s296 = smul.u32 %s295, 2
    %s297 = sshll.u32 %s296, 4
    %298 = dma.done %s294, %s297
  $region120: #{tpu_custom_call.1} parent=0 // pred_fallthru
    _
  %p299 = scmp.gt.s32.totalorder %s14, 27
  // Predicated region
  $region121: #{tpu_custom_call.1} parent=0 // pred_check
    %p300 = pneg %p299
  $region122: #{tpu_custom_call.1} parent=0 // pred_check_branch
    %302 = sbr.rel (%p300) target = $region124
  $region123: #{tpu_custom_call.1} parent=0 // pred_region
    %s303 = scalar_lea.sflag [#allocation2], 27
    %s304 = smul.u32 2, 1
    %s305 = smul.u32 %s304, 2
    %s306 = sshll.u32 %s305, 4
    %307 = dma.done %s303, %s306
  $region124: #{tpu_custom_call.1} parent=0 // pred_fallthru
    _
  %p308 = scmp.gt.s32.totalorder %s14, 28
  // Predicated region
  $region125: #{tpu_custom_call.1} parent=0 // pred_check
    %p309 = pneg %p308
  $region126: #{tpu_custom_call.1} parent=0 // pred_check_branch
    %311 = sbr.rel (%p309) target = $region128
  $region127: #{tpu_custom_call.1} parent=0 // pred_region
    %s312 = scalar_lea.sflag [#allocation2], 28
    %s313 = smul.u32 2, 1
    %s314 = smul.u32 %s313, 2
    %s315 = sshll.u32 %s314, 4
    %316 = dma.done %s312, %s315
  $region128: #{tpu_custom_call.1} parent=0 // pred_fallthru
    _
  %p317 = scmp.gt.s32.totalorder %s14, 29
  // Predicated region
  $region129: #{tpu_custom_call.1} parent=0 // pred_check
    %p318 = pneg %p317
  $region130: #{tpu_custom_call.1} parent=0 // pred_check_branch
    %320 = sbr.rel (%p318) target = $region132
  $region131: #{tpu_custom_call.1} parent=0 // pred_region
    %s321 = scalar_lea.sflag [#allocation2], 29
    %s322 = smul.u32 2, 1
    %s323 = smul.u32 %s322, 2
    %s324 = sshll.u32 %s323, 4
    %325 = dma.done %s321, %s324
  $region132: #{tpu_custom_call.1} parent=0 // pred_fallthru
    _
  %p326 = scmp.gt.s32.totalorder %s14, 30
  // Predicated region
  $region133: #{tpu_custom_call.1} parent=0 // pred_check
    %p327 = pneg %p326
  $region134: #{tpu_custom_call.1} parent=0 // pred_check_branch
    %329 = sbr.rel (%p327) target = $region136
  $region135: #{tpu_custom_call.1} parent=0 // pred_region
    %s330 = scalar_lea.sflag [#allocation2], 30
    %s331 = smul.u32 2, 1
    %s332 = smul.u32 %s331, 2
    %s333 = sshll.u32 %s332, 4
    %334 = dma.done %s330, %s333
  $region136: #{tpu_custom_call.1} parent=0 // pred_fallthru
    _
  %p335 = scmp.gt.s32.totalorder %s14, 31
  // Predicated region
  $region137: #{tpu_custom_call.1} parent=0 // pred_check
    %p336 = pneg %p335
  $region138: #{tpu_custom_call.1} parent=0 // pred_check_branch
    %338 = sbr.rel (%p336) target = $region140
  $region139: #{tpu_custom_call.1} parent=0 // pred_region
    %s339 = scalar_lea.sflag [#allocation2], 31
    %s340 = smul.u32 2, 1
    %s341 = smul.u32 %s340, 2
    %s342 = sshll.u32 %s341, 4
    %343 = dma.done %s339, %s342
  $region140: #{tpu_custom_call.1} parent=0 // pred_fallthru
    _
  %p344 = scmp.gt.s32.totalorder %s14, 32
  // Predicated region
  $region141: #{tpu_custom_call.1} parent=0 // pred_check
    %p345 = pneg %p344
  $region142: #{tpu_custom_call.1} parent=0 // pred_check_branch
    %347 = sbr.rel (%p345) target = $region144
  $region143: #{tpu_custom_call.1} parent=0 // pred_region
    %s348 = scalar_lea.sflag [#allocation2], 32
    %s349 = smul.u32 2, 1
    %s350 = smul.u32 %s349, 2
    %s351 = sshll.u32 %s350, 4
    %352 = dma.done %s348, %s351
  $region144: #{tpu_custom_call.1} parent=0 // pred_fallthru
    _
  %p353 = scmp.gt.s32.totalorder %s14, 33
  // Predicated region
  $region145: #{tpu_custom_call.1} parent=0 // pred_check
    %p354 = pneg %p353
  $region146: #{tpu_custom_call.1} parent=0 // pred_check_branch
    %356 = sbr.rel (%p354) target = $region148
  $region147: #{tpu_custom_call.1} parent=0 // pred_region
    %s357 = scalar_lea.sflag [#allocation2], 33
    %s358 = smul.u32 2, 1
    %s359 = smul.u32 %s358, 2
    %s360 = sshll.u32 %s359, 4
    %361 = dma.done %s357, %s360
  $region148: #{tpu_custom_call.1} parent=0 // pred_fallthru
    _
  %p362 = scmp.gt.s32.totalorder %s14, 34
  // Predicated region
  $region149: #{tpu_custom_call.1} parent=0 // pred_check
    %p363 = pneg %p362
  $region150: #{tpu_custom_call.1} parent=0 // pred_check_branch
    %365 = sbr.rel (%p363) target = $region152
  $region151: #{tpu_custom_call.1} parent=0 // pred_region
    %s366 = scalar_lea.sflag [#allocation2], 34
    %s367 = smul.u32 2, 1
    %s368 = smul.u32 %s367, 2
    %s369 = sshll.u32 %s368, 4
    %370 = dma.done %s366, %s369
  $region152: #{tpu_custom_call.1} parent=0 // pred_fallthru
    _
  %p371 = scmp.gt.s32.totalorder %s14, 35
  // Predicated region
  $region153: #{tpu_custom_call.1} parent=0 // pred_check
    %p372 = pneg %p371
  $region154: #{tpu_custom_call.1} parent=0 // pred_check_branch
    %374 = sbr.rel (%p372) target = $region156
  $region155: #{tpu_custom_call.1} parent=0 // pred_region
    %s375 = scalar_lea.sflag [#allocation2], 35
    %s376 = smul.u32 2, 1
    %s377 = smul.u32 %s376, 2
    %s378 = sshll.u32 %s377, 4
    %379 = dma.done %s375, %s378
  $region156: #{tpu_custom_call.1} parent=0 // pred_fallthru
    _
  %p380 = scmp.gt.s32.totalorder %s14, 36
  // Predicated region
  $region157: #{tpu_custom_call.1} parent=0 // pred_check
    %p381 = pneg %p380
  $region158: #{tpu_custom_call.1} parent=0 // pred_check_branch
    %383 = sbr.rel (%p381) target = $region160
  $region159: #{tpu_custom_call.1} parent=0 // pred_region
    %s384 = scalar_lea.sflag [#allocation2], 36
    %s385 = smul.u32 2, 1
    %s386 = smul.u32 %s385, 2
    %s387 = sshll.u32 %s386, 4
    %388 = dma.done %s384, %s387
  $region160: #{tpu_custom_call.1} parent=0 // pred_fallthru
    _
  %p389 = scmp.gt.s32.totalorder %s14, 37
  // Predicated region
  $region161: #{tpu_custom_call.1} parent=0 // pred_check
    %p390 = pneg %p389
  $region162: #{tpu_custom_call.1} parent=0 // pred_check_branch
    %392 = sbr.rel (%p390) target = $region164
  $region163: #{tpu_custom_call.1} parent=0 // pred_region
    %s393 = scalar_lea.sflag [#allocation2], 37
    %s394 = smul.u32 2, 1
    %s395 = smul.u32 %s394, 2
    %s396 = sshll.u32 %s395, 4
    %397 = dma.done %s393, %s396
  $region164: #{tpu_custom_call.1} parent=0 // pred_fallthru
    _
  %p398 = scmp.gt.s32.totalorder %s14, 38
  // Predicated region
  $region165: #{tpu_custom_call.1} parent=0 // pred_check
    %p399 = pneg %p398
  $region166: #{tpu_custom_call.1} parent=0 // pred_check_branch
    %401 = sbr.rel (%p399) target = $region168
  $region167: #{tpu_custom_call.1} parent=0 // pred_region
    %s402 = scalar_lea.sflag [#allocation2], 38
    %s403 = smul.u32 2, 1
    %s404 = smul.u32 %s403, 2
    %s405 = sshll.u32 %s404, 4
    %406 = dma.done %s402, %s405
  $region168: #{tpu_custom_call.1} parent=0 // pred_fallthru
    _
  %p407 = scmp.gt.s32.totalorder %s14, 39
  // Predicated region
  $region169: #{tpu_custom_call.1} parent=0 // pred_check
    %p408 = pneg %p407
  $region170: #{tpu_custom_call.1} parent=0 // pred_check_branch
    %410 = sbr.rel (%p408) target = $region172
  $region171: #{tpu_custom_call.1} parent=0 // pred_region
    %s411 = scalar_lea.sflag [#allocation2], 39
    %s412 = smul.u32 2, 1
    %s413 = smul.u32 %s412, 2
    %s414 = sshll.u32 %s413, 4
    %415 = dma.done %s411, %s414
  $region172: #{tpu_custom_call.1} parent=0 // pred_fallthru
    _
  %p416 = scmp.gt.s32.totalorder %s14, 40
  // Predicated region
  $region173: #{tpu_custom_call.1} parent=0 // pred_check
    %p417 = pneg %p416
  $region174: #{tpu_custom_call.1} parent=0 // pred_check_branch
    %419 = sbr.rel (%p417) target = $region176
  $region175: #{tpu_custom_call.1} parent=0 // pred_region
    %s420 = scalar_lea.sflag [#allocation2], 40
    %s421 = smul.u32 2, 1
    %s422 = smul.u32 %s421, 2
    %s423 = sshll.u32 %s422, 4
    %424 = dma.done %s420, %s423
  $region176: #{tpu_custom_call.1} parent=0 // pred_fallthru
    _
  %p425 = scmp.gt.s32.totalorder %s14, 41
  // Predicated region
  $region177: #{tpu_custom_call.1} parent=0 // pred_check
    %p426 = pneg %p425
  $region178: #{tpu_custom_call.1} parent=0 // pred_check_branch
    %428 = sbr.rel (%p426) target = $region180
  $region179: #{tpu_custom_call.1} parent=0 // pred_region
    %s429 = scalar_lea.sflag [#allocation2], 41
    %s430 = smul.u32 2, 1
    %s431 = smul.u32 %s430, 2
    %s432 = sshll.u32 %s431, 4
    %433 = dma.done %s429, %s432
  $region180: #{tpu_custom_call.1} parent=0 // pred_fallthru
    _
  %p434 = scmp.gt.s32.totalorder %s14, 42
  // Predicated region
  $region181: #{tpu_custom_call.1} parent=0 // pred_check
    %p435 = pneg %p434
  $region182: #{tpu_custom_call.1} parent=0 // pred_check_branch
    %437 = sbr.rel (%p435) target = $region184
  $region183: #{tpu_custom_call.1} parent=0 // pred_region
    %s438 = scalar_lea.sflag [#allocation2], 42
    %s439 = smul.u32 2, 1
    %s440 = smul.u32 %s439, 2
    %s441 = sshll.u32 %s440, 4
    %442 = dma.done %s438, %s441
  $region184: #{tpu_custom_call.1} parent=0 // pred_fallthru
    _
  %p443 = scmp.gt.s32.totalorder %s14, 43
  // Predicated region
  $region185: #{tpu_custom_call.1} parent=0 // pred_check
    %p444 = pneg %p443
  $region186: #{tpu_custom_call.1} parent=0 // pred_check_branch
    %446 = sbr.rel (%p444) target = $region188
  $region187: #{tpu_custom_call.1} parent=0 // pred_region
    %s447 = scalar_lea.sflag [#allocation2], 43
    %s448 = smul.u32 2, 1
    %s449 = smul.u32 %s448, 2
    %s450 = sshll.u32 %s449, 4
    %451 = dma.done %s447, %s450
  $region188: #{tpu_custom_call.1} parent=0 // pred_fallthru
    _
  %p452 = scmp.gt.s32.totalorder %s14, 44
  // Predicated region
  $region189: #{tpu_custom_call.1} parent=0 // pred_check
    %p453 = pneg %p452
  $region190: #{tpu_custom_call.1} parent=0 // pred_check_branch
    %455 = sbr.rel (%p453) target = $region192
  $region191: #{tpu_custom_call.1} parent=0 // pred_region
    %s456 = scalar_lea.sflag [#allocation2], 44
    %s457 = smul.u32 2, 1
    %s458 = smul.u32 %s457, 2
    %s459 = sshll.u32 %s458, 4
    %460 = dma.done %s456, %s459
  $region192: #{tpu_custom_call.1} parent=0 // pred_fallthru
    _
  %p461 = scmp.gt.s32.totalorder %s14, 45
  // Predicated region
  $region193: #{tpu_custom_call.1} parent=0 // pred_check
    %p462 = pneg %p461
  $region194: #{tpu_custom_call.1} parent=0 // pred_check_branch
    %464 = sbr.rel (%p462) target = $region196
  $region195: #{tpu_custom_call.1} parent=0 // pred_region
    %s465 = scalar_lea.sflag [#allocation2], 45
    %s466 = smul.u32 2, 1
    %s467 = smul.u32 %s466, 2
    %s468 = sshll.u32 %s467, 4
    %469 = dma.done %s465, %s468
  $region196: #{tpu_custom_call.1} parent=0 // pred_fallthru
    _
  %p470 = scmp.gt.s32.totalorder %s14, 46
  // Predicated region
  $region197: #{tpu_custom_call.1} parent=0 // pred_check
    %p471 = pneg %p470
  $region198: #{tpu_custom_call.1} parent=0 // pred_check_branch
    %473 = sbr.rel (%p471) target = $region200
  $region199: #{tpu_custom_call.1} parent=0 // pred_region
    %s474 = scalar_lea.sflag [#allocation2], 46
    %s475 = smul.u32 2, 1
    %s476 = smul.u32 %s475, 2
    %s477 = sshll.u32 %s476, 4
    %478 = dma.done %s474, %s477
  $region200: #{tpu_custom_call.1} parent=0 // pred_fallthru
    _
  %p479 = scmp.gt.s32.totalorder %s14, 47
  // Predicated region
  $region201: #{tpu_custom_call.1} parent=0 // pred_check
    %p480 = pneg %p479
  $region202: #{tpu_custom_call.1} parent=0 // pred_check_branch
    %482 = sbr.rel (%p480) target = $region204
  $region203: #{tpu_custom_call.1} parent=0 // pred_region
    %s483 = scalar_lea.sflag [#allocation2], 47
    %s484 = smul.u32 2, 1
    %s485 = smul.u32 %s484, 2
    %s486 = sshll.u32 %s485, 4
    %487 = dma.done %s483, %s486
  $region204: #{tpu_custom_call.1} parent=0 // pred_fallthru
    _
  %p488 = scmp.gt.s32.totalorder %s14, 48
  // Predicated region
  $region205: #{tpu_custom_call.1} parent=0 // pred_check
    %p489 = pneg %p488
  $region206: #{tpu_custom_call.1} parent=0 // pred_check_branch
    %491 = sbr.rel (%p489) target = $region208
  $region207: #{tpu_custom_call.1} parent=0 // pred_region
    %s492 = scalar_lea.sflag [#allocation2], 48
    %s493 = smul.u32 2, 1
    %s494 = smul.u32 %s493, 2
    %s495 = sshll.u32 %s494, 4
    %496 = dma.done %s492, %s495
  $region208: #{tpu_custom_call.1} parent=0 // pred_fallthru
    _
  %p497 = scmp.gt.s32.totalorder %s14, 49
  // Predicated region
  $region209: #{tpu_custom_call.1} parent=0 // pred_check
    %p498 = pneg %p497
  $region210: #{tpu_custom_call.1} parent=0 // pred_check_branch
    %500 = sbr.rel (%p498) target = $region212
  $region211: #{tpu_custom_call.1} parent=0 // pred_region
    %s501 = scalar_lea.sflag [#allocation2], 49
    %s502 = smul.u32 2, 1
    %s503 = smul.u32 %s502, 2
    %s504 = sshll.u32 %s503, 4
    %505 = dma.done %s501, %s504
  $region212: #{tpu_custom_call.1} parent=0 // pred_fallthru
    _
  %p506 = scmp.gt.s32.totalorder %s14, 50
  // Predicated region
  $region213: #{tpu_custom_call.1} parent=0 // pred_check
    %p507 = pneg %p506
  $region214: #{tpu_custom_call.1} parent=0 // pred_check_branch
    %509 = sbr.rel (%p507) target = $region216
  $region215: #{tpu_custom_call.1} parent=0 // pred_region
    %s510 = scalar_lea.sflag [#allocation2], 50
    %s511 = smul.u32 2, 1
    %s512 = smul.u32 %s511, 2
    %s513 = sshll.u32 %s512, 4
    %514 = dma.done %s510, %s513
  $region216: #{tpu_custom_call.1} parent=0 // pred_fallthru
    _
  %p515 = scmp.gt.s32.totalorder %s14, 51
  // Predicated region
  $region217: #{tpu_custom_call.1} parent=0 // pred_check
    %p516 = pneg %p515
  $region218: #{tpu_custom_call.1} parent=0 // pred_check_branch
    %518 = sbr.rel (%p516) target = $region220
  $region219: #{tpu_custom_call.1} parent=0 // pred_region
    %s519 = scalar_lea.sflag [#allocation2], 51
    %s520 = smul.u32 2, 1
    %s521 = smul.u32 %s520, 2
    %s522 = sshll.u32 %s521, 4
    %523 = dma.done %s519, %s522
  $region220: #{tpu_custom_call.1} parent=0 // pred_fallthru
    _
  %p524 = scmp.gt.s32.totalorder %s14, 52
  // Predicated region
  $region221: #{tpu_custom_call.1} parent=0 // pred_check
    %p525 = pneg %p524
  $region222: #{tpu_custom_call.1} parent=0 // pred_check_branch
    %527 = sbr.rel (%p525) target = $region224
  $region223: #{tpu_custom_call.1} parent=0 // pred_region
    %s528 = scalar_lea.sflag [#allocation2], 52
    %s529 = smul.u32 2, 1
    %s530 = smul.u32 %s529, 2
    %s531 = sshll.u32 %s530, 4
    %532 = dma.done %s528, %s531
  $region224: #{tpu_custom_call.1} parent=0 // pred_fallthru
    _
  %p533 = scmp.gt.s32.totalorder %s14, 53
  // Predicated region
  $region225: #{tpu_custom_call.1} parent=0 // pred_check
    %p534 = pneg %p533
  $region226: #{tpu_custom_call.1} parent=0 // pred_check_branch
    %536 = sbr.rel (%p534) target = $region228
  $region227: #{tpu_custom_call.1} parent=0 // pred_region
    %s537 = scalar_lea.sflag [#allocation2], 53
    %s538 = smul.u32 2, 1
    %s539 = smul.u32 %s538, 2
    %s540 = sshll.u32 %s539, 4
    %541 = dma.done %s537, %s540
  $region228: #{tpu_custom_call.1} parent=0 // pred_fallthru
    _
  %p542 = scmp.gt.s32.totalorder %s14, 54
  // Predicated region
  $region229: #{tpu_custom_call.1} parent=0 // pred_check
    %p543 = pneg %p542
  $region230: #{tpu_custom_call.1} parent=0 // pred_check_branch
    %545 = sbr.rel (%p543) target = $region232
  $region231: #{tpu_custom_call.1} parent=0 // pred_region
    %s546 = scalar_lea.sflag [#allocation2], 54
    %s547 = smul.u32 2, 1
    %s548 = smul.u32 %s547, 2
    %s549 = sshll.u32 %s548, 4
    %550 = dma.done %s546, %s549
  $region232: #{tpu_custom_call.1} parent=0 // pred_fallthru
    _
  %p551 = scmp.gt.s32.totalorder %s14, 55
  // Predicated region
  $region233: #{tpu_custom_call.1} parent=0 // pred_check
    %p552 = pneg %p551
  $region234: #{tpu_custom_call.1} parent=0 // pred_check_branch
    %554 = sbr.rel (%p552) target = $region236
  $region235: #{tpu_custom_call.1} parent=0 // pred_region
    %s555 = scalar_lea.sflag [#allocation2], 55
    %s556 = smul.u32 2, 1
    %s557 = smul.u32 %s556, 2
    %s558 = sshll.u32 %s557, 4
    %559 = dma.done %s555, %s558
  $region236: #{tpu_custom_call.1} parent=0 // pred_fallthru
    _
  %p560 = scmp.gt.s32.totalorder %s14, 56
  // Predicated region
  $region237: #{tpu_custom_call.1} parent=0 // pred_check
    %p561 = pneg %p560
  $region238: #{tpu_custom_call.1} parent=0 // pred_check_branch
    %563 = sbr.rel (%p561) target = $region240
  $region239: #{tpu_custom_call.1} parent=0 // pred_region
    %s564 = scalar_lea.sflag [#allocation2], 56
    %s565 = smul.u32 2, 1
    %s566 = smul.u32 %s565, 2
    %s567 = sshll.u32 %s566, 4
    %568 = dma.done %s564, %s567
  $region240: #{tpu_custom_call.1} parent=0 // pred_fallthru
    _
  %p569 = scmp.gt.s32.totalorder %s14, 57
  // Predicated region
  $region241: #{tpu_custom_call.1} parent=0 // pred_check
    %p570 = pneg %p569
  $region242: #{tpu_custom_call.1} parent=0 // pred_check_branch
    %572 = sbr.rel (%p570) target = $region244
  $region243: #{tpu_custom_call.1} parent=0 // pred_region
    %s573 = scalar_lea.sflag [#allocation2], 57
    %s574 = smul.u32 2, 1
    %s575 = smul.u32 %s574, 2
    %s576 = sshll.u32 %s575, 4
    %577 = dma.done %s573, %s576
  $region244: #{tpu_custom_call.1} parent=0 // pred_fallthru
    _
  %p578 = scmp.gt.s32.totalorder %s14, 58
  // Predicated region
  $region245: #{tpu_custom_call.1} parent=0 // pred_check
    %p579 = pneg %p578
  $region246: #{tpu_custom_call.1} parent=0 // pred_check_branch
    %581 = sbr.rel (%p579) target = $region248
  $region247: #{tpu_custom_call.1} parent=0 // pred_region
    %s582 = scalar_lea.sflag [#allocation2], 58
    %s583 = smul.u32 2, 1
    %s584 = smul.u32 %s583, 2
    %s585 = sshll.u32 %s584, 4
    %586 = dma.done %s582, %s585
  $region248: #{tpu_custom_call.1} parent=0 // pred_fallthru
    _
  %p587 = scmp.gt.s32.totalorder %s14, 59
  // Predicated region
  $region249: #{tpu_custom_call.1} parent=0 // pred_check
    %p588 = pneg %p587
  $region250: #{tpu_custom_call.1} parent=0 // pred_check_branch
    %590 = sbr.rel (%p588) target = $region252
  $region251: #{tpu_custom_call.1} parent=0 // pred_region
    %s591 = scalar_lea.sflag [#allocation2], 59
    %s592 = smul.u32 2, 1
    %s593 = smul.u32 %s592, 2
    %s594 = sshll.u32 %s593, 4
    %595 = dma.done %s591, %s594
  $region252: #{tpu_custom_call.1} parent=0 // pred_fallthru
    _
  %p596 = scmp.gt.s32.totalorder %s14, 60
  // Predicated region
  $region253: #{tpu_custom_call.1} parent=0 // pred_check
    %p597 = pneg %p596
  $region254: #{tpu_custom_call.1} parent=0 // pred_check_branch
    %599 = sbr.rel (%p597) target = $region256
  $region255: #{tpu_custom_call.1} parent=0 // pred_region
    %s600 = scalar_lea.sflag [#allocation2], 60
    %s601 = smul.u32 2, 1
    %s602 = smul.u32 %s601, 2
    %s603 = sshll.u32 %s602, 4
    %604 = dma.done %s600, %s603
  $region256: #{tpu_custom_call.1} parent=0 // pred_fallthru
    _
  %p605 = scmp.gt.s32.totalorder %s14, 61
  // Predicated region
  $region257: #{tpu_custom_call.1} parent=0 // pred_check
    %p606 = pneg %p605
  $region258: #{tpu_custom_call.1} parent=0 // pred_check_branch
    %608 = sbr.rel (%p606) target = $region260
  $region259: #{tpu_custom_call.1} parent=0 // pred_region
    %s609 = scalar_lea.sflag [#allocation2], 61
    %s610 = smul.u32 2, 1
    %s611 = smul.u32 %s610, 2
    %s612 = sshll.u32 %s611, 4
    %613 = dma.done %s609, %s612
  $region260: #{tpu_custom_call.1} parent=0 // pred_fallthru
    _
  %p614 = scmp.gt.s32.totalorder %s14, 62
  // Predicated region
  $region261: #{tpu_custom_call.1} parent=0 // pred_check
    %p615 = pneg %p614
  $region262: #{tpu_custom_call.1} parent=0 // pred_check_branch
    %617 = sbr.rel (%p615) target = $region264
  $region263: #{tpu_custom_call.1} parent=0 // pred_region
    %s618 = scalar_lea.sflag [#allocation2], 62
    %s619 = smul.u32 2, 1
    %s620 = smul.u32 %s619, 2
    %s621 = sshll.u32 %s620, 4
    %622 = dma.done %s618, %s621
  $region264: #{tpu_custom_call.1} parent=0 // pred_fallthru
    _
  %p623 = scmp.gt.s32.totalorder %s14, 63
  // Predicated region
  $region265: #{tpu_custom_call.1} parent=0 // pred_check
    %p624 = pneg %p623
  $region266: #{tpu_custom_call.1} parent=0 // pred_check_branch
    %626 = sbr.rel (%p624) target = $region268
  $region267: #{tpu_custom_call.1} parent=0 // pred_region
    %s627 = scalar_lea.sflag [#allocation2], 63
    %s628 = smul.u32 2, 1
    %s629 = smul.u32 %s628, 2
    %s630 = sshll.u32 %s629, 4
    %631 = dma.done %s627, %s630
  $region268: #{tpu_custom_call.1} parent=0 // pred_fallthru
    _
  %632 = vsyncmov [#allocation2]
  %s633 = vpop.sfrf %632
  %p634 = scmp.eq.s32.totalorder %s633, 0
  %p635 = pneg %p634
  %637 = shalt.err (%p635)
  %s638 = scalar_lea.sflag [#allocation2], 1
  %639 = vsyncmov %s638
  %s640 = vpop.sfrf %639
  %p641 = scmp.eq.s32.totalorder %s640, 0
  %p642 = pneg %p641
  %644 = shalt.err (%p642)
  %s645 = scalar_lea.sflag [#allocation2], 2
  %646 = vsyncmov %s645
  %s647 = vpop.sfrf %646
  %p648 = scmp.eq.s32.totalorder %s647, 0
  %p649 = pneg %p648
  %651 = shalt.err (%p649)
  %s652 = scalar_lea.sflag [#allocation2], 3
  %653 = vsyncmov %s652
  %s654 = vpop.sfrf %653
  %p655 = scmp.eq.s32.totalorder %s654, 0
  %p656 = pneg %p655
  %658 = shalt.err (%p656)
  %s659 = scalar_lea.sflag [#allocation2], 4
  %660 = vsyncmov %s659
  %s661 = vpop.sfrf %660
  %p662 = scmp.eq.s32.totalorder %s661, 0
  %p663 = pneg %p662
  %665 = shalt.err (%p663)
  %s666 = scalar_lea.sflag [#allocation2], 5
  %667 = vsyncmov %s666
  %s668 = vpop.sfrf %667
  %p669 = scmp.eq.s32.totalorder %s668, 0
  %p670 = pneg %p669
  %672 = shalt.err (%p670)
  %s673 = scalar_lea.sflag [#allocation2], 6
  %674 = vsyncmov %s673
  %s675 = vpop.sfrf %674
  %p676 = scmp.eq.s32.totalorder %s675, 0
  %p677 = pneg %p676
  %679 = shalt.err (%p677)
  %s680 = scalar_lea.sflag [#allocation2], 7
  %681 = vsyncmov %s680
  %s682 = vpop.sfrf %681
  %p683 = scmp.eq.s32.totalorder %s682, 0
  %p684 = pneg %p683
  %686 = shalt.err (%p684)
  %s687 = scalar_lea.sflag [#allocation2], 8
  %688 = vsyncmov %s687
  %s689 = vpop.sfrf %688
  %p690 = scmp.eq.s32.totalorder %s689, 0
  %p691 = pneg %p690
  %693 = shalt.err (%p691)
  %s694 = scalar_lea.sflag [#allocation2], 9
  %695 = vsyncmov %s694
  %s696 = vpop.sfrf %695
  %p697 = scmp.eq.s32.totalorder %s696, 0
  %p698 = pneg %p697
  %700 = shalt.err (%p698)
  %s701 = scalar_lea.sflag [#allocation2], 10
  %702 = vsyncmov %s701
  %s703 = vpop.sfrf %702
  %p704 = scmp.eq.s32.totalorder %s703, 0
  %p705 = pneg %p704
  %707 = shalt.err (%p705)
  %s708 = scalar_lea.sflag [#allocation2], 11
  %709 = vsyncmov %s708
  %s710 = vpop.sfrf %709
  %p711 = scmp.eq.s32.totalorder %s710, 0
  %p712 = pneg %p711
  %714 = shalt.err (%p712)
  %s715 = scalar_lea.sflag [#allocation2], 12
  %716 = vsyncmov %s715
  %s717 = vpop.sfrf %716
  %p718 = scmp.eq.s32.totalorder %s717, 0
  %p719 = pneg %p718
  %721 = shalt.err (%p719)
  %s722 = scalar_lea.sflag [#allocation2], 13
  %723 = vsyncmov %s722
  %s724 = vpop.sfrf %723
  %p725 = scmp.eq.s32.totalorder %s724, 0
  %p726 = pneg %p725
  %728 = shalt.err (%p726)
  %s729 = scalar_lea.sflag [#allocation2], 14
  %730 = vsyncmov %s729
  %s731 = vpop.sfrf %730
  %p732 = scmp.eq.s32.totalorder %s731, 0
  %p733 = pneg %p732
  %735 = shalt.err (%p733)
  %s736 = scalar_lea.sflag [#allocation2], 15
  %737 = vsyncmov %s736
  %s738 = vpop.sfrf %737
  %p739 = scmp.eq.s32.totalorder %s738, 0
  %p740 = pneg %p739
  %742 = shalt.err (%p740)
  %s743 = scalar_lea.sflag [#allocation2], 16
  %744 = vsyncmov %s743
  %s745 = vpop.sfrf %744
  %p746 = scmp.eq.s32.totalorder %s745, 0
  %p747 = pneg %p746
  %749 = shalt.err (%p747)
  %s750 = scalar_lea.sflag [#allocation2], 17
  %751 = vsyncmov %s750
  %s752 = vpop.sfrf %751
  %p753 = scmp.eq.s32.totalorder %s752, 0
  %p754 = pneg %p753
  %756 = shalt.err (%p754)
  %s757 = scalar_lea.sflag [#allocation2], 18
  %758 = vsyncmov %s757
  %s759 = vpop.sfrf %758
  %p760 = scmp.eq.s32.totalorder %s759, 0
  %p761 = pneg %p760
  %763 = shalt.err (%p761)
  %s764 = scalar_lea.sflag [#allocation2], 19
  %765 = vsyncmov %s764
  %s766 = vpop.sfrf %765
  %p767 = scmp.eq.s32.totalorder %s766, 0
  %p768 = pneg %p767
  %770 = shalt.err (%p768)
  %s771 = scalar_lea.sflag [#allocation2], 20
  %772 = vsyncmov %s771
  %s773 = vpop.sfrf %772
  %p774 = scmp.eq.s32.totalorder %s773, 0
  %p775 = pneg %p774
  %777 = shalt.err (%p775)
  %s778 = scalar_lea.sflag [#allocation2], 21
  %779 = vsyncmov %s778
  %s780 = vpop.sfrf %779
  %p781 = scmp.eq.s32.totalorder %s780, 0
  %p782 = pneg %p781
  %784 = shalt.err (%p782)
  %s785 = scalar_lea.sflag [#allocation2], 22
  %786 = vsyncmov %s785
  %s787 = vpop.sfrf %786
  %p788 = scmp.eq.s32.totalorder %s787, 0
  %p789 = pneg %p788
  %791 = shalt.err (%p789)
  %s792 = scalar_lea.sflag [#allocation2], 23
  %793 = vsyncmov %s792
  %s794 = vpop.sfrf %793
  %p795 = scmp.eq.s32.totalorder %s794, 0
  %p796 = pneg %p795
  %798 = shalt.err (%p796)
  %s799 = scalar_lea.sflag [#allocation2], 24
  %800 = vsyncmov %s799
  %s801 = vpop.sfrf %800
  %p802 = scmp.eq.s32.totalorder %s801, 0
  %p803 = pneg %p802
  %805 = shalt.err (%p803)
  %s806 = scalar_lea.sflag [#allocation2], 25
  %807 = vsyncmov %s806
  %s808 = vpop.sfrf %807
  %p809 = scmp.eq.s32.totalorder %s808, 0
  %p810 = pneg %p809
  %812 = shalt.err (%p810)
  %s813 = scalar_lea.sflag [#allocation2], 26
  %814 = vsyncmov %s813
  %s815 = vpop.sfrf %814
  %p816 = scmp.eq.s32.totalorder %s815, 0
  %p817 = pneg %p816
  %819 = shalt.err (%p817)
  %s820 = scalar_lea.sflag [#allocation2], 27
  %821 = vsyncmov %s820
  %s822 = vpop.sfrf %821
  %p823 = scmp.eq.s32.totalorder %s822, 0
  %p824 = pneg %p823
  %826 = shalt.err (%p824)
  %s827 = scalar_lea.sflag [#allocation2], 28
  %828 = vsyncmov %s827
  %s829 = vpop.sfrf %828
  %p830 = scmp.eq.s32.totalorder %s829, 0
  %p831 = pneg %p830
  %833 = shalt.err (%p831)
  %s834 = scalar_lea.sflag [#allocation2], 29
  %835 = vsyncmov %s834
  %s836 = vpop.sfrf %835
  %p837 = scmp.eq.s32.totalorder %s836, 0
  %p838 = pneg %p837
  %840 = shalt.err (%p838)
  %s841 = scalar_lea.sflag [#allocation2], 30
  %842 = vsyncmov %s841
  %s843 = vpop.sfrf %842
  %p844 = scmp.eq.s32.totalorder %s843, 0
  %p845 = pneg %p844
  %847 = shalt.err (%p845)
  %s848 = scalar_lea.sflag [#allocation2], 31
  %849 = vsyncmov %s848
  %s850 = vpop.sfrf %849
  %p851 = scmp.eq.s32.totalorder %s850, 0
  %p852 = pneg %p851
  %854 = shalt.err (%p852)
  %s855 = scalar_lea.sflag [#allocation2], 32
  %856 = vsyncmov %s855
  %s857 = vpop.sfrf %856
  %p858 = scmp.eq.s32.totalorder %s857, 0
  %p859 = pneg %p858
  %861 = shalt.err (%p859)
  %s862 = scalar_lea.sflag [#allocation2], 33
  %863 = vsyncmov %s862
  %s864 = vpop.sfrf %863
  %p865 = scmp.eq.s32.totalorder %s864, 0
  %p866 = pneg %p865
  %868 = shalt.err (%p866)
  %s869 = scalar_lea.sflag [#allocation2], 34
  %870 = vsyncmov %s869
  %s871 = vpop.sfrf %870
  %p872 = scmp.eq.s32.totalorder %s871, 0
  %p873 = pneg %p872
  %875 = shalt.err (%p873)
  %s876 = scalar_lea.sflag [#allocation2], 35
  %877 = vsyncmov %s876
  %s878 = vpop.sfrf %877
  %p879 = scmp.eq.s32.totalorder %s878, 0
  %p880 = pneg %p879
  %882 = shalt.err (%p880)
  %s883 = scalar_lea.sflag [#allocation2], 36
  %884 = vsyncmov %s883
  %s885 = vpop.sfrf %884
  %p886 = scmp.eq.s32.totalorder %s885, 0
  %p887 = pneg %p886
  %889 = shalt.err (%p887)
  %s890 = scalar_lea.sflag [#allocation2], 37
  %891 = vsyncmov %s890
  %s892 = vpop.sfrf %891
  %p893 = scmp.eq.s32.totalorder %s892, 0
  %p894 = pneg %p893
  %896 = shalt.err (%p894)
  %s897 = scalar_lea.sflag [#allocation2], 38
  %898 = vsyncmov %s897
  %s899 = vpop.sfrf %898
  %p900 = scmp.eq.s32.totalorder %s899, 0
  %p901 = pneg %p900
  %903 = shalt.err (%p901)
  %s904 = scalar_lea.sflag [#allocation2], 39
  %905 = vsyncmov %s904
  %s906 = vpop.sfrf %905
  %p907 = scmp.eq.s32.totalorder %s906, 0
  %p908 = pneg %p907
  %910 = shalt.err (%p908)
  %s911 = scalar_lea.sflag [#allocation2], 40
  %912 = vsyncmov %s911
  %s913 = vpop.sfrf %912
  %p914 = scmp.eq.s32.totalorder %s913, 0
  %p915 = pneg %p914
  %917 = shalt.err (%p915)
  %s918 = scalar_lea.sflag [#allocation2], 41
  %919 = vsyncmov %s918
  %s920 = vpop.sfrf %919
  %p921 = scmp.eq.s32.totalorder %s920, 0
  %p922 = pneg %p921
  %924 = shalt.err (%p922)
  %s925 = scalar_lea.sflag [#allocation2], 42
  %926 = vsyncmov %s925
  %s927 = vpop.sfrf %926
  %p928 = scmp.eq.s32.totalorder %s927, 0
  %p929 = pneg %p928
  %931 = shalt.err (%p929)
  %s932 = scalar_lea.sflag [#allocation2], 43
  %933 = vsyncmov %s932
  %s934 = vpop.sfrf %933
  %p935 = scmp.eq.s32.totalorder %s934, 0
  %p936 = pneg %p935
  %938 = shalt.err (%p936)
  %s939 = scalar_lea.sflag [#allocation2], 44
  %940 = vsyncmov %s939
  %s941 = vpop.sfrf %940
  %p942 = scmp.eq.s32.totalorder %s941, 0
  %p943 = pneg %p942
  %945 = shalt.err (%p943)
  %s946 = scalar_lea.sflag [#allocation2], 45
  %947 = vsyncmov %s946
  %s948 = vpop.sfrf %947
  %p949 = scmp.eq.s32.totalorder %s948, 0
  %p950 = pneg %p949
  %952 = shalt.err (%p950)
  %s953 = scalar_lea.sflag [#allocation2], 46
  %954 = vsyncmov %s953
  %s955 = vpop.sfrf %954
  %p956 = scmp.eq.s32.totalorder %s955, 0
  %p957 = pneg %p956
  %959 = shalt.err (%p957)
  %s960 = scalar_lea.sflag [#allocation2], 47
  %961 = vsyncmov %s960
  %s962 = vpop.sfrf %961
  %p963 = scmp.eq.s32.totalorder %s962, 0
  %p964 = pneg %p963
  %966 = shalt.err (%p964)
  %s967 = scalar_lea.sflag [#allocation2], 48
  %968 = vsyncmov %s967
  %s969 = vpop.sfrf %968
  %p970 = scmp.eq.s32.totalorder %s969, 0
  %p971 = pneg %p970
  %973 = shalt.err (%p971)
  %s974 = scalar_lea.sflag [#allocation2], 49
  %975 = vsyncmov %s974
  %s976 = vpop.sfrf %975
  %p977 = scmp.eq.s32.totalorder %s976, 0
  %p978 = pneg %p977
  %980 = shalt.err (%p978)
  %s981 = scalar_lea.sflag [#allocation2], 50
  %982 = vsyncmov %s981
  %s983 = vpop.sfrf %982
  %p984 = scmp.eq.s32.totalorder %s983, 0
  %p985 = pneg %p984
  %987 = shalt.err (%p985)
  %s988 = scalar_lea.sflag [#allocation2], 51
  %989 = vsyncmov %s988
  %s990 = vpop.sfrf %989
  %p991 = scmp.eq.s32.totalorder %s990, 0
  %p992 = pneg %p991
  %994 = shalt.err (%p992)
  %s995 = scalar_lea.sflag [#allocation2], 52
  %996 = vsyncmov %s995
  %s997 = vpop.sfrf %996
  %p998 = scmp.eq.s32.totalorder %s997, 0
  %p999 = pneg %p998
  %1001 = shalt.err (%p999)
  %s1002 = scalar_lea.sflag [#allocation2], 53
  %1003 = vsyncmov %s1002
  %s1004 = vpop.sfrf %1003
  %p1005 = scmp.eq.s32.totalorder %s1004, 0
  %p1006 = pneg %p1005
  %1008 = shalt.err (%p1006)
  %s1009 = scalar_lea.sflag [#allocation2], 54
  %1010 = vsyncmov %s1009
  %s1011 = vpop.sfrf %1010
  %p1012 = scmp.eq.s32.totalorder %s1011, 0
  %p1013 = pneg %p1012
  %1015 = shalt.err (%p1013)
  %s1016 = scalar_lea.sflag [#allocation2], 55
  %1017 = vsyncmov %s1016
  %s1018 = vpop.sfrf %1017
  %p1019 = scmp.eq.s32.totalorder %s1018, 0
  %p1020 = pneg %p1019
  %1022 = shalt.err (%p1020)
  %s1023 = scalar_lea.sflag [#allocation2], 56
  %1024 = vsyncmov %s1023
  %s1025 = vpop.sfrf %1024
  %p1026 = scmp.eq.s32.totalorder %s1025, 0
  %p1027 = pneg %p1026
  %1029 = shalt.err (%p1027)
  %s1030 = scalar_lea.sflag [#allocation2], 57
  %1031 = vsyncmov %s1030
  %s1032 = vpop.sfrf %1031
  %p1033 = scmp.eq.s32.totalorder %s1032, 0
  %p1034 = pneg %p1033
  %1036 = shalt.err (%p1034)
  %s1037 = scalar_lea.sflag [#allocation2], 58
  %1038 = vsyncmov %s1037
  %s1039 = vpop.sfrf %1038
  %p1040 = scmp.eq.s32.totalorder %s1039, 0
  %p1041 = pneg %p1040
  %1043 = shalt.err (%p1041)
  %s1044 = scalar_lea.sflag [#allocation2], 59
  %1045 = vsyncmov %s1044
  %s1046 = vpop.sfrf %1045
  %p1047 = scmp.eq.s32.totalorder %s1046, 0
  %p1048 = pneg %p1047
  %1050 = shalt.err (%p1048)
  %s1051 = scalar_lea.sflag [#allocation2], 60
  %1052 = vsyncmov %s1051
  %s1053 = vpop.sfrf %1052
  %p1054 = scmp.eq.s32.totalorder %s1053, 0
  %p1055 = pneg %p1054
  %1057 = shalt.err (%p1055)
  %s1058 = scalar_lea.sflag [#allocation2], 61
  %1059 = vsyncmov %s1058
  %s1060 = vpop.sfrf %1059
  %p1061 = scmp.eq.s32.totalorder %s1060, 0
  %p1062 = pneg %p1061
  %1064 = shalt.err (%p1062)
  %s1065 = scalar_lea.sflag [#allocation2], 62
  %1066 = vsyncmov %s1065
  %s1067 = vpop.sfrf %1066
  %p1068 = scmp.eq.s32.totalorder %s1067, 0
  %p1069 = pneg %p1068
  %1071 = shalt.err (%p1069)
  %s1072 = scalar_lea.sflag [#allocation2], 63
  %1073 = vsyncmov %s1072
  %s1074 = vpop.sfrf %1073
  %p1075 = scmp.eq.s32.totalorder %s1074, 0
  %p1076 = pneg %p1075
  %1078 = shalt.err (%p1076)

</llo_original>
